<compile_context>
chip_gen: v7x
topology: tpu7x:2x2x1
jax: 0.10.0
libtpu: 0.0.40
codegen_flags: <defaults>
</compile_context>

<pallas_src>
import functools

import jax
import jax.numpy as jnp
from jax import lax
from jax.experimental import pallas as pl
from jax.experimental.pallas import tpu as pltpu

_NEG_INF = -1e30  # large finite negative: avoids inf-inf NaN edge cases


def _gated_attention_kernel(gate_ref, q_ref, kt_ref, v_ref, o_ref,
                            m_sc, l_sc, acc_sc, vq_sc,
                            *, s_real, tile, out_is_slab, needs_kv_mask):
    # Grid: (head_block, q_tile, kv_tile); kv is the reduction axis.
    qi = pl.program_id(1)
    kv = pl.program_id(2)
    last_kv = pl.num_programs(2) - 1

    @pl.when(kv == 0)
    def _():
        m_sc[...] = jnp.full(m_sc.shape, _NEG_INF, dtype=m_sc.dtype)
        l_sc[...] = jnp.zeros(l_sc.shape, dtype=l_sc.dtype)
        acc_sc[...] = jnp.zeros(acc_sc.shape, dtype=acc_sc.dtype)

    # The kv tile with kv == qi holds v at exactly the q rows of this q tile
    # (tq == tk and identical index maps); stash it for the final gate blend
    # so v is only streamed from HBM once per (q-tile, kv-tile) pair.
    @pl.when(kv == qi)
    def _():
        vq_sc[...] = v_ref[...]

    q = q_ref[...]      # (hb, tq, D)  native dtype
    kt = kt_ref[...]    # (hb, D, tk)  native dtype, pre-transposed (lane-dense)
    v = v_ref[...]      # (hb, tk, D)

    # scores = q @ k^T, batched over heads (contraction over D), f32 accum.
    scores = lax.dot_general(
        q, kt,
        dimension_numbers=(((2,), (1,)), ((0,), (0,))),
        preferred_element_type=jnp.float32,
        precision=lax.Precision.HIGHEST)                 # (hb, tq, tk) f32

    if needs_kv_mask:
        # Mask padded key columns (sequence was zero-padded in the wrapper).
        col = kv * tile + lax.broadcasted_iota(jnp.int32, scores.shape, 2)
        scores = jnp.where(col < s_real, scores, _NEG_INF)

    # Online softmax update (f32 math).
    m_prev = m_sc[...]
    m_new = jnp.maximum(m_prev, jnp.max(scores, axis=-1, keepdims=True))
    alpha = jnp.exp(m_prev - m_new)
    p = jnp.exp(scores - m_new)                          # (hb, tq, tk)
    l_sc[...] = alpha * l_sc[...] + jnp.sum(p, axis=-1, keepdims=True)
    acc_sc[...] = alpha * acc_sc[...] + lax.dot_general(
        p.astype(v.dtype), v,
        dimension_numbers=(((2,), (1,)), ((0,), (0,))),
        preferred_element_type=jnp.float32,
        precision=lax.Precision.HIGHEST)                 # (hb, tq, D) f32
    m_sc[...] = m_new

    @pl.when(kv == last_kv)
    def _():
        g = gate_ref[0, 0]                               # sigmoid(gate), f32
        attn_out = acc_sc[...] / l_sc[...]               # exact normalization
        v_rows = vq_sc[...].astype(jnp.float32)
        # g*attn + (1-g)*v  ==  v + g*(attn - v)
        out = (v_rows + g * (attn_out - v_rows)).astype(o_ref.dtype)
        if out_is_slab:
            hb, tq, d = acc_sc.shape
            o_ref[...] = out.reshape(hb, tq * d)         # lane-dense store
        else:
            o_ref[...] = out
    # TODO(synk): optional `mask` argument of the PyTorch module (masked_fill
    # with -inf) is not plumbed through; the default mask=None path is
    # implemented.


def _largest_divisor_leq(n, cap, multiple=1):
    for t in range(min(n, cap), 0, -1):
        if n % t == 0 and t % multiple == 0:
            return t
    return None


def _round_up(x, m):
    return ((x + m - 1) // m) * m


def gated_attention(q, k, v, gate_param, *, max_heads_per_block=8,
                    max_seq_tile=256):
    """q, k, v: (B, H, S, D). gate_param: scalar raw gate parameter."""
    B, H, S, D = q.shape
    BH = B * H
    qf = q.reshape(BH, S, D)
    ktf = jnp.swapaxes(k.reshape(BH, S, D), 1, 2)      # (BH, D, S) lane-dense k
    vf = v.reshape(BH, S, D)
    # Gate sigmoid is a scalar; compute it outside the kernel and pass via SMEM.
    gate_sig = jax.nn.sigmoid(jnp.asarray(gate_param, jnp.float32)).reshape(1, 1)

    # ---- sequence tiling (tq == tk == t so the kv tile at kv == qi carries
    #      the v rows needed for the blend); pad awkward S and mask in-kernel.
    if S <= max_seq_tile:
        t = _round_up(S, 8)
    else:
        t = max_seq_tile
    Sp = _round_up(S, t)
    if Sp != S:
        pad = Sp - S
        qf = jnp.pad(qf, ((0, 0), (0, pad), (0, 0)))
        ktf = jnp.pad(ktf, ((0, 0), (0, 0), (0, pad)))
        vf = jnp.pad(vf, ((0, 0), (0, pad), (0, 0)))
    needs_kv_mask = Sp != S

    # ---- head tiling --------------------------------------------------------
    hb = (_largest_divisor_leq(BH, max_heads_per_block, 8)
          or _largest_divisor_leq(BH, max_heads_per_block, 1))
    # Keep >= 2 blocks on the parallel axes when possible so both v7x
    # TensorCores get work (cheap on 1-TC chips: one extra grid step).
    if (BH // hb) * (Sp // t) < 2:
        for cand in range(hb // 2, 0, -1):
            if BH % cand == 0:
                hb = cand
                break

    grid = (BH // hb, Sp // t, Sp // t)

    # Lane-dense slab output only when the (hb, t*D) block satisfies the
    # (8, 128) tiling rules; otherwise use the (hb, t, D) layout.
    out_is_slab = (hb % 8 == 0 or hb == BH) and (t * D) % 128 == 0

    in_specs = [
        pl.BlockSpec(memory_space=pltpu.SMEM),                       # sigmoid(gate)
        pl.BlockSpec((hb, t, D), lambda b, qi, ki: (b, qi, 0)),      # q
        pl.BlockSpec((hb, D, t), lambda b, qi, ki: (b, 0, ki)),      # k^T (kv tile)
        pl.BlockSpec((hb, t, D), lambda b, qi, ki: (b, ki, 0)),      # v   (kv tile)
    ]
    if out_is_slab:
        out_shape = jax.ShapeDtypeStruct((BH, Sp * D), q.dtype)
        out_spec = pl.BlockSpec((hb, t * D), lambda b, qi, ki: (b, qi))
    else:
        out_shape = jax.ShapeDtypeStruct((BH, Sp, D), q.dtype)
        out_spec = pl.BlockSpec((hb, t, D), lambda b, qi, ki: (b, qi, 0))

    scratch_shapes = [
        pltpu.VMEM((hb, t, 1), jnp.float32),   # running max m
        pltpu.VMEM((hb, t, 1), jnp.float32),   # running sum l
        pltpu.VMEM((hb, t, D), jnp.float32),   # output accumulator
        pltpu.VMEM((hb, t, D), v.dtype),       # v rows of this q tile (blend)
    ]

    itemsize = jnp.dtype(q.dtype).itemsize
    n_kv = Sp // t
    cost = pl.CostEstimate(
        flops=4 * BH * S * S * D,
        transcendentals=BH * S * S,
        # q read once, k and v re-read once per q tile, plus the output write.
        bytes_accessed=itemsize * BH * Sp * D * (1 + 2 * n_kv + 1),
    )

    out = pl.pallas_call(
        functools.partial(_gated_attention_kernel, s_real=S, tile=t,
                          out_is_slab=out_is_slab, needs_kv_mask=needs_kv_mask),
        out_shape=out_shape,
        grid=grid,
        in_specs=in_specs,
        out_specs=out_spec,
        scratch_shapes=scratch_shapes,
        compiler_params=pltpu.CompilerParams(
            dimension_semantics=("parallel", "parallel", "arbitrary"),
            vmem_limit_bytes=64 * 1024 * 1024),
        cost_estimate=cost,
    )(gate_sig, qf, ktf, vf)

    out = out.reshape(BH, Sp, D)[:, :S, :]
    return out.reshape(B, H, S, D)


def gated_attention_ref(q, k, v, gate_param):
    scores = jnp.einsum("bhqd,bhkd->bhqk",
                        q.astype(jnp.float32), k.astype(jnp.float32),
                        precision=lax.Precision.HIGHEST)
    attn = jax.nn.softmax(scores, axis=-1)
    attn_out = jnp.einsum("bhqk,bhkd->bhqd", attn, v.astype(jnp.float32),
                          precision=lax.Precision.HIGHEST)
    g = jax.nn.sigmoid(jnp.asarray(gate_param, jnp.float32))
    return (g * attn_out + (1.0 - g) * v.astype(jnp.float32)).astype(q.dtype)


if __name__ == "__main__":
    # Deterministic parameter init (matches nn.Parameter(torch.tensor(0.5)))
    gate_param = 0.5

    B, H, S, D = 2, 4, 16, 32
    key = jax.random.PRNGKey(0)
    kq, kk, kv_ = jax.random.split(key, 3)
    q = jax.random.normal(kq, (B, H, S, D), dtype=jnp.float32)
    k = jax.random.normal(kk, (B, H, S, D), dtype=jnp.float32)
    v = jax.random.normal(kv_, (B, H, S, D), dtype=jnp.float32)

    out = gated_attention(q, k, v, gate_param)
    out = jax.block_until_ready(out)

    ref = gated_attention_ref(q, k, v, gate_param)
    assert out.shape == (B, H, S, D)
    max_err = jnp.max(jnp.abs(out - ref))
    assert jnp.allclose(out, ref, rtol=2e-3, atol=2e-3), max_err

    print("KERNEL_OK")
</pallas_src>

<mosaic_0001>
module attributes {stable_mosaic.version = 11 : i64} {
  func.func @_gated_attention_kernel(%arg0: i32, %arg1: i32, %arg2: i32, %arg3: memref<1x1xf32, #tpu.memory_space<smem>>, %arg4: memref<4x16x32xf32, #tpu.memory_space<vmem>>, %arg5: memref<4x32x16xf32, #tpu.memory_space<vmem>>, %arg6: memref<4x16x32xf32, #tpu.memory_space<vmem>>, %arg7: memref<4x16x32xf32, #tpu.memory_space<vmem>>, %arg8: memref<4x16x1xf32, #tpu.memory_space<vmem>>, %arg9: memref<4x16x1xf32, #tpu.memory_space<vmem>>, %arg10: memref<4x16x32xf32, #tpu.memory_space<vmem>>, %arg11: memref<4x16x32xf32, #tpu.memory_space<vmem>>) attributes {dimension_semantics = [#tpu.dimension_semantics<parallel>, #tpu.dimension_semantics<parallel>, #tpu.dimension_semantics<arbitrary>], iteration_bounds = array<i64: 2, 1, 1>, scalar_prefetch = 0 : i64, scratch_operands = 4 : i64, tpu.core_type = #tpu.core_type<tc>, window_params = [{transform_indices = @transform_0, window_bounds = array<i64: 1, 1>}, {transform_indices = @transform_1, window_bounds = array<i64: 4, 16, 32>}, {transform_indices = @transform_2, window_bounds = array<i64: 4, 32, 16>}, {transform_indices = @transform_3, window_bounds = array<i64: 4, 16, 32>}, {transform_indices = @transform_4, window_bounds = array<i64: 4, 16, 32>}]} {
    %c0_i32 = arith.constant 0 : i32
    %0 = arith.cmpi eq, %arg2, %c0_i32 : i32
    %1 = arith.extui %0 : i1 to i32
    %c0_i32_0 = arith.constant 0 : i32
    %2 = arith.cmpi ne, %1, %c0_i32_0 : i32
    scf.if %2 {
      %cst_33 = arith.constant -1.000000e+30 : f32
      %35 = vector.broadcast %cst_33 : f32 to vector<4x16x1xf32>
      %c0_34 = arith.constant 0 : index
      %c0_35 = arith.constant 0 : index
      %c0_36 = arith.constant 0 : index
      %36 = vector.load %arg8[%c0_34, %c0_35, %c0_36] : memref<4x16x1xf32, #tpu.memory_space<vmem>>, vector<4x16x1xf32>
      tpu.vector_store %arg8[%c0_34, %c0_35, %c0_36], %35 {strides = array<i32>} : memref<4x16x1xf32, #tpu.memory_space<vmem>>, vector<4x16x1xf32>,
      %cst_37 = arith.constant 0.000000e+00 : f32
      %37 = vector.broadcast %cst_37 : f32 to vector<4x16x1xf32>
      %c0_38 = arith.constant 0 : index
      %c0_39 = arith.constant 0 : index
      %c0_40 = arith.constant 0 : index
      %38 = vector.load %arg9[%c0_38, %c0_39, %c0_40] : memref<4x16x1xf32, #tpu.memory_space<vmem>>, vector<4x16x1xf32>
      tpu.vector_store %arg9[%c0_38, %c0_39, %c0_40], %37 {strides = array<i32>} : memref<4x16x1xf32, #tpu.memory_space<vmem>>, vector<4x16x1xf32>,
      %cst_41 = arith.constant 0.000000e+00 : f32
      %39 = vector.broadcast %cst_41 : f32 to vector<4x16x32xf32>
      %c0_42 = arith.constant 0 : index
      %c0_43 = arith.constant 0 : index
      %c0_44 = arith.constant 0 : index
      %40 = vector.load %arg10[%c0_42, %c0_43, %c0_44] : memref<4x16x32xf32, #tpu.memory_space<vmem>>, vector<4x16x32xf32>
      tpu.vector_store %arg10[%c0_42, %c0_43, %c0_44], %39 {strides = array<i32>} : memref<4x16x32xf32, #tpu.memory_space<vmem>>, vector<4x16x32xf32>,
    } else {
    }
    %3 = arith.cmpi eq, %arg2, %arg1 : i32
    %4 = arith.extui %3 : i1 to i32
    %c0_i32_1 = arith.constant 0 : i32
    %5 = arith.cmpi ne, %4, %c0_i32_1 : i32
    scf.if %5 {
      %c0_33 = arith.constant 0 : index
      %c0_34 = arith.constant 0 : index
      %c0_35 = arith.constant 0 : index
      %35 = vector.load %arg6[%c0_33, %c0_34, %c0_35] : memref<4x16x32xf32, #tpu.memory_space<vmem>>, vector<4x16x32xf32>
      %c0_36 = arith.constant 0 : index
      %c0_37 = arith.constant 0 : index
      %c0_38 = arith.constant 0 : index
      %36 = vector.load %arg11[%c0_36, %c0_37, %c0_38] : memref<4x16x32xf32, #tpu.memory_space<vmem>>, vector<4x16x32xf32>
      tpu.vector_store %arg11[%c0_36, %c0_37, %c0_38], %35 {strides = array<i32>} : memref<4x16x32xf32, #tpu.memory_space<vmem>>, vector<4x16x32xf32>,
    } else {
    }
    %c0 = arith.constant 0 : index
    %c0_2 = arith.constant 0 : index
    %c0_3 = arith.constant 0 : index
    %6 = vector.load %arg4[%c0, %c0_2, %c0_3] : memref<4x16x32xf32, #tpu.memory_space<vmem>>, vector<4x16x32xf32>
    %c0_4 = arith.constant 0 : index
    %c0_5 = arith.constant 0 : index
    %c0_6 = arith.constant 0 : index
    %7 = vector.load %arg5[%c0_4, %c0_5, %c0_6] : memref<4x32x16xf32, #tpu.memory_space<vmem>>, vector<4x32x16xf32>
    %c0_7 = arith.constant 0 : index
    %c0_8 = arith.constant 0 : index
    %c0_9 = arith.constant 0 : index
    %8 = vector.load %arg6[%c0_7, %c0_8, %c0_9] : memref<4x16x32xf32, #tpu.memory_space<vmem>>, vector<4x16x32xf32>
    %cst = arith.constant dense<0.000000e+00> : vector<4x16x16xf32>
    %9 = tpu.matmul %6, %7, %cst {dimension_numbers = #tpu.dot_dimension_numbers<[2], [1], [1], [2], [0, 0, 0, 1, 1, 2], [0], [0]>, precision = #tpu.contract_precision<fp32>} : vector<4x16x32xf32>, vector<4x32x16xf32>, vector<4x16x16xf32> -> vector<4x16x16xf32>
    %c0_10 = arith.constant 0 : index
    %c0_11 = arith.constant 0 : index
    %c0_12 = arith.constant 0 : index
    %10 = vector.load %arg8[%c0_10, %c0_11, %c0_12] : memref<4x16x1xf32, #tpu.memory_space<vmem>>, vector<4x16x1xf32>
    %cst_13 = arith.constant dense<0xFF800000> : vector<4x16xf32>
    %11 = vector.multi_reduction <maximumf>, %9, %cst_13 [2] : vector<4x16x16xf32> to vector<4x16xf32>
    %12 = vector.shape_cast %11 : vector<4x16xf32> to vector<4x16x1xf32>
    %13 = arith.maximumf %10, %12 : vector<4x16x1xf32>
    %14 = arith.subf %10, %13 : vector<4x16x1xf32>
    %15 = math.exp %14 : vector<4x16x1xf32>
    %16 = vector.broadcast %13 : vector<4x16x1xf32> to vector<4x16x16xf32>
    %17 = arith.subf %9, %16 : vector<4x16x16xf32>
    %18 = math.exp %17 : vector<4x16x16xf32>
    %c0_14 = arith.constant 0 : index
    %c0_15 = arith.constant 0 : index
    %c0_16 = arith.constant 0 : index
    %19 = vector.load %arg9[%c0_14, %c0_15, %c0_16] : memref<4x16x1xf32, #tpu.memory_space<vmem>>, vector<4x16x1xf32>
    %20 = arith.mulf %15, %19 : vector<4x16x1xf32>
    %cst_17 = arith.constant dense<0.000000e+00> : vector<4x16xf32>
    %21 = vector.multi_reduction <add>, %18, %cst_17 [2] : vector<4x16x16xf32> to vector<4x16xf32>
    %22 = vector.shape_cast %21 : vector<4x16xf32> to vector<4x16x1xf32>
    %23 = arith.addf %20, %22 : vector<4x16x1xf32>
    %c0_18 = arith.constant 0 : index
    %c0_19 = arith.constant 0 : index
    %c0_20 = arith.constant 0 : index
    %24 = vector.load %arg9[%c0_18, %c0_19, %c0_20] : memref<4x16x1xf32, #tpu.memory_space<vmem>>, vector<4x16x1xf32>
    tpu.vector_store %arg9[%c0_18, %c0_19, %c0_20], %23 {strides = array<i32>} : memref<4x16x1xf32, #tpu.memory_space<vmem>>, vector<4x16x1xf32>,
    %c0_21 = arith.constant 0 : index
    %c0_22 = arith.constant 0 : index
    %c0_23 = arith.constant 0 : index
    %25 = vector.load %arg10[%c0_21, %c0_22, %c0_23] : memref<4x16x32xf32, #tpu.memory_space<vmem>>, vector<4x16x32xf32>
    %26 = vector.broadcast %15 : vector<4x16x1xf32> to vector<4x16x32xf32>
    %27 = arith.mulf %26, %25 : vector<4x16x32xf32>
    %cst_24 = arith.constant dense<0.000000e+00> : vector<4x16x32xf32>
    %28 = tpu.matmul %18, %8, %cst_24 {dimension_numbers = #tpu.dot_dimension_numbers<[2], [1], [1], [2], [0, 0, 0, 1, 1, 2], [0], [0]>, precision = #tpu.contract_precision<fp32>} : vector<4x16x16xf32>, vector<4x16x32xf32>, vector<4x16x32xf32> -> vector<4x16x32xf32>
    %29 = arith.addf %27, %28 : vector<4x16x32xf32>
    %c0_25 = arith.constant 0 : index
    %c0_26 = arith.constant 0 : index
    %c0_27 = arith.constant 0 : index
    %30 = vector.load %arg10[%c0_25, %c0_26, %c0_27] : memref<4x16x32xf32, #tpu.memory_space<vmem>>, vector<4x16x32xf32>
    tpu.vector_store %arg10[%c0_25, %c0_26, %c0_27], %29 {strides = array<i32>} : memref<4x16x32xf32, #tpu.memory_space<vmem>>, vector<4x16x32xf32>,
    %c0_28 = arith.constant 0 : index
    %c0_29 = arith.constant 0 : index
    %c0_30 = arith.constant 0 : index
    %31 = vector.load %arg8[%c0_28, %c0_29, %c0_30] : memref<4x16x1xf32, #tpu.memory_space<vmem>>, vector<4x16x1xf32>
    tpu.vector_store %arg8[%c0_28, %c0_29, %c0_30], %13 {strides = array<i32>} : memref<4x16x1xf32, #tpu.memory_space<vmem>>, vector<4x16x1xf32>,
    %c0_i32_31 = arith.constant 0 : i32
    %32 = arith.cmpi eq, %arg2, %c0_i32_31 : i32
    %33 = arith.extui %32 : i1 to i32
    %c0_i32_32 = arith.constant 0 : i32
    %34 = arith.cmpi ne, %33, %c0_i32_32 : i32
    scf.if %34 {
      %c0_33 = arith.constant 0 : index
      %c0_34 = arith.constant 0 : index
      %35 = memref.load %arg3[%c0_33, %c0_34] : memref<1x1xf32, #tpu.memory_space<smem>>
      %c0_35 = arith.constant 0 : index
      %c0_36 = arith.constant 0 : index
      %c0_37 = arith.constant 0 : index
      %36 = vector.load %arg10[%c0_35, %c0_36, %c0_37] : memref<4x16x32xf32, #tpu.memory_space<vmem>>, vector<4x16x32xf32>
      %c0_38 = arith.constant 0 : index
      %c0_39 = arith.constant 0 : index
      %c0_40 = arith.constant 0 : index
      %37 = vector.load %arg9[%c0_38, %c0_39, %c0_40] : memref<4x16x1xf32, #tpu.memory_space<vmem>>, vector<4x16x1xf32>
      %38 = vector.broadcast %37 : vector<4x16x1xf32> to vector<4x16x32xf32>
      %39 = arith.divf %36, %38 : vector<4x16x32xf32>
      %c0_41 = arith.constant 0 : index
      %c0_42 = arith.constant 0 : index
      %c0_43 = arith.constant 0 : index
      %40 = vector.load %arg11[%c0_41, %c0_42, %c0_43] : memref<4x16x32xf32, #tpu.memory_space<vmem>>, vector<4x16x32xf32>
      %41 = arith.subf %39, %40 : vector<4x16x32xf32>
      %42 = vector.broadcast %35 : f32 to vector<4x16x32xf32>
      %43 = arith.mulf %42, %41 : vector<4x16x32xf32>
      %44 = arith.addf %40, %43 : vector<4x16x32xf32>
      %c0_44 = arith.constant 0 : index
      %c0_45 = arith.constant 0 : index
      %c0_46 = arith.constant 0 : index
      %45 = vector.load %arg7[%c0_44, %c0_45, %c0_46] : memref<4x16x32xf32, #tpu.memory_space<vmem>>, vector<4x16x32xf32>
      tpu.vector_store %arg7[%c0_44, %c0_45, %c0_46], %44 {strides = array<i32>} : memref<4x16x32xf32, #tpu.memory_space<vmem>>, vector<4x16x32xf32>,
    } else {
    }
    return
  }
  func.func @transform_0(%arg0: i32, %arg1: i32, %arg2: i32) -> (i32, i32) {
    %c0_i32 = arith.constant 0 : i32
    %c0_i32_0 = arith.constant 0 : i32
    %c0_i32_1 = arith.constant 0 : i32
    return %c0_i32, %c0_i32_0 : i32, i32
  }
  func.func @transform_1(%arg0: i32, %arg1: i32, %arg2: i32) -> (i32, i32, i32) {
    %c0_i32 = arith.constant 0 : i32
    %c0_i32_0 = arith.constant 0 : i32
    return %arg0, %arg1, %c0_i32 : i32, i32, i32
  }
  func.func @transform_2(%arg0: i32, %arg1: i32, %arg2: i32) -> (i32, i32, i32) {
    %c0_i32 = arith.constant 0 : i32
    %c0_i32_0 = arith.constant 0 : i32
    return %arg0, %c0_i32, %arg2 : i32, i32, i32
  }
  func.func @transform_3(%arg0: i32, %arg1: i32, %arg2: i32) -> (i32, i32, i32) {
    %c0_i32 = arith.constant 0 : i32
    %c0_i32_0 = arith.constant 0 : i32
    return %arg0, %arg2, %c0_i32 : i32, i32, i32
  }
  func.func @transform_4(%arg0: i32, %arg1: i32, %arg2: i32) -> (i32, i32, i32) {
    %c0_i32 = arith.constant 0 : i32
    %c0_i32_0 = arith.constant 0 : i32
    return %arg0, %arg1, %c0_i32 : i32, i32, i32
  }
}

</mosaic_0001>

<llo_original>
// kernel: tpu_custom_call.1
$region0: #{tpu_custom_call.1}
  #allocation0 [shape = 'u32[]', space=smem, size = 0x4, offset = 0x4, fixed_abs, tag = 'smem constant byte address 0x4 - core index']
  #allocation1 [shape = 'u32[144,128]{1,0:T(1,128)}', space=vmem, size = 0x12000, scoped, tag = 'internal scratch']
  #allocation2 [shape = 'f32[4,16,1]{2,1,0:T(8,128)}', space=vmem, size = 0x8000, scoped, tag = 'scratch operand']
  #allocation3 [shape = 'f32[4,16,1]{2,1,0:T(8,128)}', space=vmem, size = 0x8000, scoped, tag = 'scratch operand']
  #allocation4 [shape = 'f32[4,16,32]{2,1,0:T(8,128)}', space=vmem, size = 0x8000, scoped, tag = 'scratch operand']
  #allocation5 [shape = 'f32[4,16,32]{2,1,0:T(8,128)}', space=vmem, size = 0x8000, scoped, tag = 'scratch operand']
  #allocation6 [shape = 'f32[1,1]{1,0:T(1,128)S(6)}', space=smem, size = 0x200, scoped, tag = 'scoped memory for tpu_custom_call.1']
  %s0 = inlined_call_operand.<no memory space> [shape: f32[1,1], index: 0, kind: input, shape index: {}]
  %s1 = inlined_call_operand.hbm [shape: f32[8,16,32], index: 1, kind: input, shape index: {}]
  %s2 = inlined_call_operand.hbm [shape: f32[8,32,16], index: 2, kind: input, shape index: {}]
  %s3 = inlined_call_operand.hbm [shape: f32[8,16,32], index: 3, kind: input, shape index: {}]
  %s4 = inlined_call_operand.hbm [shape: f32[8,16,32], index: 4, kind: output, shape index: {}]
  %s5 = sld [smem:[#allocation0]]
  $region73: #{tpu_custom_call.1} parent=0
    _
  %s7 = ssub.s32 1, %s5
  %s8 = scalar_select 0, %s7, %s5
  %9 = sst [smem:[#allocation6]] %s0
  $region1: #{tpu_custom_call.1} parent=0
    #allocation7 [shape = 'u8[65536]{0}', space=vmem, size = 0x10000, scoped, tag = 'input window, operand 1']
    #allocation8 [shape = 's32[2]{0}', space=sflag, size = 0x8, scoped, tag = 'scoped memory for tpu_custom_call.1']
    #allocation9 [shape = 's32[2]{0}', space=sflag, size = 0x8, scoped, tag = 'scoped memory for tpu_custom_call.1']
    #allocation10 [shape = 'u8[131072]{0}', space=vmem, size = 0x20000, scoped, tag = 'input window, operand 2']
    #allocation11 [shape = 's32[2]{0}', space=sflag, size = 0x8, scoped, tag = 'scoped memory for tpu_custom_call.1']
    #allocation12 [shape = 'u8[65536]{0}', space=vmem, size = 0x10000, scoped, tag = 'input window, operand 3']
    #allocation13 [shape = 'u8[65536]{0}', space=vmem, size = 0x10000, scoped, tag = 'output window, operand 0']
    %10 = vsyncpa [#allocation8], 0
    %s11 = scalar_lea.sflag [#allocation8], 1
    %12 = vsyncpa %s11, 0
    %13 = vsyncpa [#allocation11], 0
    %s14 = scalar_lea.sflag [#allocation11], 1
    %15 = vsyncpa %s14, 0
    %16 = vsyncpa [#allocation9], 0
    %s17 = scalar_lea.sflag [#allocation9], 1
    %18 = vsyncpa %s17, 0
    loop: start=0, step=1, limit=4
    $region2: #{tpu_custom_call.1} parent=1 // loop_pre_header
      _
    $region3: #{tpu_custom_call.1} parent=1 // loop_header
      %s20 = sphi 0, %s24
      %p21 = scmp.ge.s32.totalorder %s20, 4
      %s27 = sphi 0, %s46
      %s28 = sphi 0, %s42
      %s29 = sphi 0, %s38
      %s30 = sphi 0, %s27
      %s31 = sphi 0, %s28
      %s32 = sphi 0, %s29
      %s33 = sphi 0, %s30
      %s34 = sphi 0, %s31
      %s35 = sphi 0, %s32
      %s47 = sphi 0, %s47
      %s49 = sphi 0, %s47
      %s50 = sphi 0, %s49
      %s64 = sphi 0, %s50
      %s72 = sphi 0, %s74
      %s75 = sphi 0, %s72
      %s76 = sphi 0, %s75
      %s92 = sphi 0, %s76
      %s100 = sphi 0, %s102
      %s103 = sphi 0, %s100
      %s104 = sphi 0, %s103
      %s120 = sphi 0, %s104
      %s128 = sphi 0, %s130
      %s131 = sphi 0, %s128
      %s132 = sphi 0, %s131
      %s148 = sphi 0, %s132
      %s156 = sphi 0, %s158
      %s159 = sphi 0, %s156
      %s160 = sphi 0, %s159
      %s176 = sphi 0, %s160
    $region4: #{tpu_custom_call.1} parent=1 // loop_header_branch
      %23 = sbr.rel (%p21) target = $region8
    $region5: #{tpu_custom_call.1} parent=1 // loop_body
      %s25 = ssub.s32 %s20, 1
      %s26 = ssub.s32 %s20, 2
      %s36 = sadd.s32 1, %s29
      %p37 = scmp.ge.s32.totalorder %s36, 1
      %s38 = scalar_select %p37, 0, %s36
      %s39 = sadd.s32 1, %s28
      %s40 = scalar_select %p37, %s39, %s28
      %p41 = scmp.ge.s32.totalorder %s40, 1
      %s42 = scalar_select %p41, 0, %s40
      %s43 = sadd.s32 1, %s27
      %s44 = scalar_select %p41, %s43, %s27
      %p45 = scmp.ge.s32.totalorder %s44, 2
      %s46 = scalar_select %p45, 0, %s44
      %s48 = sadd.s32 %s47, 1
      %p51 = scmp.eq.s32.totalorder %s20, 1
      %p52 = scmp.ne.s32.totalorder %s47, %s49
      %p53 = scmp.eq.s32.totalorder %s20, 0
      %p54 = por %p52, %p53
      %p55 = scmp.ne.s32.totalorder %s47, %s49
      %p56 = scmp.eq.s32.totalorder %s25, 1
      %p57 = por %p55, %p56
      %p58 = scmp.ne.s32.totalorder %s49, %s50
      %p59 = scmp.eq.s32.totalorder %s25, 0
      %p60 = por %p58, %p59
      %p61 = scmp.ne.s32.totalorder %s49, %s50
      %p62 = scmp.eq.s32.totalorder %s26, 1
      %p63 = por %p61, %p62
      %p65 = scmp.ne.s32.totalorder %s50, %s64
      %p66 = scmp.eq.s32.totalorder %s26, 0
      %p67 = por %p65, %p66
      %s68 = ssub.s32 %s27, %s46
      %s69 = ssub.s32 %s28, %s42
      %s70 = sor.u32 %s68, %s69
      %p71 = scmp.eq.s32.totalorder %s70, 0
      %s73 = sadd.s32 %s72, 1
      %s74 = scalar_select %p71, %s72, %s73
      %p77 = pneg %p71
      %p78 = scmp.eq.s32.totalorder %s20, 1
      %p79 = por %p77, %p78
      %p80 = scmp.ne.s32.totalorder %s72, %s75
      %p81 = scmp.eq.s32.totalorder %s20, 0
      %p82 = por %p80, %p81
      %p83 = scmp.ne.s32.totalorder %s72, %s75
      %p84 = scmp.eq.s32.totalorder %s25, 1
      %p85 = por %p83, %p84
      %p86 = scmp.ne.s32.totalorder %s75, %s76
      %p87 = scmp.eq.s32.totalorder %s25, 0
      %p88 = por %p86, %p87
      %p89 = scmp.ne.s32.totalorder %s75, %s76
      %p90 = scmp.eq.s32.totalorder %s26, 1
      %p91 = por %p89, %p90
      %p93 = scmp.ne.s32.totalorder %s76, %s92
      %p94 = scmp.eq.s32.totalorder %s26, 0
      %p95 = por %p93, %p94
      %s96 = ssub.s32 %s27, %s46
      %s97 = ssub.s32 %s29, %s38
      %s98 = sor.u32 %s96, %s97
      %p99 = scmp.eq.s32.totalorder %s98, 0
      %s101 = sadd.s32 %s100, 1
      %s102 = scalar_select %p99, %s100, %s101
      %p105 = pneg %p99
      %p106 = scmp.eq.s32.totalorder %s20, 1
      %p107 = por %p105, %p106
      %p108 = scmp.ne.s32.totalorder %s100, %s103
      %p109 = scmp.eq.s32.totalorder %s20, 0
      %p110 = por %p108, %p109
      %p111 = scmp.ne.s32.totalorder %s100, %s103
      %p112 = scmp.eq.s32.totalorder %s25, 1
      %p113 = por %p111, %p112
      %p114 = scmp.ne.s32.totalorder %s103, %s104
      %p115 = scmp.eq.s32.totalorder %s25, 0
      %p116 = por %p114, %p115
      %p117 = scmp.ne.s32.totalorder %s103, %s104
      %p118 = scmp.eq.s32.totalorder %s26, 1
      %p119 = por %p117, %p118
      %p121 = scmp.ne.s32.totalorder %s104, %s120
      %p122 = scmp.eq.s32.totalorder %s26, 0
      %p123 = por %p121, %p122
      %s124 = ssub.s32 %s27, %s46
      %s125 = ssub.s32 %s29, %s38
      %s126 = sor.u32 %s124, %s125
      %p127 = scmp.eq.s32.totalorder %s126, 0
      %s129 = sadd.s32 %s128, 1
      %s130 = scalar_select %p127, %s128, %s129
      %p133 = pneg %p127
      %p134 = scmp.eq.s32.totalorder %s20, 1
      %p135 = por %p133, %p134
      %p136 = scmp.ne.s32.totalorder %s128, %s131
      %p137 = scmp.eq.s32.totalorder %s20, 0
      %p138 = por %p136, %p137
      %p139 = scmp.ne.s32.totalorder %s128, %s131
      %p140 = scmp.eq.s32.totalorder %s25, 1
      %p141 = por %p139, %p140
      %p142 = scmp.ne.s32.totalorder %s131, %s132
      %p143 = scmp.eq.s32.totalorder %s25, 0
      %p144 = por %p142, %p143
      %p145 = scmp.ne.s32.totalorder %s131, %s132
      %p146 = scmp.eq.s32.totalorder %s26, 1
      %p147 = por %p145, %p146
      %p149 = scmp.ne.s32.totalorder %s132, %s148
      %p150 = scmp.eq.s32.totalorder %s26, 0
      %p151 = por %p149, %p150
      %s152 = ssub.s32 %s27, %s46
      %s153 = ssub.s32 %s28, %s42
      %s154 = sor.u32 %s152, %s153
      %p155 = scmp.eq.s32.totalorder %s154, 0
      %s157 = sadd.s32 %s156, 1
      %s158 = scalar_select %p155, %s156, %s157
      %p161 = pneg %p155
      %p162 = scmp.eq.s32.totalorder %s20, 1
      %p163 = por %p161, %p162
      %p164 = scmp.ne.s32.totalorder %s156, %s159
      %p165 = scmp.eq.s32.totalorder %s20, 0
      %p166 = por %p164, %p165
      %p167 = scmp.ne.s32.totalorder %s156, %s159
      %p168 = scmp.eq.s32.totalorder %s25, 1
      %p169 = por %p167, %p168
      %p170 = scmp.ne.s32.totalorder %s159, %s160
      %p171 = scmp.eq.s32.totalorder %s25, 0
      %p172 = por %p170, %p171
      %p173 = scmp.ne.s32.totalorder %s159, %s160
      %p174 = scmp.eq.s32.totalorder %s26, 1
      %p175 = por %p173, %p174
      %p177 = scmp.ne.s32.totalorder %s160, %s176
      %p178 = scmp.eq.s32.totalorder %s26, 0
      %p179 = por %p177, %p178
      %p180 = scmp.le.s32.totalorder 1, %s20
      %p181 = scmp.lt.s32.totalorder %s20, 3
      %p182 = pnand %p180, %p181
      %p183 = pneg %p182
      // Predicated region
      $region9: #{tpu_custom_call.1} parent=5 // pred_check
        _
      $region10: #{tpu_custom_call.1} parent=5 // pred_check_branch
        %185 = sbr.rel (%p182) target = $region12
      $region11: #{tpu_custom_call.1} parent=5 // pred_region
        %s186 = ssub.s32 %s20, 1
        // Predicated region
        $region13: #{tpu_custom_call.1} parent=11 // pred_check
          %p187 = pneg %p60
        $region14: #{tpu_custom_call.1} parent=11 // pred_check_branch
          %189 = sbr.rel (%p187) target = $region16
        $region15: #{tpu_custom_call.1} parent=11 // pred_region
          _
        $region16: #{tpu_custom_call.1} parent=11 // pred_fallthru
          _
      $region12: #{tpu_custom_call.1} parent=5 // pred_fallthru
        _
      %p190 = scmp.lt.s32.totalorder %s20, 2
      // Predicated region
      $region17: #{tpu_custom_call.1} parent=5 // pred_check
        %p191 = pneg %p190
      $region18: #{tpu_custom_call.1} parent=5 // pred_check_branch
        %193 = sbr.rel (%p191) target = $region20
      $region19: #{tpu_custom_call.1} parent=5 // pred_region
        // Predicated region
        $region21: #{tpu_custom_call.1} parent=19 // pred_check
          %p194 = pneg %p82
        $region22: #{tpu_custom_call.1} parent=19 // pred_check_branch
          %196 = sbr.rel (%p194) target = $region24
        $region23: #{tpu_custom_call.1} parent=19 // pred_region
          %s197 = sand.u32 %s72, 1
          %s198 = scalar_lea.sflag [#allocation8], %s197
          %s199 = sand.u32 %s72, 1
          %s200 = smul.addr %s199, 64
          %s201 = scalar_lea.vmem [#allocation7], %s200
          %s202 = smul.u32 4, %s27
          %s203 = smul.u32 2, %s28
          %s205 = ssub.s32 1024, 1024
          %206 = vsyncadd %s198, %s205
          %s207 = smul.addr %s202, 2
          %s208 = sadd.s32 %s203, %s207
          %s209 = smul.addr %s208, 128
          %s210 = scalar_lea.hbm %s1, %s209
          %s211 = sshll.u32 %s201, 4
          %s212 = int_to_ptr.vmem [resolvable:$true] %s211
          %217 = dma.hbm_to_vmem [thread:$0]  %s210, 1024, %s212, %s198, 128, 128, 8
        $region24: #{tpu_custom_call.1} parent=19 // pred_fallthru
          _
        // Predicated region
        $region25: #{tpu_custom_call.1} parent=19 // pred_check
          %p218 = pneg %p110
        $region26: #{tpu_custom_call.1} parent=19 // pred_check_branch
          %220 = sbr.rel (%p218) target = $region28
        $region27: #{tpu_custom_call.1} parent=19 // pred_region
          %s221 = sand.u32 %s20, 1
          %s222 = scalar_lea.sflag [#allocation11], %s221
          %s223 = sand.u32 %s100, 1
          %s224 = smul.addr %s223, 128
          %s225 = scalar_lea.vmem [#allocation10], %s224
          %s226 = smul.u32 4, %s27
          %s228 = ssub.s32 2048, 2048
          %229 = vsyncadd %s222, %s228
          %s230 = smul.addr %s226, 4
          %s231 = sadd.s32 %s29, %s230
          %s232 = smul.addr %s231, 128
          %s233 = scalar_lea.hbm %s2, %s232
          %s234 = sshll.u32 %s225, 4
          %s235 = int_to_ptr.vmem [resolvable:$true] %s234
          %240 = dma.hbm_to_vmem [thread:$0]  %s233, 2048, %s235, %s222, 128, 128, 8
        $region28: #{tpu_custom_call.1} parent=19 // pred_fallthru
          _
        // Predicated region
        $region29: #{tpu_custom_call.1} parent=19 // pred_check
          %p241 = pneg %p138
        $region30: #{tpu_custom_call.1} parent=19 // pred_check_branch
          %243 = sbr.rel (%p241) target = $region32
        $region31: #{tpu_custom_call.1} parent=19 // pred_region
          %s244 = sand.u32 %s20, 1
          %s245 = scalar_lea.sflag [#allocation11], %s244
          %s246 = sand.u32 %s128, 1
          %s247 = smul.addr %s246, 64
          %s248 = scalar_lea.vmem [#allocation12], %s247
          %s249 = smul.u32 4, %s27
          %s250 = smul.u32 2, %s29
          %s252 = ssub.s32 1024, 1024
          %253 = vsyncadd %s245, %s252
          %s254 = smul.addr %s249, 2
          %s255 = sadd.s32 %s250, %s254
          %s256 = smul.addr %s255, 128
          %s257 = scalar_lea.hbm %s3, %s256
          %s258 = sshll.u32 %s248, 4
          %s259 = int_to_ptr.vmem [resolvable:$true] %s258
          %264 = dma.hbm_to_vmem [thread:$0]  %s257, 1024, %s259, %s245, 128, 128, 8
        $region32: #{tpu_custom_call.1} parent=19 // pred_fallthru
          _
      $region20: #{tpu_custom_call.1} parent=5 // pred_fallthru
        _
      %p265 = scmp.le.s32.totalorder 1, %s20
      %p266 = scmp.lt.s32.totalorder %s20, 3
      %p267 = pnand %p265, %p266
      %p268 = pneg %p267
      // Predicated region
      $region33: #{tpu_custom_call.1} parent=5 // pred_check
        _
      $region34: #{tpu_custom_call.1} parent=5 // pred_check_branch
        %270 = sbr.rel (%p267) target = $region36
      $region35: #{tpu_custom_call.1} parent=5 // pred_region
        %s271 = ssub.s32 %s20, 1
        %s272 = sand.u32 %s75, 1
        %s273 = scalar_lea.sflag [#allocation8], %s272
        %s274 = sand.u32 %s75, 1
        %s275 = smul.addr %s274, 64
        %s276 = scalar_lea.vmem [#allocation7], %s275
        // Predicated region
        $region37: #{tpu_custom_call.1} parent=35 // pred_check
          %p277 = pneg %p88
        $region38: #{tpu_custom_call.1} parent=35 // pred_check_branch
          %279 = sbr.rel (%p277) target = $region40
        $region39: #{tpu_custom_call.1} parent=35 // pred_region
          %280 = dma.done %s273, 1024
        $region40: #{tpu_custom_call.1} parent=35 // pred_fallthru
          _
        %s281 = sand.u32 %s25, 1
        %s282 = scalar_lea.sflag [#allocation11], %s281
        %s283 = sand.u32 %s103, 1
        %s284 = smul.addr %s283, 128
        %s285 = scalar_lea.vmem [#allocation10], %s284
        // Predicated region
        $region41: #{tpu_custom_call.1} parent=35 // pred_check
          %p286 = pneg %p116
        $region42: #{tpu_custom_call.1} parent=35 // pred_check_branch
          %288 = sbr.rel (%p286) target = $region44
        $region43: #{tpu_custom_call.1} parent=35 // pred_region
          %289 = dma.done %s282, 2048
        $region44: #{tpu_custom_call.1} parent=35 // pred_fallthru
          _
        %s290 = sand.u32 %s25, 1
        %s291 = scalar_lea.sflag [#allocation11], %s290
        %s292 = sand.u32 %s131, 1
        %s293 = smul.addr %s292, 64
        %s294 = scalar_lea.vmem [#allocation12], %s293
        // Predicated region
        $region45: #{tpu_custom_call.1} parent=35 // pred_check
          %p295 = pneg %p144
        $region46: #{tpu_custom_call.1} parent=35 // pred_check_branch
          %297 = sbr.rel (%p295) target = $region48
        $region47: #{tpu_custom_call.1} parent=35 // pred_region
          %298 = dma.done %s291, 1024
        $region48: #{tpu_custom_call.1} parent=35 // pred_fallthru
          _
        %p299 = pneg %p60
        %p300 = pneg %p57
        %s301 = sand.u32 %s75, 1
        %s302 = scalar_lea.sflag [#allocation8], %s301
        %s303 = sand.u32 %s75, 1
        %s304 = smul.addr %s303, 64
        %s305 = scalar_lea.vmem [#allocation7], %s304
        %p306 = pneg %p88
        %p307 = pneg %p85
        %s308 = sand.u32 %s25, 1
        %s309 = scalar_lea.sflag [#allocation11], %s308
        %s310 = sand.u32 %s103, 1
        %s311 = smul.addr %s310, 128
        %s312 = scalar_lea.vmem [#allocation10], %s311
        %p313 = pneg %p116
        %p314 = pneg %p113
        %s315 = sand.u32 %s25, 1
        %s316 = scalar_lea.sflag [#allocation11], %s315
        %s317 = sand.u32 %s131, 1
        %s318 = smul.addr %s317, 64
        %s319 = scalar_lea.vmem [#allocation12], %s318
        %p320 = pneg %p144
        %p321 = pneg %p141
        %p322 = pneg %p172
        %p323 = pneg %p169
        %s324 = sand.u32 %s159, 1
        %s325 = scalar_lea.sflag [#allocation9], %s324
        %s326 = sand.u32 %s159, 1
        %s327 = smul.addr %s326, 64
        %s328 = scalar_lea.vmem [#allocation13], %s327
        %s329 = smul.u32 4, %s30
        %s330 = smul.u32 2, %s31
        %s331 = smul.u32 4, %s30
        %s332 = smul.u32 4, %s30
        %s333 = smul.u32 2, %s32
        %s334 = smul.u32 4, %s30
        %s335 = smul.u32 2, %s31
        %p336 = scmp.eq.s32.totalorder %s32, 0
        // Predicated region
        $region49: #{tpu_custom_call.1} parent=35 // pred_check
          %p337 = pneg %p336
        $region50: #{tpu_custom_call.1} parent=35 // pred_check_branch
          %339 = sbr.rel (%p337) target = $region52
        $region51: #{tpu_custom_call.1} parent=35 // pred_region
          %vm340 = vcmask 7168
          %341 = vst.msk [vmem:[#allocation2] sm:$0xff] %vm340, -1e+30
          %342 = vst.msk [vmem:[#allocation2 + $0x8] sm:$0xff] %vm340, -1e+30
          %343 = vst.msk [vmem:[#allocation2 + $0x10] sm:$0xff] %vm340, -1e+30
          %344 = vst.msk [vmem:[#allocation2 + $0x18] sm:$0xff] %vm340, -1e+30
          %345 = vst.msk [vmem:[#allocation2 + $0x20] sm:$0xff] %vm340, -1e+30
          %346 = vst.msk [vmem:[#allocation2 + $0x28] sm:$0xff] %vm340, -1e+30
          %347 = vst.msk [vmem:[#allocation2 + $0x30] sm:$0xff] %vm340, -1e+30
          %348 = vst.msk [vmem:[#allocation2 + $0x38] sm:$0xff] %vm340, -1e+30
          %349 = vst.msk [vmem:[#allocation3] sm:$0xff] %vm340, 0.0
          %350 = vst.msk [vmem:[#allocation3 + $0x8] sm:$0xff] %vm340, 0.0
          %351 = vst.msk [vmem:[#allocation3 + $0x10] sm:$0xff] %vm340, 0.0
          %352 = vst.msk [vmem:[#allocation3 + $0x18] sm:$0xff] %vm340, 0.0
          %353 = vst.msk [vmem:[#allocation3 + $0x20] sm:$0xff] %vm340, 0.0
          %354 = vst.msk [vmem:[#allocation3 + $0x28] sm:$0xff] %vm340, 0.0
          %355 = vst.msk [vmem:[#allocation3 + $0x30] sm:$0xff] %vm340, 0.0
          %356 = vst.msk [vmem:[#allocation3 + $0x38] sm:$0xff] %vm340, 0.0
          %vm357 = vcmask 261120
          %358 = vst.msk [vmem:[#allocation4] sm:$0xff] %vm357, 0.0
          %359 = vst.msk [vmem:[#allocation4 + $0x8] sm:$0xff] %vm357, 0.0
          %360 = vst.msk [vmem:[#allocation4 + $0x10] sm:$0xff] %vm357, 0.0
          %361 = vst.msk [vmem:[#allocation4 + $0x18] sm:$0xff] %vm357, 0.0
          %362 = vst.msk [vmem:[#allocation4 + $0x20] sm:$0xff] %vm357, 0.0
          %363 = vst.msk [vmem:[#allocation4 + $0x28] sm:$0xff] %vm357, 0.0
          %364 = vst.msk [vmem:[#allocation4 + $0x30] sm:$0xff] %vm357, 0.0
          %365 = vst.msk [vmem:[#allocation4 + $0x38] sm:$0xff] %vm357, 0.0
        $region52: #{tpu_custom_call.1} parent=35 // pred_fallthru
          _
        %p366 = scmp.eq.s32.totalorder %s32, %s31
        // Predicated region
        $region53: #{tpu_custom_call.1} parent=35 // pred_check
          %p367 = pneg %p366
        $region54: #{tpu_custom_call.1} parent=35 // pred_check_branch
          %369 = sbr.rel (%p367) target = $region56
        $region55: #{tpu_custom_call.1} parent=35 // pred_region
          %v370 = vld [vmem:[%s294] sm:$0xff]
          %v371 = vld [vmem:[%s294 + $0x8] sm:$0xff]
          %v372 = vld [vmem:[%s294 + $0x10] sm:$0xff]
          %v373 = vld [vmem:[%s294 + $0x18] sm:$0xff]
          %v374 = vld [vmem:[%s294 + $0x20] sm:$0xff]
          %v375 = vld [vmem:[%s294 + $0x28] sm:$0xff]
          %v376 = vld [vmem:[%s294 + $0x30] sm:$0xff]
          %v377 = vld [vmem:[%s294 + $0x38] sm:$0xff]
          %vm378 = vcmask 261120
          %379 = vst.msk [vmem:[#allocation5] sm:$0xff] %vm378, %v370
          %380 = vst.msk [vmem:[#allocation5 + $0x8] sm:$0xff] %vm378, %v371
          %381 = vst.msk [vmem:[#allocation5 + $0x10] sm:$0xff] %vm378, %v372
          %382 = vst.msk [vmem:[#allocation5 + $0x18] sm:$0xff] %vm378, %v373
          %383 = vst.msk [vmem:[#allocation5 + $0x20] sm:$0xff] %vm378, %v374
          %384 = vst.msk [vmem:[#allocation5 + $0x28] sm:$0xff] %vm378, %v375
          %385 = vst.msk [vmem:[#allocation5 + $0x30] sm:$0xff] %vm378, %v376
          %386 = vst.msk [vmem:[#allocation5 + $0x38] sm:$0xff] %vm378, %v377
        $region56: #{tpu_custom_call.1} parent=35 // pred_fallthru
          _
        %v387 = vld [vmem:[%s276] sm:$0xff]
        %v388 = vld [vmem:[%s276 + $0x8] sm:$0xff]
        %v389 = vld [vmem:[%s276 + $0x10] sm:$0xff]
        %v390 = vld [vmem:[%s276 + $0x18] sm:$0xff]
        %v391 = vld [vmem:[%s276 + $0x20] sm:$0xff]
        %v392 = vld [vmem:[%s276 + $0x28] sm:$0xff]
        %v393 = vld [vmem:[%s276 + $0x30] sm:$0xff]
        %v394 = vld [vmem:[%s276 + $0x38] sm:$0xff]
        %v395 = vld [vmem:[%s285] sm:$0xff]
        %v396 = vld [vmem:[%s285 + $0x8] sm:$0xff]
        %v397 = vld [vmem:[%s285 + $0x10] sm:$0xff]
        %v398 = vld [vmem:[%s285 + $0x18] sm:$0xff]
        %v399 = vld [vmem:[%s285 + $0x20] sm:$0xff]
        %v400 = vld [vmem:[%s285 + $0x28] sm:$0xff]
        %v401 = vld [vmem:[%s285 + $0x30] sm:$0xff]
        %v402 = vld [vmem:[%s285 + $0x38] sm:$0xff]
        %v403 = vld [vmem:[%s285 + $0x40] sm:$0xff]
        %v404 = vld [vmem:[%s285 + $0x48] sm:$0xff]
        %v405 = vld [vmem:[%s285 + $0x50] sm:$0xff]
        %v406 = vld [vmem:[%s285 + $0x58] sm:$0xff]
        %v407 = vld [vmem:[%s285 + $0x60] sm:$0xff]
        %v408 = vld [vmem:[%s285 + $0x68] sm:$0xff]
        %v409 = vld [vmem:[%s285 + $0x70] sm:$0xff]
        %v410 = vld [vmem:[%s285 + $0x78] sm:$0xff]
        %v411 = vld [vmem:[%s294] sm:$0xff]
        %v412 = vld [vmem:[%s294 + $0x8] sm:$0xff]
        %v413 = vld [vmem:[%s294 + $0x10] sm:$0xff]
        %v414 = vld [vmem:[%s294 + $0x18] sm:$0xff]
        %v415 = vld [vmem:[%s294 + $0x20] sm:$0xff]
        %v416 = vld [vmem:[%s294 + $0x28] sm:$0xff]
        %v417 = vld [vmem:[%s294 + $0x30] sm:$0xff]
        %v418 = vld [vmem:[%s294 + $0x38] sm:$0xff]
        %vm419 = vcmask 261120
        %v421 = vsel %vm419, %v387, 0
        %v424 = vsel %vm419, %v388, 0
        %426 = vmatprep.subr.mxu0 0.0
        %v427 = vand.u32 %v395, 4294901760
        %428 = vmatpush1.msra.mxu0 %v427
        %429 = vmatprep.subr.mxu0 0.0
        %v430 = vand.u32 %v396, 4294901760
        %431 = vmatpush1.msra.mxu0 %v430
        %432 = vmatprep.subr.mxu0 0.0
        %v433 = vand.u32 %v397, 4294901760
        %434 = vmatpush1.msra.mxu0 %v433
        %435 = vmatprep.subr.mxu0 0.0
        %v436 = vand.u32 %v398, 4294901760
        %437 = vmatpush1.msra.mxu0 %v436
        %438 = vmatprep.subr.mxu0 0.0
        %439 = vmatpush1.msra.mxu0 0.0
        %440 = vmatprep.subr.mxu0 0.0
        %441 = vmatpush1.msra.mxu0 0.0
        %442 = vmatprep.subr.mxu0 0.0
        %443 = vmatpush1.msra.mxu0 0.0
        %444 = vmatprep.subr.mxu0 0.0
        %445 = vmatpush1.msra.mxu0 0.0
        %446 = vmatprep.subr.mxu0 0.0
        %447 = vmatpush1.msra.mxu0 0.0
        %448 = vmatprep.subr.mxu0 0.0
        %449 = vmatpush1.msra.mxu0 0.0
        %450 = vmatprep.subr.mxu0 0.0
        %451 = vmatpush1.msra.mxu0 0.0
        %452 = vmatprep.subr.mxu0 0.0
        %453 = vmatpush1.msra.mxu0 0.0
        %454 = vmatprep.subr.mxu0 0.0
        %455 = vmatpush1.msra.mxu0 0.0
        %456 = vmatprep.subr.mxu0 0.0
        %457 = vmatpush1.msra.mxu0 0.0
        %458 = vmatprep.subr.mxu0 0.0
        %459 = vmatpush1.msra.mxu0 0.0
        %460 = vmatprep.subr.mxu0 0.0
        %461 = vmatpush1.msra.mxu0 0.0
        %462 = vmatprep.subr.mxu0 0.0
        %463 = vmatpush1.msra.mxu0 0.0
        %464 = vmatprep.subr.mxu0 0.0
        %465 = vmatpush1.msra.mxu0 0.0
        %466 = vmatprep.subr.mxu0 0.0
        %467 = vmatpush1.msra.mxu0 0.0
        %468 = vmatprep.subr.mxu0 0.0
        %469 = vmatpush1.msra.mxu0 0.0
        %470 = vmatprep.subr.mxu0 0.0
        %471 = vmatpush1.msra.mxu0 0.0
        %472 = vmatprep.subr.mxu0 0.0
        %473 = vmatpush1.msra.mxu0 0.0
        %474 = vmatprep.subr.mxu0 0.0
        %475 = vmatpush1.msra.mxu0 0.0
        %476 = vmatprep.subr.mxu0 0.0
        %477 = vmatpush1.msra.mxu0 0.0
        %478 = vmatprep.subr.mxu0 0.0
        %479 = vmatpush1.msra.mxu0 0.0
        %480 = vmatprep.subr.mxu0 0.0
        %481 = vmatpush1.msra.mxu0 0.0
        %482 = vmatprep.subr.mxu0 0.0
        %483 = vmatpush1.msra.mxu0 0.0
        %484 = vmatprep.subr.mxu0 0.0
        %485 = vmatpush1.msra.mxu0 0.0
        %486 = vmatprep.subr.mxu0 0.0
        %487 = vmatpush1.msra.mxu0 0.0
        %488 = vmatprep.subr.mxu0 0.0
        %489 = vmatpush1.msra.mxu0 0.0
        %490 = vmatprep.subr.mxu0 0.0
        %491 = vmatpush1.msra.mxu0 0.0
        %492 = vmatprep.subr.mxu0 0.0
        %493 = vmatpush1.msra.mxu0 0.0
        %494 = vmatprep.mubr.f32.mxu0 0.0
        %v495 = vand.u32 %v421, 4294901760
        %v496 = vsub.f32 %v421, %v495
        %v497 = vand.u32 %v496, 4294901760
        %v498 = vsub.f32 %v496, %v497
        %v499 = vand.u32 %v498, 4294901760
        %500 = vmatmul.mubr.f32.gmra.mrb[0].mxu0 %v499
        %v501 = vpop.f32.mrb[0].mxu0
        %v502 = vadd.f32 0.0, %v501
        %v503 = vpop.f32.mrb[0].mxu0
        %504 = vmatprep.mubr.f32.mxu0 0.0
        %v505 = vand.u32 %v424, 4294901760
        %v506 = vsub.f32 %v424, %v505
        %v507 = vand.u32 %v506, 4294901760
        %v508 = vsub.f32 %v506, %v507
        %v509 = vand.u32 %v508, 4294901760
        %510 = vmatmul.mubr.f32.gmra.mrb[0].mxu0 %v509
        %v511 = vpop.f32.mrb[0].mxu0
        %v512 = vadd.f32 0.0, %v511
        %v513 = vpop.f32.mrb[0].mxu0
        %514 = vdwg.mxu0
        %515 = vmatprep.subr.mxu0 0.0
        %v516 = vand.u32 %v395, 4294901760
        %v517 = vsub.f32 %v395, %v516
        %v518 = vand.u32 %v517, 4294901760
        %v519 = vsub.f32 %v517, %v518
        %v520 = vand.u32 %v519, 4294901760
        %521 = vmatpush1.msra.mxu0 %v520
        %522 = vmatprep.subr.mxu0 0.0
        %v523 = vand.u32 %v396, 4294901760
        %v524 = vsub.f32 %v396, %v523
        %v525 = vand.u32 %v524, 4294901760
        %v526 = vsub.f32 %v524, %v525
        %v527 = vand.u32 %v526, 4294901760
        %528 = vmatpush1.msra.mxu0 %v527
        %529 = vmatprep.subr.mxu0 0.0
        %v530 = vand.u32 %v397, 4294901760
        %v531 = vsub.f32 %v397, %v530
        %v532 = vand.u32 %v531, 4294901760
        %v533 = vsub.f32 %v531, %v532
        %v534 = vand.u32 %v533, 4294901760
        %535 = vmatpush1.msra.mxu0 %v534
        %536 = vmatprep.subr.mxu0 0.0
        %v537 = vand.u32 %v398, 4294901760
        %v538 = vsub.f32 %v398, %v537
        %v539 = vand.u32 %v538, 4294901760
        %v540 = vsub.f32 %v538, %v539
        %v541 = vand.u32 %v540, 4294901760
        %542 = vmatpush1.msra.mxu0 %v541
        %543 = vmatprep.subr.mxu0 0.0
        %544 = vmatpush1.msra.mxu0 0.0
        %545 = vmatprep.subr.mxu0 0.0
        %546 = vmatpush1.msra.mxu0 0.0
        %547 = vmatprep.subr.mxu0 0.0
        %548 = vmatpush1.msra.mxu0 0.0
        %549 = vmatprep.subr.mxu0 0.0
        %550 = vmatpush1.msra.mxu0 0.0
        %551 = vmatprep.subr.mxu0 0.0
        %552 = vmatpush1.msra.mxu0 0.0
        %553 = vmatprep.subr.mxu0 0.0
        %554 = vmatpush1.msra.mxu0 0.0
        %555 = vmatprep.subr.mxu0 0.0
        %556 = vmatpush1.msra.mxu0 0.0
        %557 = vmatprep.subr.mxu0 0.0
        %558 = vmatpush1.msra.mxu0 0.0
        %559 = vmatprep.subr.mxu0 0.0
        %560 = vmatpush1.msra.mxu0 0.0
        %561 = vmatprep.subr.mxu0 0.0
        %562 = vmatpush1.msra.mxu0 0.0
        %563 = vmatprep.subr.mxu0 0.0
        %564 = vmatpush1.msra.mxu0 0.0
        %565 = vmatprep.subr.mxu0 0.0
        %566 = vmatpush1.msra.mxu0 0.0
        %567 = vmatprep.subr.mxu0 0.0
        %568 = vmatpush1.msra.mxu0 0.0
        %569 = vmatprep.subr.mxu0 0.0
        %570 = vmatpush1.msra.mxu0 0.0
        %571 = vmatprep.subr.mxu0 0.0
        %572 = vmatpush1.msra.mxu0 0.0
        %573 = vmatprep.subr.mxu0 0.0
        %574 = vmatpush1.msra.mxu0 0.0
        %575 = vmatprep.subr.mxu0 0.0
        %576 = vmatpush1.msra.mxu0 0.0
        %577 = vmatprep.subr.mxu0 0.0
        %578 = vmatpush1.msra.mxu0 0.0
        %579 = vmatprep.subr.mxu0 0.0
        %580 = vmatpush1.msra.mxu0 0.0
        %581 = vmatprep.subr.mxu0 0.0
        %582 = vmatpush1.msra.mxu0 0.0
        %583 = vmatprep.subr.mxu0 0.0
        %584 = vmatpush1.msra.mxu0 0.0
        %585 = vmatprep.subr.mxu0 0.0
        %586 = vmatpush1.msra.mxu0 0.0
        %587 = vmatprep.subr.mxu0 0.0
        %588 = vmatpush1.msra.mxu0 0.0
        %589 = vmatprep.subr.mxu0 0.0
        %590 = vmatpush1.msra.mxu0 0.0
        %591 = vmatprep.subr.mxu0 0.0
        %592 = vmatpush1.msra.mxu0 0.0
        %593 = vmatprep.subr.mxu0 0.0
        %594 = vmatpush1.msra.mxu0 0.0
        %595 = vmatprep.subr.mxu0 0.0
        %596 = vmatpush1.msra.mxu0 0.0
        %597 = vmatprep.subr.mxu0 0.0
        %598 = vmatpush1.msra.mxu0 0.0
        %599 = vmatprep.mubr.f32.mxu0 0.0
        %v600 = vand.u32 %v421, 4294901760
        %601 = vmatmul.mubr.f32.gmra.mrb[0].mxu0 %v600
        %v602 = vpop.f32.mrb[0].mxu0
        %v603 = vadd.f32 %v502, %v602
        %v604 = vpop.f32.mrb[0].mxu0
        %605 = vmatprep.mubr.f32.mxu0 0.0
        %v606 = vand.u32 %v424, 4294901760
        %607 = vmatmul.mubr.f32.gmra.mrb[0].mxu0 %v606
        %v608 = vpop.f32.mrb[0].mxu0
        %v609 = vadd.f32 %v512, %v608
        %v610 = vpop.f32.mrb[0].mxu0
        %611 = vdwg.mxu0
        %612 = vmatprep.subr.mxu0 0.0
        %v613 = vand.u32 %v395, 4294901760
        %v614 = vsub.f32 %v395, %v613
        %615 = vmatpush1.msra.mxu0 %v614
        %616 = vmatprep.subr.mxu0 0.0
        %v617 = vand.u32 %v396, 4294901760
        %v618 = vsub.f32 %v396, %v617
        %619 = vmatpush1.msra.mxu0 %v618
        %620 = vmatprep.subr.mxu0 0.0
        %v621 = vand.u32 %v397, 4294901760
        %v622 = vsub.f32 %v397, %v621
        %623 = vmatpush1.msra.mxu0 %v622
        %624 = vmatprep.subr.mxu0 0.0
        %v625 = vand.u32 %v398, 4294901760
        %v626 = vsub.f32 %v398, %v625
        %627 = vmatpush1.msra.mxu0 %v626
        %628 = vmatprep.subr.mxu0 0.0
        %629 = vmatpush1.msra.mxu0 0.0
        %630 = vmatprep.subr.mxu0 0.0
        %631 = vmatpush1.msra.mxu0 0.0
        %632 = vmatprep.subr.mxu0 0.0
        %633 = vmatpush1.msra.mxu0 0.0
        %634 = vmatprep.subr.mxu0 0.0
        %635 = vmatpush1.msra.mxu0 0.0
        %636 = vmatprep.subr.mxu0 0.0
        %637 = vmatpush1.msra.mxu0 0.0
        %638 = vmatprep.subr.mxu0 0.0
        %639 = vmatpush1.msra.mxu0 0.0
        %640 = vmatprep.subr.mxu0 0.0
        %641 = vmatpush1.msra.mxu0 0.0
        %642 = vmatprep.subr.mxu0 0.0
        %643 = vmatpush1.msra.mxu0 0.0
        %644 = vmatprep.subr.mxu0 0.0
        %645 = vmatpush1.msra.mxu0 0.0
        %646 = vmatprep.subr.mxu0 0.0
        %647 = vmatpush1.msra.mxu0 0.0
        %648 = vmatprep.subr.mxu0 0.0
        %649 = vmatpush1.msra.mxu0 0.0
        %650 = vmatprep.subr.mxu0 0.0
        %651 = vmatpush1.msra.mxu0 0.0
        %652 = vmatprep.subr.mxu0 0.0
        %653 = vmatpush1.msra.mxu0 0.0
        %654 = vmatprep.subr.mxu0 0.0
        %655 = vmatpush1.msra.mxu0 0.0
        %656 = vmatprep.subr.mxu0 0.0
        %657 = vmatpush1.msra.mxu0 0.0
        %658 = vmatprep.subr.mxu0 0.0
        %659 = vmatpush1.msra.mxu0 0.0
        %660 = vmatprep.subr.mxu0 0.0
        %661 = vmatpush1.msra.mxu0 0.0
        %662 = vmatprep.subr.mxu0 0.0
        %663 = vmatpush1.msra.mxu0 0.0
        %664 = vmatprep.subr.mxu0 0.0
        %665 = vmatpush1.msra.mxu0 0.0
        %666 = vmatprep.subr.mxu0 0.0
        %667 = vmatpush1.msra.mxu0 0.0
        %668 = vmatprep.subr.mxu0 0.0
        %669 = vmatpush1.msra.mxu0 0.0
        %670 = vmatprep.subr.mxu0 0.0
        %671 = vmatpush1.msra.mxu0 0.0
        %672 = vmatprep.subr.mxu0 0.0
        %673 = vmatpush1.msra.mxu0 0.0
        %674 = vmatprep.subr.mxu0 0.0
        %675 = vmatpush1.msra.mxu0 0.0
        %676 = vmatprep.subr.mxu0 0.0
        %677 = vmatpush1.msra.mxu0 0.0
        %678 = vmatprep.subr.mxu0 0.0
        %679 = vmatpush1.msra.mxu0 0.0
        %680 = vmatprep.subr.mxu0 0.0
        %681 = vmatpush1.msra.mxu0 0.0
        %682 = vmatprep.subr.mxu0 0.0
        %683 = vmatpush1.msra.mxu0 0.0
        %684 = vmatprep.mubr.f32.mxu0 0.0
        %v685 = vand.u32 %v421, 4294901760
        %v686 = vsub.f32 %v421, %v685
        %687 = vmatmul.mubr.f32.gmra.mrb[0].mxu0 %v686
        %v688 = vpop.f32.mrb[0].mxu0
        %v689 = vadd.f32 %v603, %v688
        %v690 = vpop.f32.mrb[0].mxu0
        %691 = vmatprep.mubr.f32.mxu0 0.0
        %v692 = vand.u32 %v424, 4294901760
        %v693 = vsub.f32 %v424, %v692
        %694 = vmatmul.mubr.f32.gmra.mrb[0].mxu0 %v693
        %v695 = vpop.f32.mrb[0].mxu0
        %v696 = vadd.f32 %v609, %v695
        %v697 = vpop.f32.mrb[0].mxu0
        %698 = vdwg.mxu0
        %699 = vmatprep.subr.mxu0 0.0
        %v700 = vand.u32 %v395, 4294901760
        %701 = vmatpush1.msra.mxu0 %v700
        %702 = vmatprep.subr.mxu0 0.0
        %v703 = vand.u32 %v396, 4294901760
        %704 = vmatpush1.msra.mxu0 %v703
        %705 = vmatprep.subr.mxu0 0.0
        %v706 = vand.u32 %v397, 4294901760
        %707 = vmatpush1.msra.mxu0 %v706
        %708 = vmatprep.subr.mxu0 0.0
        %v709 = vand.u32 %v398, 4294901760
        %710 = vmatpush1.msra.mxu0 %v709
        %711 = vmatprep.subr.mxu0 0.0
        %712 = vmatpush1.msra.mxu0 0.0
        %713 = vmatprep.subr.mxu0 0.0
        %714 = vmatpush1.msra.mxu0 0.0
        %715 = vmatprep.subr.mxu0 0.0
        %716 = vmatpush1.msra.mxu0 0.0
        %717 = vmatprep.subr.mxu0 0.0
        %718 = vmatpush1.msra.mxu0 0.0
        %719 = vmatprep.subr.mxu0 0.0
        %720 = vmatpush1.msra.mxu0 0.0
        %721 = vmatprep.subr.mxu0 0.0
        %722 = vmatpush1.msra.mxu0 0.0
        %723 = vmatprep.subr.mxu0 0.0
        %724 = vmatpush1.msra.mxu0 0.0
        %725 = vmatprep.subr.mxu0 0.0
        %726 = vmatpush1.msra.mxu0 0.0
        %727 = vmatprep.subr.mxu0 0.0
        %728 = vmatpush1.msra.mxu0 0.0
        %729 = vmatprep.subr.mxu0 0.0
        %730 = vmatpush1.msra.mxu0 0.0
        %731 = vmatprep.subr.mxu0 0.0
        %732 = vmatpush1.msra.mxu0 0.0
        %733 = vmatprep.subr.mxu0 0.0
        %734 = vmatpush1.msra.mxu0 0.0
        %735 = vmatprep.subr.mxu0 0.0
        %736 = vmatpush1.msra.mxu0 0.0
        %737 = vmatprep.subr.mxu0 0.0
        %738 = vmatpush1.msra.mxu0 0.0
        %739 = vmatprep.subr.mxu0 0.0
        %740 = vmatpush1.msra.mxu0 0.0
        %741 = vmatprep.subr.mxu0 0.0
        %742 = vmatpush1.msra.mxu0 0.0
        %743 = vmatprep.subr.mxu0 0.0
        %744 = vmatpush1.msra.mxu0 0.0
        %745 = vmatprep.subr.mxu0 0.0
        %746 = vmatpush1.msra.mxu0 0.0
        %747 = vmatprep.subr.mxu0 0.0
        %748 = vmatpush1.msra.mxu0 0.0
        %749 = vmatprep.subr.mxu0 0.0
        %750 = vmatpush1.msra.mxu0 0.0
        %751 = vmatprep.subr.mxu0 0.0
        %752 = vmatpush1.msra.mxu0 0.0
        %753 = vmatprep.subr.mxu0 0.0
        %754 = vmatpush1.msra.mxu0 0.0
        %755 = vmatprep.subr.mxu0 0.0
        %756 = vmatpush1.msra.mxu0 0.0
        %757 = vmatprep.subr.mxu0 0.0
        %758 = vmatpush1.msra.mxu0 0.0
        %759 = vmatprep.subr.mxu0 0.0
        %760 = vmatpush1.msra.mxu0 0.0
        %761 = vmatprep.subr.mxu0 0.0
        %762 = vmatpush1.msra.mxu0 0.0
        %763 = vmatprep.subr.mxu0 0.0
        %764 = vmatpush1.msra.mxu0 0.0
        %765 = vmatprep.subr.mxu0 0.0
        %766 = vmatpush1.msra.mxu0 0.0
        %767 = vmatprep.mubr.f32.mxu0 0.0
        %v768 = vand.u32 %v421, 4294901760
        %v769 = vsub.f32 %v421, %v768
        %v770 = vand.u32 %v769, 4294901760
        %771 = vmatmul.mubr.f32.gmra.mrb[0].mxu0 %v770
        %v772 = vpop.f32.mrb[0].mxu0
        %v773 = vadd.f32 %v689, %v772
        %v774 = vpop.f32.mrb[0].mxu0
        %775 = vmatprep.mubr.f32.mxu0 0.0
        %v776 = vand.u32 %v424, 4294901760
        %v777 = vsub.f32 %v424, %v776
        %v778 = vand.u32 %v777, 4294901760
        %779 = vmatmul.mubr.f32.gmra.mrb[0].mxu0 %v778
        %v780 = vpop.f32.mrb[0].mxu0
        %v781 = vadd.f32 %v696, %v780
        %v782 = vpop.f32.mrb[0].mxu0
        %783 = vdwg.mxu0
        %784 = vmatprep.subr.mxu0 0.0
        %v785 = vand.u32 %v395, 4294901760
        %v786 = vsub.f32 %v395, %v785
        %v787 = vand.u32 %v786, 4294901760
        %788 = vmatpush1.msra.mxu0 %v787
        %789 = vmatprep.subr.mxu0 0.0
        %v790 = vand.u32 %v396, 4294901760
        %v791 = vsub.f32 %v396, %v790
        %v792 = vand.u32 %v791, 4294901760
        %793 = vmatpush1.msra.mxu0 %v792
        %794 = vmatprep.subr.mxu0 0.0
        %v795 = vand.u32 %v397, 4294901760
        %v796 = vsub.f32 %v397, %v795
        %v797 = vand.u32 %v796, 4294901760
        %798 = vmatpush1.msra.mxu0 %v797
        %799 = vmatprep.subr.mxu0 0.0
        %v800 = vand.u32 %v398, 4294901760
        %v801 = vsub.f32 %v398, %v800
        %v802 = vand.u32 %v801, 4294901760
        %803 = vmatpush1.msra.mxu0 %v802
        %804 = vmatprep.subr.mxu0 0.0
        %805 = vmatpush1.msra.mxu0 0.0
        %806 = vmatprep.subr.mxu0 0.0
        %807 = vmatpush1.msra.mxu0 0.0
        %808 = vmatprep.subr.mxu0 0.0
        %809 = vmatpush1.msra.mxu0 0.0
        %810 = vmatprep.subr.mxu0 0.0
        %811 = vmatpush1.msra.mxu0 0.0
        %812 = vmatprep.subr.mxu0 0.0
        %813 = vmatpush1.msra.mxu0 0.0
        %814 = vmatprep.subr.mxu0 0.0
        %815 = vmatpush1.msra.mxu0 0.0
        %816 = vmatprep.subr.mxu0 0.0
        %817 = vmatpush1.msra.mxu0 0.0
        %818 = vmatprep.subr.mxu0 0.0
        %819 = vmatpush1.msra.mxu0 0.0
        %820 = vmatprep.subr.mxu0 0.0
        %821 = vmatpush1.msra.mxu0 0.0
        %822 = vmatprep.subr.mxu0 0.0
        %823 = vmatpush1.msra.mxu0 0.0
        %824 = vmatprep.subr.mxu0 0.0
        %825 = vmatpush1.msra.mxu0 0.0
        %826 = vmatprep.subr.mxu0 0.0
        %827 = vmatpush1.msra.mxu0 0.0
        %828 = vmatprep.subr.mxu0 0.0
        %829 = vmatpush1.msra.mxu0 0.0
        %830 = vmatprep.subr.mxu0 0.0
        %831 = vmatpush1.msra.mxu0 0.0
        %832 = vmatprep.subr.mxu0 0.0
        %833 = vmatpush1.msra.mxu0 0.0
        %834 = vmatprep.subr.mxu0 0.0
        %835 = vmatpush1.msra.mxu0 0.0
        %836 = vmatprep.subr.mxu0 0.0
        %837 = vmatpush1.msra.mxu0 0.0
        %838 = vmatprep.subr.mxu0 0.0
        %839 = vmatpush1.msra.mxu0 0.0
        %840 = vmatprep.subr.mxu0 0.0
        %841 = vmatpush1.msra.mxu0 0.0
        %842 = vmatprep.subr.mxu0 0.0
        %843 = vmatpush1.msra.mxu0 0.0
        %844 = vmatprep.subr.mxu0 0.0
        %845 = vmatpush1.msra.mxu0 0.0
        %846 = vmatprep.subr.mxu0 0.0
        %847 = vmatpush1.msra.mxu0 0.0
        %848 = vmatprep.subr.mxu0 0.0
        %849 = vmatpush1.msra.mxu0 0.0
        %850 = vmatprep.subr.mxu0 0.0
        %851 = vmatpush1.msra.mxu0 0.0
        %852 = vmatprep.subr.mxu0 0.0
        %853 = vmatpush1.msra.mxu0 0.0
        %854 = vmatprep.subr.mxu0 0.0
        %855 = vmatpush1.msra.mxu0 0.0
        %856 = vmatprep.subr.mxu0 0.0
        %857 = vmatpush1.msra.mxu0 0.0
        %858 = vmatprep.subr.mxu0 0.0
        %859 = vmatpush1.msra.mxu0 0.0
        %860 = vmatprep.mubr.f32.mxu0 0.0
        %v861 = vand.u32 %v421, 4294901760
        %862 = vmatmul.mubr.f32.gmra.mrb[0].mxu0 %v861
        %v863 = vpop.f32.mrb[0].mxu0
        %v864 = vadd.f32 %v773, %v863
        %v865 = vpop.f32.mrb[0].mxu0
        %866 = vmatprep.mubr.f32.mxu0 0.0
        %v867 = vand.u32 %v424, 4294901760
        %868 = vmatmul.mubr.f32.gmra.mrb[0].mxu0 %v867
        %v869 = vpop.f32.mrb[0].mxu0
        %v870 = vadd.f32 %v781, %v869
        %v871 = vpop.f32.mrb[0].mxu0
        %872 = vdwg.mxu0
        %873 = vmatprep.subr.mxu0 0.0
        %v874 = vand.u32 %v395, 4294901760
        %875 = vmatpush1.msra.mxu0 %v874
        %876 = vmatprep.subr.mxu0 0.0
        %v877 = vand.u32 %v396, 4294901760
        %878 = vmatpush1.msra.mxu0 %v877
        %879 = vmatprep.subr.mxu0 0.0
        %v880 = vand.u32 %v397, 4294901760
        %881 = vmatpush1.msra.mxu0 %v880
        %882 = vmatprep.subr.mxu0 0.0
        %v883 = vand.u32 %v398, 4294901760
        %884 = vmatpush1.msra.mxu0 %v883
        %885 = vmatprep.subr.mxu0 0.0
        %886 = vmatpush1.msra.mxu0 0.0
        %887 = vmatprep.subr.mxu0 0.0
        %888 = vmatpush1.msra.mxu0 0.0
        %889 = vmatprep.subr.mxu0 0.0
        %890 = vmatpush1.msra.mxu0 0.0
        %891 = vmatprep.subr.mxu0 0.0
        %892 = vmatpush1.msra.mxu0 0.0
        %893 = vmatprep.subr.mxu0 0.0
        %894 = vmatpush1.msra.mxu0 0.0
        %895 = vmatprep.subr.mxu0 0.0
        %896 = vmatpush1.msra.mxu0 0.0
        %897 = vmatprep.subr.mxu0 0.0
        %898 = vmatpush1.msra.mxu0 0.0
        %899 = vmatprep.subr.mxu0 0.0
        %900 = vmatpush1.msra.mxu0 0.0
        %901 = vmatprep.subr.mxu0 0.0
        %902 = vmatpush1.msra.mxu0 0.0
        %903 = vmatprep.subr.mxu0 0.0
        %904 = vmatpush1.msra.mxu0 0.0
        %905 = vmatprep.subr.mxu0 0.0
        %906 = vmatpush1.msra.mxu0 0.0
        %907 = vmatprep.subr.mxu0 0.0
        %908 = vmatpush1.msra.mxu0 0.0
        %909 = vmatprep.subr.mxu0 0.0
        %910 = vmatpush1.msra.mxu0 0.0
        %911 = vmatprep.subr.mxu0 0.0
        %912 = vmatpush1.msra.mxu0 0.0
        %913 = vmatprep.subr.mxu0 0.0
        %914 = vmatpush1.msra.mxu0 0.0
        %915 = vmatprep.subr.mxu0 0.0
        %916 = vmatpush1.msra.mxu0 0.0
        %917 = vmatprep.subr.mxu0 0.0
        %918 = vmatpush1.msra.mxu0 0.0
        %919 = vmatprep.subr.mxu0 0.0
        %920 = vmatpush1.msra.mxu0 0.0
        %921 = vmatprep.subr.mxu0 0.0
        %922 = vmatpush1.msra.mxu0 0.0
        %923 = vmatprep.subr.mxu0 0.0
        %924 = vmatpush1.msra.mxu0 0.0
        %925 = vmatprep.subr.mxu0 0.0
        %926 = vmatpush1.msra.mxu0 0.0
        %927 = vmatprep.subr.mxu0 0.0
        %928 = vmatpush1.msra.mxu0 0.0
        %929 = vmatprep.subr.mxu0 0.0
        %930 = vmatpush1.msra.mxu0 0.0
        %931 = vmatprep.subr.mxu0 0.0
        %932 = vmatpush1.msra.mxu0 0.0
        %933 = vmatprep.subr.mxu0 0.0
        %934 = vmatpush1.msra.mxu0 0.0
        %935 = vmatprep.subr.mxu0 0.0
        %936 = vmatpush1.msra.mxu0 0.0
        %937 = vmatprep.subr.mxu0 0.0
        %938 = vmatpush1.msra.mxu0 0.0
        %939 = vmatprep.subr.mxu0 0.0
        %940 = vmatpush1.msra.mxu0 0.0
        %941 = vmatprep.mubr.f32.mxu0 0.0
        %v942 = vand.u32 %v421, 4294901760
        %943 = vmatmul.mubr.f32.gmra.mrb[0].mxu0 %v942
        %v944 = vpop.f32.mrb[0].mxu0
        %v945 = vadd.f32 %v864, %v944
        %v946 = vpop.f32.mrb[0].mxu0
        %947 = vmatprep.mubr.f32.mxu0 0.0
        %v948 = vand.u32 %v424, 4294901760
        %949 = vmatmul.mubr.f32.gmra.mrb[0].mxu0 %v948
        %v950 = vpop.f32.mrb[0].mxu0
        %v951 = vadd.f32 %v870, %v950
        %v952 = vpop.f32.mrb[0].mxu0
        %953 = vdwg.mxu0
        %v955 = vsel %vm419, %v389, 0
        %v958 = vsel %vm419, %v390, 0
        %960 = vmatprep.subr.mxu0 0.0
        %v961 = vand.u32 %v399, 4294901760
        %962 = vmatpush1.msra.mxu0 %v961
        %963 = vmatprep.subr.mxu0 0.0
        %v964 = vand.u32 %v400, 4294901760
        %965 = vmatpush1.msra.mxu0 %v964
        %966 = vmatprep.subr.mxu0 0.0
        %v967 = vand.u32 %v401, 4294901760
        %968 = vmatpush1.msra.mxu0 %v967
        %969 = vmatprep.subr.mxu0 0.0
        %v970 = vand.u32 %v402, 4294901760
        %971 = vmatpush1.msra.mxu0 %v970
        %972 = vmatprep.subr.mxu0 0.0
        %973 = vmatpush1.msra.mxu0 0.0
        %974 = vmatprep.subr.mxu0 0.0
        %975 = vmatpush1.msra.mxu0 0.0
        %976 = vmatprep.subr.mxu0 0.0
        %977 = vmatpush1.msra.mxu0 0.0
        %978 = vmatprep.subr.mxu0 0.0
        %979 = vmatpush1.msra.mxu0 0.0
        %980 = vmatprep.subr.mxu0 0.0
        %981 = vmatpush1.msra.mxu0 0.0
        %982 = vmatprep.subr.mxu0 0.0
        %983 = vmatpush1.msra.mxu0 0.0
        %984 = vmatprep.subr.mxu0 0.0
        %985 = vmatpush1.msra.mxu0 0.0
        %986 = vmatprep.subr.mxu0 0.0
        %987 = vmatpush1.msra.mxu0 0.0
        %988 = vmatprep.subr.mxu0 0.0
        %989 = vmatpush1.msra.mxu0 0.0
        %990 = vmatprep.subr.mxu0 0.0
        %991 = vmatpush1.msra.mxu0 0.0
        %992 = vmatprep.subr.mxu0 0.0
        %993 = vmatpush1.msra.mxu0 0.0
        %994 = vmatprep.subr.mxu0 0.0
        %995 = vmatpush1.msra.mxu0 0.0
        %996 = vmatprep.subr.mxu0 0.0
        %997 = vmatpush1.msra.mxu0 0.0
        %998 = vmatprep.subr.mxu0 0.0
        %999 = vmatpush1.msra.mxu0 0.0
        %1000 = vmatprep.subr.mxu0 0.0
        %1001 = vmatpush1.msra.mxu0 0.0
        %1002 = vmatprep.subr.mxu0 0.0
        %1003 = vmatpush1.msra.mxu0 0.0
        %1004 = vmatprep.subr.mxu0 0.0
        %1005 = vmatpush1.msra.mxu0 0.0
        %1006 = vmatprep.subr.mxu0 0.0
        %1007 = vmatpush1.msra.mxu0 0.0
        %1008 = vmatprep.subr.mxu0 0.0
        %1009 = vmatpush1.msra.mxu0 0.0
        %1010 = vmatprep.subr.mxu0 0.0
        %1011 = vmatpush1.msra.mxu0 0.0
        %1012 = vmatprep.subr.mxu0 0.0
        %1013 = vmatpush1.msra.mxu0 0.0
        %1014 = vmatprep.subr.mxu0 0.0
        %1015 = vmatpush1.msra.mxu0 0.0
        %1016 = vmatprep.subr.mxu0 0.0
        %1017 = vmatpush1.msra.mxu0 0.0
        %1018 = vmatprep.subr.mxu0 0.0
        %1019 = vmatpush1.msra.mxu0 0.0
        %1020 = vmatprep.subr.mxu0 0.0
        %1021 = vmatpush1.msra.mxu0 0.0
        %1022 = vmatprep.subr.mxu0 0.0
        %1023 = vmatpush1.msra.mxu0 0.0
        %1024 = vmatprep.subr.mxu0 0.0
        %1025 = vmatpush1.msra.mxu0 0.0
        %1026 = vmatprep.subr.mxu0 0.0
        %1027 = vmatpush1.msra.mxu0 0.0
        %1028 = vmatprep.mubr.f32.mxu0 0.0
        %v1029 = vand.u32 %v955, 4294901760
        %v1030 = vsub.f32 %v955, %v1029
        %v1031 = vand.u32 %v1030, 4294901760
        %v1032 = vsub.f32 %v1030, %v1031
        %v1033 = vand.u32 %v1032, 4294901760
        %1034 = vmatmul.mubr.f32.gmra.mrb[0].mxu0 %v1033
        %v1035 = vpop.f32.mrb[0].mxu0
        %v1036 = vadd.f32 0.0, %v1035
        %v1037 = vpop.f32.mrb[0].mxu0
        %1038 = vmatprep.mubr.f32.mxu0 0.0
        %v1039 = vand.u32 %v958, 4294901760
        %v1040 = vsub.f32 %v958, %v1039
        %v1041 = vand.u32 %v1040, 4294901760
        %v1042 = vsub.f32 %v1040, %v1041
        %v1043 = vand.u32 %v1042, 4294901760
        %1044 = vmatmul.mubr.f32.gmra.mrb[0].mxu0 %v1043
        %v1045 = vpop.f32.mrb[0].mxu0
        %v1046 = vadd.f32 0.0, %v1045
        %v1047 = vpop.f32.mrb[0].mxu0
        %1048 = vdwg.mxu0
        %1049 = vmatprep.subr.mxu0 0.0
        %v1050 = vand.u32 %v399, 4294901760
        %v1051 = vsub.f32 %v399, %v1050
        %v1052 = vand.u32 %v1051, 4294901760
        %v1053 = vsub.f32 %v1051, %v1052
        %v1054 = vand.u32 %v1053, 4294901760
        %1055 = vmatpush1.msra.mxu0 %v1054
        %1056 = vmatprep.subr.mxu0 0.0
        %v1057 = vand.u32 %v400, 4294901760
        %v1058 = vsub.f32 %v400, %v1057
        %v1059 = vand.u32 %v1058, 4294901760
        %v1060 = vsub.f32 %v1058, %v1059
        %v1061 = vand.u32 %v1060, 4294901760
        %1062 = vmatpush1.msra.mxu0 %v1061
        %1063 = vmatprep.subr.mxu0 0.0
        %v1064 = vand.u32 %v401, 4294901760
        %v1065 = vsub.f32 %v401, %v1064
        %v1066 = vand.u32 %v1065, 4294901760
        %v1067 = vsub.f32 %v1065, %v1066
        %v1068 = vand.u32 %v1067, 4294901760
        %1069 = vmatpush1.msra.mxu0 %v1068
        %1070 = vmatprep.subr.mxu0 0.0
        %v1071 = vand.u32 %v402, 4294901760
        %v1072 = vsub.f32 %v402, %v1071
        %v1073 = vand.u32 %v1072, 4294901760
        %v1074 = vsub.f32 %v1072, %v1073
        %v1075 = vand.u32 %v1074, 4294901760
        %1076 = vmatpush1.msra.mxu0 %v1075
        %1077 = vmatprep.subr.mxu0 0.0
        %1078 = vmatpush1.msra.mxu0 0.0
        %1079 = vmatprep.subr.mxu0 0.0
        %1080 = vmatpush1.msra.mxu0 0.0
        %1081 = vmatprep.subr.mxu0 0.0
        %1082 = vmatpush1.msra.mxu0 0.0
        %1083 = vmatprep.subr.mxu0 0.0
        %1084 = vmatpush1.msra.mxu0 0.0
        %1085 = vmatprep.subr.mxu0 0.0
        %1086 = vmatpush1.msra.mxu0 0.0
        %1087 = vmatprep.subr.mxu0 0.0
        %1088 = vmatpush1.msra.mxu0 0.0
        %1089 = vmatprep.subr.mxu0 0.0
        %1090 = vmatpush1.msra.mxu0 0.0
        %1091 = vmatprep.subr.mxu0 0.0
        %1092 = vmatpush1.msra.mxu0 0.0
        %1093 = vmatprep.subr.mxu0 0.0
        %1094 = vmatpush1.msra.mxu0 0.0
        %1095 = vmatprep.subr.mxu0 0.0
        %1096 = vmatpush1.msra.mxu0 0.0
        %1097 = vmatprep.subr.mxu0 0.0
        %1098 = vmatpush1.msra.mxu0 0.0
        %1099 = vmatprep.subr.mxu0 0.0
        %1100 = vmatpush1.msra.mxu0 0.0
        %1101 = vmatprep.subr.mxu0 0.0
        %1102 = vmatpush1.msra.mxu0 0.0
        %1103 = vmatprep.subr.mxu0 0.0
        %1104 = vmatpush1.msra.mxu0 0.0
        %1105 = vmatprep.subr.mxu0 0.0
        %1106 = vmatpush1.msra.mxu0 0.0
        %1107 = vmatprep.subr.mxu0 0.0
        %1108 = vmatpush1.msra.mxu0 0.0
        %1109 = vmatprep.subr.mxu0 0.0
        %1110 = vmatpush1.msra.mxu0 0.0
        %1111 = vmatprep.subr.mxu0 0.0
        %1112 = vmatpush1.msra.mxu0 0.0
        %1113 = vmatprep.subr.mxu0 0.0
        %1114 = vmatpush1.msra.mxu0 0.0
        %1115 = vmatprep.subr.mxu0 0.0
        %1116 = vmatpush1.msra.mxu0 0.0
        %1117 = vmatprep.subr.mxu0 0.0
        %1118 = vmatpush1.msra.mxu0 0.0
        %1119 = vmatprep.subr.mxu0 0.0
        %1120 = vmatpush1.msra.mxu0 0.0
        %1121 = vmatprep.subr.mxu0 0.0
        %1122 = vmatpush1.msra.mxu0 0.0
        %1123 = vmatprep.subr.mxu0 0.0
        %1124 = vmatpush1.msra.mxu0 0.0
        %1125 = vmatprep.subr.mxu0 0.0
        %1126 = vmatpush1.msra.mxu0 0.0
        %1127 = vmatprep.subr.mxu0 0.0
        %1128 = vmatpush1.msra.mxu0 0.0
        %1129 = vmatprep.subr.mxu0 0.0
        %1130 = vmatpush1.msra.mxu0 0.0
        %1131 = vmatprep.subr.mxu0 0.0
        %1132 = vmatpush1.msra.mxu0 0.0
        %1133 = vmatprep.mubr.f32.mxu0 0.0
        %v1134 = vand.u32 %v955, 4294901760
        %1135 = vmatmul.mubr.f32.gmra.mrb[0].mxu0 %v1134
        %v1136 = vpop.f32.mrb[0].mxu0
        %v1137 = vadd.f32 %v1036, %v1136
        %v1138 = vpop.f32.mrb[0].mxu0
        %1139 = vmatprep.mubr.f32.mxu0 0.0
        %v1140 = vand.u32 %v958, 4294901760
        %1141 = vmatmul.mubr.f32.gmra.mrb[0].mxu0 %v1140
        %v1142 = vpop.f32.mrb[0].mxu0
        %v1143 = vadd.f32 %v1046, %v1142
        %v1144 = vpop.f32.mrb[0].mxu0
        %1145 = vdwg.mxu0
        %1146 = vmatprep.subr.mxu0 0.0
        %v1147 = vand.u32 %v399, 4294901760
        %v1148 = vsub.f32 %v399, %v1147
        %1149 = vmatpush1.msra.mxu0 %v1148
        %1150 = vmatprep.subr.mxu0 0.0
        %v1151 = vand.u32 %v400, 4294901760
        %v1152 = vsub.f32 %v400, %v1151
        %1153 = vmatpush1.msra.mxu0 %v1152
        %1154 = vmatprep.subr.mxu0 0.0
        %v1155 = vand.u32 %v401, 4294901760
        %v1156 = vsub.f32 %v401, %v1155
        %1157 = vmatpush1.msra.mxu0 %v1156
        %1158 = vmatprep.subr.mxu0 0.0
        %v1159 = vand.u32 %v402, 4294901760
        %v1160 = vsub.f32 %v402, %v1159
        %1161 = vmatpush1.msra.mxu0 %v1160
        %1162 = vmatprep.subr.mxu0 0.0
        %1163 = vmatpush1.msra.mxu0 0.0
        %1164 = vmatprep.subr.mxu0 0.0
        %1165 = vmatpush1.msra.mxu0 0.0
        %1166 = vmatprep.subr.mxu0 0.0
        %1167 = vmatpush1.msra.mxu0 0.0
        %1168 = vmatprep.subr.mxu0 0.0
        %1169 = vmatpush1.msra.mxu0 0.0
        %1170 = vmatprep.subr.mxu0 0.0
        %1171 = vmatpush1.msra.mxu0 0.0
        %1172 = vmatprep.subr.mxu0 0.0
        %1173 = vmatpush1.msra.mxu0 0.0
        %1174 = vmatprep.subr.mxu0 0.0
        %1175 = vmatpush1.msra.mxu0 0.0
        %1176 = vmatprep.subr.mxu0 0.0
        %1177 = vmatpush1.msra.mxu0 0.0
        %1178 = vmatprep.subr.mxu0 0.0
        %1179 = vmatpush1.msra.mxu0 0.0
        %1180 = vmatprep.subr.mxu0 0.0
        %1181 = vmatpush1.msra.mxu0 0.0
        %1182 = vmatprep.subr.mxu0 0.0
        %1183 = vmatpush1.msra.mxu0 0.0
        %1184 = vmatprep.subr.mxu0 0.0
        %1185 = vmatpush1.msra.mxu0 0.0
        %1186 = vmatprep.subr.mxu0 0.0
        %1187 = vmatpush1.msra.mxu0 0.0
        %1188 = vmatprep.subr.mxu0 0.0
        %1189 = vmatpush1.msra.mxu0 0.0
        %1190 = vmatprep.subr.mxu0 0.0
        %1191 = vmatpush1.msra.mxu0 0.0
        %1192 = vmatprep.subr.mxu0 0.0
        %1193 = vmatpush1.msra.mxu0 0.0
        %1194 = vmatprep.subr.mxu0 0.0
        %1195 = vmatpush1.msra.mxu0 0.0
        %1196 = vmatprep.subr.mxu0 0.0
        %1197 = vmatpush1.msra.mxu0 0.0
        %1198 = vmatprep.subr.mxu0 0.0
        %1199 = vmatpush1.msra.mxu0 0.0
        %1200 = vmatprep.subr.mxu0 0.0
        %1201 = vmatpush1.msra.mxu0 0.0
        %1202 = vmatprep.subr.mxu0 0.0
        %1203 = vmatpush1.msra.mxu0 0.0
        %1204 = vmatprep.subr.mxu0 0.0
        %1205 = vmatpush1.msra.mxu0 0.0
        %1206 = vmatprep.subr.mxu0 0.0
        %1207 = vmatpush1.msra.mxu0 0.0
        %1208 = vmatprep.subr.mxu0 0.0
        %1209 = vmatpush1.msra.mxu0 0.0
        %1210 = vmatprep.subr.mxu0 0.0
        %1211 = vmatpush1.msra.mxu0 0.0
        %1212 = vmatprep.subr.mxu0 0.0
        %1213 = vmatpush1.msra.mxu0 0.0
        %1214 = vmatprep.subr.mxu0 0.0
        %1215 = vmatpush1.msra.mxu0 0.0
        %1216 = vmatprep.subr.mxu0 0.0
        %1217 = vmatpush1.msra.mxu0 0.0
        %1218 = vmatprep.mubr.f32.mxu0 0.0
        %v1219 = vand.u32 %v955, 4294901760
        %v1220 = vsub.f32 %v955, %v1219
        %1221 = vmatmul.mubr.f32.gmra.mrb[0].mxu0 %v1220
        %v1222 = vpop.f32.mrb[0].mxu0
        %v1223 = vadd.f32 %v1137, %v1222
        %v1224 = vpop.f32.mrb[0].mxu0
        %1225 = vmatprep.mubr.f32.mxu0 0.0
        %v1226 = vand.u32 %v958, 4294901760
        %v1227 = vsub.f32 %v958, %v1226
        %1228 = vmatmul.mubr.f32.gmra.mrb[0].mxu0 %v1227
        %v1229 = vpop.f32.mrb[0].mxu0
        %v1230 = vadd.f32 %v1143, %v1229
        %v1231 = vpop.f32.mrb[0].mxu0
        %1232 = vdwg.mxu0
        %1233 = vmatprep.subr.mxu0 0.0
        %v1234 = vand.u32 %v399, 4294901760
        %1235 = vmatpush1.msra.mxu0 %v1234
        %1236 = vmatprep.subr.mxu0 0.0
        %v1237 = vand.u32 %v400, 4294901760
        %1238 = vmatpush1.msra.mxu0 %v1237
        %1239 = vmatprep.subr.mxu0 0.0
        %v1240 = vand.u32 %v401, 4294901760
        %1241 = vmatpush1.msra.mxu0 %v1240
        %1242 = vmatprep.subr.mxu0 0.0
        %v1243 = vand.u32 %v402, 4294901760
        %1244 = vmatpush1.msra.mxu0 %v1243
        %1245 = vmatprep.subr.mxu0 0.0
        %1246 = vmatpush1.msra.mxu0 0.0
        %1247 = vmatprep.subr.mxu0 0.0
        %1248 = vmatpush1.msra.mxu0 0.0
        %1249 = vmatprep.subr.mxu0 0.0
        %1250 = vmatpush1.msra.mxu0 0.0
        %1251 = vmatprep.subr.mxu0 0.0
        %1252 = vmatpush1.msra.mxu0 0.0
        %1253 = vmatprep.subr.mxu0 0.0
        %1254 = vmatpush1.msra.mxu0 0.0
        %1255 = vmatprep.subr.mxu0 0.0
        %1256 = vmatpush1.msra.mxu0 0.0
        %1257 = vmatprep.subr.mxu0 0.0
        %1258 = vmatpush1.msra.mxu0 0.0
        %1259 = vmatprep.subr.mxu0 0.0
        %1260 = vmatpush1.msra.mxu0 0.0
        %1261 = vmatprep.subr.mxu0 0.0
        %1262 = vmatpush1.msra.mxu0 0.0
        %1263 = vmatprep.subr.mxu0 0.0
        %1264 = vmatpush1.msra.mxu0 0.0
        %1265 = vmatprep.subr.mxu0 0.0
        %1266 = vmatpush1.msra.mxu0 0.0
        %1267 = vmatprep.subr.mxu0 0.0
        %1268 = vmatpush1.msra.mxu0 0.0
        %1269 = vmatprep.subr.mxu0 0.0
        %1270 = vmatpush1.msra.mxu0 0.0
        %1271 = vmatprep.subr.mxu0 0.0
        %1272 = vmatpush1.msra.mxu0 0.0
        %1273 = vmatprep.subr.mxu0 0.0
        %1274 = vmatpush1.msra.mxu0 0.0
        %1275 = vmatprep.subr.mxu0 0.0
        %1276 = vmatpush1.msra.mxu0 0.0
        %1277 = vmatprep.subr.mxu0 0.0
        %1278 = vmatpush1.msra.mxu0 0.0
        %1279 = vmatprep.subr.mxu0 0.0
        %1280 = vmatpush1.msra.mxu0 0.0
        %1281 = vmatprep.subr.mxu0 0.0
        %1282 = vmatpush1.msra.mxu0 0.0
        %1283 = vmatprep.subr.mxu0 0.0
        %1284 = vmatpush1.msra.mxu0 0.0
        %1285 = vmatprep.subr.mxu0 0.0
        %1286 = vmatpush1.msra.mxu0 0.0
        %1287 = vmatprep.subr.mxu0 0.0
        %1288 = vmatpush1.msra.mxu0 0.0
        %1289 = vmatprep.subr.mxu0 0.0
        %1290 = vmatpush1.msra.mxu0 0.0
        %1291 = vmatprep.subr.mxu0 0.0
        %1292 = vmatpush1.msra.mxu0 0.0
        %1293 = vmatprep.subr.mxu0 0.0
        %1294 = vmatpush1.msra.mxu0 0.0
        %1295 = vmatprep.subr.mxu0 0.0
        %1296 = vmatpush1.msra.mxu0 0.0
        %1297 = vmatprep.subr.mxu0 0.0
        %1298 = vmatpush1.msra.mxu0 0.0
        %1299 = vmatprep.subr.mxu0 0.0
        %1300 = vmatpush1.msra.mxu0 0.0
        %1301 = vmatprep.mubr.f32.mxu0 0.0
        %v1302 = vand.u32 %v955, 4294901760
        %v1303 = vsub.f32 %v955, %v1302
        %v1304 = vand.u32 %v1303, 4294901760
        %1305 = vmatmul.mubr.f32.gmra.mrb[0].mxu0 %v1304
        %v1306 = vpop.f32.mrb[0].mxu0
        %v1307 = vadd.f32 %v1223, %v1306
        %v1308 = vpop.f32.mrb[0].mxu0
        %1309 = vmatprep.mubr.f32.mxu0 0.0
        %v1310 = vand.u32 %v958, 4294901760
        %v1311 = vsub.f32 %v958, %v1310
        %v1312 = vand.u32 %v1311, 4294901760
        %1313 = vmatmul.mubr.f32.gmra.mrb[0].mxu0 %v1312
        %v1314 = vpop.f32.mrb[0].mxu0
        %v1315 = vadd.f32 %v1230, %v1314
        %v1316 = vpop.f32.mrb[0].mxu0
        %1317 = vdwg.mxu0
        %1318 = vmatprep.subr.mxu0 0.0
        %v1319 = vand.u32 %v399, 4294901760
        %v1320 = vsub.f32 %v399, %v1319
        %v1321 = vand.u32 %v1320, 4294901760
        %1322 = vmatpush1.msra.mxu0 %v1321
        %1323 = vmatprep.subr.mxu0 0.0
        %v1324 = vand.u32 %v400, 4294901760
        %v1325 = vsub.f32 %v400, %v1324
        %v1326 = vand.u32 %v1325, 4294901760
        %1327 = vmatpush1.msra.mxu0 %v1326
        %1328 = vmatprep.subr.mxu0 0.0
        %v1329 = vand.u32 %v401, 4294901760
        %v1330 = vsub.f32 %v401, %v1329
        %v1331 = vand.u32 %v1330, 4294901760
        %1332 = vmatpush1.msra.mxu0 %v1331
        %1333 = vmatprep.subr.mxu0 0.0
        %v1334 = vand.u32 %v402, 4294901760
        %v1335 = vsub.f32 %v402, %v1334
        %v1336 = vand.u32 %v1335, 4294901760
        %1337 = vmatpush1.msra.mxu0 %v1336
        %1338 = vmatprep.subr.mxu0 0.0
        %1339 = vmatpush1.msra.mxu0 0.0
        %1340 = vmatprep.subr.mxu0 0.0
        %1341 = vmatpush1.msra.mxu0 0.0
        %1342 = vmatprep.subr.mxu0 0.0
        %1343 = vmatpush1.msra.mxu0 0.0
        %1344 = vmatprep.subr.mxu0 0.0
        %1345 = vmatpush1.msra.mxu0 0.0
        %1346 = vmatprep.subr.mxu0 0.0
        %1347 = vmatpush1.msra.mxu0 0.0
        %1348 = vmatprep.subr.mxu0 0.0
        %1349 = vmatpush1.msra.mxu0 0.0
        %1350 = vmatprep.subr.mxu0 0.0
        %1351 = vmatpush1.msra.mxu0 0.0
        %1352 = vmatprep.subr.mxu0 0.0
        %1353 = vmatpush1.msra.mxu0 0.0
        %1354 = vmatprep.subr.mxu0 0.0
        %1355 = vmatpush1.msra.mxu0 0.0
        %1356 = vmatprep.subr.mxu0 0.0
        %1357 = vmatpush1.msra.mxu0 0.0
        %1358 = vmatprep.subr.mxu0 0.0
        %1359 = vmatpush1.msra.mxu0 0.0
        %1360 = vmatprep.subr.mxu0 0.0
        %1361 = vmatpush1.msra.mxu0 0.0
        %1362 = vmatprep.subr.mxu0 0.0
        %1363 = vmatpush1.msra.mxu0 0.0
        %1364 = vmatprep.subr.mxu0 0.0
        %1365 = vmatpush1.msra.mxu0 0.0
        %1366 = vmatprep.subr.mxu0 0.0
        %1367 = vmatpush1.msra.mxu0 0.0
        %1368 = vmatprep.subr.mxu0 0.0
        %1369 = vmatpush1.msra.mxu0 0.0
        %1370 = vmatprep.subr.mxu0 0.0
        %1371 = vmatpush1.msra.mxu0 0.0
        %1372 = vmatprep.subr.mxu0 0.0
        %1373 = vmatpush1.msra.mxu0 0.0
        %1374 = vmatprep.subr.mxu0 0.0
        %1375 = vmatpush1.msra.mxu0 0.0
        %1376 = vmatprep.subr.mxu0 0.0
        %1377 = vmatpush1.msra.mxu0 0.0
        %1378 = vmatprep.subr.mxu0 0.0
        %1379 = vmatpush1.msra.mxu0 0.0
        %1380 = vmatprep.subr.mxu0 0.0
        %1381 = vmatpush1.msra.mxu0 0.0
        %1382 = vmatprep.subr.mxu0 0.0
        %1383 = vmatpush1.msra.mxu0 0.0
        %1384 = vmatprep.subr.mxu0 0.0
        %1385 = vmatpush1.msra.mxu0 0.0
        %1386 = vmatprep.subr.mxu0 0.0
        %1387 = vmatpush1.msra.mxu0 0.0
        %1388 = vmatprep.subr.mxu0 0.0
        %1389 = vmatpush1.msra.mxu0 0.0
        %1390 = vmatprep.subr.mxu0 0.0
        %1391 = vmatpush1.msra.mxu0 0.0
        %1392 = vmatprep.subr.mxu0 0.0
        %1393 = vmatpush1.msra.mxu0 0.0
        %1394 = vmatprep.mubr.f32.mxu0 0.0
        %v1395 = vand.u32 %v955, 4294901760
        %1396 = vmatmul.mubr.f32.gmra.mrb[0].mxu0 %v1395
        %v1397 = vpop.f32.mrb[0].mxu0
        %v1398 = vadd.f32 %v1307, %v1397
        %v1399 = vpop.f32.mrb[0].mxu0
        %1400 = vmatprep.mubr.f32.mxu0 0.0
        %v1401 = vand.u32 %v958, 4294901760
        %1402 = vmatmul.mubr.f32.gmra.mrb[0].mxu0 %v1401
        %v1403 = vpop.f32.mrb[0].mxu0
        %v1404 = vadd.f32 %v1315, %v1403
        %v1405 = vpop.f32.mrb[0].mxu0
        %1406 = vdwg.mxu0
        %1407 = vmatprep.subr.mxu0 0.0
        %v1408 = vand.u32 %v399, 4294901760
        %1409 = vmatpush1.msra.mxu0 %v1408
        %1410 = vmatprep.subr.mxu0 0.0
        %v1411 = vand.u32 %v400, 4294901760
        %1412 = vmatpush1.msra.mxu0 %v1411
        %1413 = vmatprep.subr.mxu0 0.0
        %v1414 = vand.u32 %v401, 4294901760
        %1415 = vmatpush1.msra.mxu0 %v1414
        %1416 = vmatprep.subr.mxu0 0.0
        %v1417 = vand.u32 %v402, 4294901760
        %1418 = vmatpush1.msra.mxu0 %v1417
        %1419 = vmatprep.subr.mxu0 0.0
        %1420 = vmatpush1.msra.mxu0 0.0
        %1421 = vmatprep.subr.mxu0 0.0
        %1422 = vmatpush1.msra.mxu0 0.0
        %1423 = vmatprep.subr.mxu0 0.0
        %1424 = vmatpush1.msra.mxu0 0.0
        %1425 = vmatprep.subr.mxu0 0.0
        %1426 = vmatpush1.msra.mxu0 0.0
        %1427 = vmatprep.subr.mxu0 0.0
        %1428 = vmatpush1.msra.mxu0 0.0
        %1429 = vmatprep.subr.mxu0 0.0
        %1430 = vmatpush1.msra.mxu0 0.0
        %1431 = vmatprep.subr.mxu0 0.0
        %1432 = vmatpush1.msra.mxu0 0.0
        %1433 = vmatprep.subr.mxu0 0.0
        %1434 = vmatpush1.msra.mxu0 0.0
        %1435 = vmatprep.subr.mxu0 0.0
        %1436 = vmatpush1.msra.mxu0 0.0
        %1437 = vmatprep.subr.mxu0 0.0
        %1438 = vmatpush1.msra.mxu0 0.0
        %1439 = vmatprep.subr.mxu0 0.0
        %1440 = vmatpush1.msra.mxu0 0.0
        %1441 = vmatprep.subr.mxu0 0.0
        %1442 = vmatpush1.msra.mxu0 0.0
        %1443 = vmatprep.subr.mxu0 0.0
        %1444 = vmatpush1.msra.mxu0 0.0
        %1445 = vmatprep.subr.mxu0 0.0
        %1446 = vmatpush1.msra.mxu0 0.0
        %1447 = vmatprep.subr.mxu0 0.0
        %1448 = vmatpush1.msra.mxu0 0.0
        %1449 = vmatprep.subr.mxu0 0.0
        %1450 = vmatpush1.msra.mxu0 0.0
        %1451 = vmatprep.subr.mxu0 0.0
        %1452 = vmatpush1.msra.mxu0 0.0
        %1453 = vmatprep.subr.mxu0 0.0
        %1454 = vmatpush1.msra.mxu0 0.0
        %1455 = vmatprep.subr.mxu0 0.0
        %1456 = vmatpush1.msra.mxu0 0.0
        %1457 = vmatprep.subr.mxu0 0.0
        %1458 = vmatpush1.msra.mxu0 0.0
        %1459 = vmatprep.subr.mxu0 0.0
        %1460 = vmatpush1.msra.mxu0 0.0
        %1461 = vmatprep.subr.mxu0 0.0
        %1462 = vmatpush1.msra.mxu0 0.0
        %1463 = vmatprep.subr.mxu0 0.0
        %1464 = vmatpush1.msra.mxu0 0.0
        %1465 = vmatprep.subr.mxu0 0.0
        %1466 = vmatpush1.msra.mxu0 0.0
        %1467 = vmatprep.subr.mxu0 0.0
        %1468 = vmatpush1.msra.mxu0 0.0
        %1469 = vmatprep.subr.mxu0 0.0
        %1470 = vmatpush1.msra.mxu0 0.0
        %1471 = vmatprep.subr.mxu0 0.0
        %1472 = vmatpush1.msra.mxu0 0.0
        %1473 = vmatprep.subr.mxu0 0.0
        %1474 = vmatpush1.msra.mxu0 0.0
        %1475 = vmatprep.mubr.f32.mxu0 0.0
        %v1476 = vand.u32 %v955, 4294901760
        %1477 = vmatmul.mubr.f32.gmra.mrb[0].mxu0 %v1476
        %v1478 = vpop.f32.mrb[0].mxu0
        %v1479 = vadd.f32 %v1398, %v1478
        %v1480 = vpop.f32.mrb[0].mxu0
        %1481 = vmatprep.mubr.f32.mxu0 0.0
        %v1482 = vand.u32 %v958, 4294901760
        %1483 = vmatmul.mubr.f32.gmra.mrb[0].mxu0 %v1482
        %v1484 = vpop.f32.mrb[0].mxu0
        %v1485 = vadd.f32 %v1404, %v1484
        %v1486 = vpop.f32.mrb[0].mxu0
        %1487 = vdwg.mxu0
        %v1489 = vsel %vm419, %v391, 0
        %v1492 = vsel %vm419, %v392, 0
        %1494 = vmatprep.subr.mxu0 0.0
        %v1495 = vand.u32 %v403, 4294901760
        %1496 = vmatpush1.msra.mxu0 %v1495
        %1497 = vmatprep.subr.mxu0 0.0
        %v1498 = vand.u32 %v404, 4294901760
        %1499 = vmatpush1.msra.mxu0 %v1498
        %1500 = vmatprep.subr.mxu0 0.0
        %v1501 = vand.u32 %v405, 4294901760
        %1502 = vmatpush1.msra.mxu0 %v1501
        %1503 = vmatprep.subr.mxu0 0.0
        %v1504 = vand.u32 %v406, 4294901760
        %1505 = vmatpush1.msra.mxu0 %v1504
        %1506 = vmatprep.subr.mxu0 0.0
        %1507 = vmatpush1.msra.mxu0 0.0
        %1508 = vmatprep.subr.mxu0 0.0
        %1509 = vmatpush1.msra.mxu0 0.0
        %1510 = vmatprep.subr.mxu0 0.0
        %1511 = vmatpush1.msra.mxu0 0.0
        %1512 = vmatprep.subr.mxu0 0.0
        %1513 = vmatpush1.msra.mxu0 0.0
        %1514 = vmatprep.subr.mxu0 0.0
        %1515 = vmatpush1.msra.mxu0 0.0
        %1516 = vmatprep.subr.mxu0 0.0
        %1517 = vmatpush1.msra.mxu0 0.0
        %1518 = vmatprep.subr.mxu0 0.0
        %1519 = vmatpush1.msra.mxu0 0.0
        %1520 = vmatprep.subr.mxu0 0.0
        %1521 = vmatpush1.msra.mxu0 0.0
        %1522 = vmatprep.subr.mxu0 0.0
        %1523 = vmatpush1.msra.mxu0 0.0
        %1524 = vmatprep.subr.mxu0 0.0
        %1525 = vmatpush1.msra.mxu0 0.0
        %1526 = vmatprep.subr.mxu0 0.0
        %1527 = vmatpush1.msra.mxu0 0.0
        %1528 = vmatprep.subr.mxu0 0.0
        %1529 = vmatpush1.msra.mxu0 0.0
        %1530 = vmatprep.subr.mxu0 0.0
        %1531 = vmatpush1.msra.mxu0 0.0
        %1532 = vmatprep.subr.mxu0 0.0
        %1533 = vmatpush1.msra.mxu0 0.0
        %1534 = vmatprep.subr.mxu0 0.0
        %1535 = vmatpush1.msra.mxu0 0.0
        %1536 = vmatprep.subr.mxu0 0.0
        %1537 = vmatpush1.msra.mxu0 0.0
        %1538 = vmatprep.subr.mxu0 0.0
        %1539 = vmatpush1.msra.mxu0 0.0
        %1540 = vmatprep.subr.mxu0 0.0
        %1541 = vmatpush1.msra.mxu0 0.0
        %1542 = vmatprep.subr.mxu0 0.0
        %1543 = vmatpush1.msra.mxu0 0.0
        %1544 = vmatprep.subr.mxu0 0.0
        %1545 = vmatpush1.msra.mxu0 0.0
        %1546 = vmatprep.subr.mxu0 0.0
        %1547 = vmatpush1.msra.mxu0 0.0
        %1548 = vmatprep.subr.mxu0 0.0
        %1549 = vmatpush1.msra.mxu0 0.0
        %1550 = vmatprep.subr.mxu0 0.0
        %1551 = vmatpush1.msra.mxu0 0.0
        %1552 = vmatprep.subr.mxu0 0.0
        %1553 = vmatpush1.msra.mxu0 0.0
        %1554 = vmatprep.subr.mxu0 0.0
        %1555 = vmatpush1.msra.mxu0 0.0
        %1556 = vmatprep.subr.mxu0 0.0
        %1557 = vmatpush1.msra.mxu0 0.0
        %1558 = vmatprep.subr.mxu0 0.0
        %1559 = vmatpush1.msra.mxu0 0.0
        %1560 = vmatprep.subr.mxu0 0.0
        %1561 = vmatpush1.msra.mxu0 0.0
        %1562 = vmatprep.mubr.f32.mxu0 0.0
        %v1563 = vand.u32 %v1489, 4294901760
        %v1564 = vsub.f32 %v1489, %v1563
        %v1565 = vand.u32 %v1564, 4294901760
        %v1566 = vsub.f32 %v1564, %v1565
        %v1567 = vand.u32 %v1566, 4294901760
        %1568 = vmatmul.mubr.f32.gmra.mrb[0].mxu0 %v1567
        %v1569 = vpop.f32.mrb[0].mxu0
        %v1570 = vadd.f32 0.0, %v1569
        %v1571 = vpop.f32.mrb[0].mxu0
        %1572 = vmatprep.mubr.f32.mxu0 0.0
        %v1573 = vand.u32 %v1492, 4294901760
        %v1574 = vsub.f32 %v1492, %v1573
        %v1575 = vand.u32 %v1574, 4294901760
        %v1576 = vsub.f32 %v1574, %v1575
        %v1577 = vand.u32 %v1576, 4294901760
        %1578 = vmatmul.mubr.f32.gmra.mrb[0].mxu0 %v1577
        %v1579 = vpop.f32.mrb[0].mxu0
        %v1580 = vadd.f32 0.0, %v1579
        %v1581 = vpop.f32.mrb[0].mxu0
        %1582 = vdwg.mxu0
        %1583 = vmatprep.subr.mxu0 0.0
        %v1584 = vand.u32 %v403, 4294901760
        %v1585 = vsub.f32 %v403, %v1584
        %v1586 = vand.u32 %v1585, 4294901760
        %v1587 = vsub.f32 %v1585, %v1586
        %v1588 = vand.u32 %v1587, 4294901760
        %1589 = vmatpush1.msra.mxu0 %v1588
        %1590 = vmatprep.subr.mxu0 0.0
        %v1591 = vand.u32 %v404, 4294901760
        %v1592 = vsub.f32 %v404, %v1591
        %v1593 = vand.u32 %v1592, 4294901760
        %v1594 = vsub.f32 %v1592, %v1593
        %v1595 = vand.u32 %v1594, 4294901760
        %1596 = vmatpush1.msra.mxu0 %v1595
        %1597 = vmatprep.subr.mxu0 0.0
        %v1598 = vand.u32 %v405, 4294901760
        %v1599 = vsub.f32 %v405, %v1598
        %v1600 = vand.u32 %v1599, 4294901760
        %v1601 = vsub.f32 %v1599, %v1600
        %v1602 = vand.u32 %v1601, 4294901760
        %1603 = vmatpush1.msra.mxu0 %v1602
        %1604 = vmatprep.subr.mxu0 0.0
        %v1605 = vand.u32 %v406, 4294901760
        %v1606 = vsub.f32 %v406, %v1605
        %v1607 = vand.u32 %v1606, 4294901760
        %v1608 = vsub.f32 %v1606, %v1607
        %v1609 = vand.u32 %v1608, 4294901760
        %1610 = vmatpush1.msra.mxu0 %v1609
        %1611 = vmatprep.subr.mxu0 0.0
        %1612 = vmatpush1.msra.mxu0 0.0
        %1613 = vmatprep.subr.mxu0 0.0
        %1614 = vmatpush1.msra.mxu0 0.0
        %1615 = vmatprep.subr.mxu0 0.0
        %1616 = vmatpush1.msra.mxu0 0.0
        %1617 = vmatprep.subr.mxu0 0.0
        %1618 = vmatpush1.msra.mxu0 0.0
        %1619 = vmatprep.subr.mxu0 0.0
        %1620 = vmatpush1.msra.mxu0 0.0
        %1621 = vmatprep.subr.mxu0 0.0
        %1622 = vmatpush1.msra.mxu0 0.0
        %1623 = vmatprep.subr.mxu0 0.0
        %1624 = vmatpush1.msra.mxu0 0.0
        %1625 = vmatprep.subr.mxu0 0.0
        %1626 = vmatpush1.msra.mxu0 0.0
        %1627 = vmatprep.subr.mxu0 0.0
        %1628 = vmatpush1.msra.mxu0 0.0
        %1629 = vmatprep.subr.mxu0 0.0
        %1630 = vmatpush1.msra.mxu0 0.0
        %1631 = vmatprep.subr.mxu0 0.0
        %1632 = vmatpush1.msra.mxu0 0.0
        %1633 = vmatprep.subr.mxu0 0.0
        %1634 = vmatpush1.msra.mxu0 0.0
        %1635 = vmatprep.subr.mxu0 0.0
        %1636 = vmatpush1.msra.mxu0 0.0
        %1637 = vmatprep.subr.mxu0 0.0
        %1638 = vmatpush1.msra.mxu0 0.0
        %1639 = vmatprep.subr.mxu0 0.0
        %1640 = vmatpush1.msra.mxu0 0.0
        %1641 = vmatprep.subr.mxu0 0.0
        %1642 = vmatpush1.msra.mxu0 0.0
        %1643 = vmatprep.subr.mxu0 0.0
        %1644 = vmatpush1.msra.mxu0 0.0
        %1645 = vmatprep.subr.mxu0 0.0
        %1646 = vmatpush1.msra.mxu0 0.0
        %1647 = vmatprep.subr.mxu0 0.0
        %1648 = vmatpush1.msra.mxu0 0.0
        %1649 = vmatprep.subr.mxu0 0.0
        %1650 = vmatpush1.msra.mxu0 0.0
        %1651 = vmatprep.subr.mxu0 0.0
        %1652 = vmatpush1.msra.mxu0 0.0
        %1653 = vmatprep.subr.mxu0 0.0
        %1654 = vmatpush1.msra.mxu0 0.0
        %1655 = vmatprep.subr.mxu0 0.0
        %1656 = vmatpush1.msra.mxu0 0.0
        %1657 = vmatprep.subr.mxu0 0.0
        %1658 = vmatpush1.msra.mxu0 0.0
        %1659 = vmatprep.subr.mxu0 0.0
        %1660 = vmatpush1.msra.mxu0 0.0
        %1661 = vmatprep.subr.mxu0 0.0
        %1662 = vmatpush1.msra.mxu0 0.0
        %1663 = vmatprep.subr.mxu0 0.0
        %1664 = vmatpush1.msra.mxu0 0.0
        %1665 = vmatprep.subr.mxu0 0.0
        %1666 = vmatpush1.msra.mxu0 0.0
        %1667 = vmatprep.mubr.f32.mxu0 0.0
        %v1668 = vand.u32 %v1489, 4294901760
        %1669 = vmatmul.mubr.f32.gmra.mrb[0].mxu0 %v1668
        %v1670 = vpop.f32.mrb[0].mxu0
        %v1671 = vadd.f32 %v1570, %v1670
        %v1672 = vpop.f32.mrb[0].mxu0
        %1673 = vmatprep.mubr.f32.mxu0 0.0
        %v1674 = vand.u32 %v1492, 4294901760
        %1675 = vmatmul.mubr.f32.gmra.mrb[0].mxu0 %v1674
        %v1676 = vpop.f32.mrb[0].mxu0
        %v1677 = vadd.f32 %v1580, %v1676
        %v1678 = vpop.f32.mrb[0].mxu0
        %1679 = vdwg.mxu0
        %1680 = vmatprep.subr.mxu0 0.0
        %v1681 = vand.u32 %v403, 4294901760
        %v1682 = vsub.f32 %v403, %v1681
        %1683 = vmatpush1.msra.mxu0 %v1682
        %1684 = vmatprep.subr.mxu0 0.0
        %v1685 = vand.u32 %v404, 4294901760
        %v1686 = vsub.f32 %v404, %v1685
        %1687 = vmatpush1.msra.mxu0 %v1686
        %1688 = vmatprep.subr.mxu0 0.0
        %v1689 = vand.u32 %v405, 4294901760
        %v1690 = vsub.f32 %v405, %v1689
        %1691 = vmatpush1.msra.mxu0 %v1690
        %1692 = vmatprep.subr.mxu0 0.0
        %v1693 = vand.u32 %v406, 4294901760
        %v1694 = vsub.f32 %v406, %v1693
        %1695 = vmatpush1.msra.mxu0 %v1694
        %1696 = vmatprep.subr.mxu0 0.0
        %1697 = vmatpush1.msra.mxu0 0.0
        %1698 = vmatprep.subr.mxu0 0.0
        %1699 = vmatpush1.msra.mxu0 0.0
        %1700 = vmatprep.subr.mxu0 0.0
        %1701 = vmatpush1.msra.mxu0 0.0
        %1702 = vmatprep.subr.mxu0 0.0
        %1703 = vmatpush1.msra.mxu0 0.0
        %1704 = vmatprep.subr.mxu0 0.0
        %1705 = vmatpush1.msra.mxu0 0.0
        %1706 = vmatprep.subr.mxu0 0.0
        %1707 = vmatpush1.msra.mxu0 0.0
        %1708 = vmatprep.subr.mxu0 0.0
        %1709 = vmatpush1.msra.mxu0 0.0
        %1710 = vmatprep.subr.mxu0 0.0
        %1711 = vmatpush1.msra.mxu0 0.0
        %1712 = vmatprep.subr.mxu0 0.0
        %1713 = vmatpush1.msra.mxu0 0.0
        %1714 = vmatprep.subr.mxu0 0.0
        %1715 = vmatpush1.msra.mxu0 0.0
        %1716 = vmatprep.subr.mxu0 0.0
        %1717 = vmatpush1.msra.mxu0 0.0
        %1718 = vmatprep.subr.mxu0 0.0
        %1719 = vmatpush1.msra.mxu0 0.0
        %1720 = vmatprep.subr.mxu0 0.0
        %1721 = vmatpush1.msra.mxu0 0.0
        %1722 = vmatprep.subr.mxu0 0.0
        %1723 = vmatpush1.msra.mxu0 0.0
        %1724 = vmatprep.subr.mxu0 0.0
        %1725 = vmatpush1.msra.mxu0 0.0
        %1726 = vmatprep.subr.mxu0 0.0
        %1727 = vmatpush1.msra.mxu0 0.0
        %1728 = vmatprep.subr.mxu0 0.0
        %1729 = vmatpush1.msra.mxu0 0.0
        %1730 = vmatprep.subr.mxu0 0.0
        %1731 = vmatpush1.msra.mxu0 0.0
        %1732 = vmatprep.subr.mxu0 0.0
        %1733 = vmatpush1.msra.mxu0 0.0
        %1734 = vmatprep.subr.mxu0 0.0
        %1735 = vmatpush1.msra.mxu0 0.0
        %1736 = vmatprep.subr.mxu0 0.0
        %1737 = vmatpush1.msra.mxu0 0.0
        %1738 = vmatprep.subr.mxu0 0.0
        %1739 = vmatpush1.msra.mxu0 0.0
        %1740 = vmatprep.subr.mxu0 0.0
        %1741 = vmatpush1.msra.mxu0 0.0
        %1742 = vmatprep.subr.mxu0 0.0
        %1743 = vmatpush1.msra.mxu0 0.0
        %1744 = vmatprep.subr.mxu0 0.0
        %1745 = vmatpush1.msra.mxu0 0.0
        %1746 = vmatprep.subr.mxu0 0.0
        %1747 = vmatpush1.msra.mxu0 0.0
        %1748 = vmatprep.subr.mxu0 0.0
        %1749 = vmatpush1.msra.mxu0 0.0
        %1750 = vmatprep.subr.mxu0 0.0
        %1751 = vmatpush1.msra.mxu0 0.0
        %1752 = vmatprep.mubr.f32.mxu0 0.0
        %v1753 = vand.u32 %v1489, 4294901760
        %v1754 = vsub.f32 %v1489, %v1753
        %1755 = vmatmul.mubr.f32.gmra.mrb[0].mxu0 %v1754
        %v1756 = vpop.f32.mrb[0].mxu0
        %v1757 = vadd.f32 %v1671, %v1756
        %v1758 = vpop.f32.mrb[0].mxu0
        %1759 = vmatprep.mubr.f32.mxu0 0.0
        %v1760 = vand.u32 %v1492, 4294901760
        %v1761 = vsub.f32 %v1492, %v1760
        %1762 = vmatmul.mubr.f32.gmra.mrb[0].mxu0 %v1761
        %v1763 = vpop.f32.mrb[0].mxu0
        %v1764 = vadd.f32 %v1677, %v1763
        %v1765 = vpop.f32.mrb[0].mxu0
        %1766 = vdwg.mxu0
        %1767 = vmatprep.subr.mxu0 0.0
        %v1768 = vand.u32 %v403, 4294901760
        %1769 = vmatpush1.msra.mxu0 %v1768
        %1770 = vmatprep.subr.mxu0 0.0
        %v1771 = vand.u32 %v404, 4294901760
        %1772 = vmatpush1.msra.mxu0 %v1771
        %1773 = vmatprep.subr.mxu0 0.0
        %v1774 = vand.u32 %v405, 4294901760
        %1775 = vmatpush1.msra.mxu0 %v1774
        %1776 = vmatprep.subr.mxu0 0.0
        %v1777 = vand.u32 %v406, 4294901760
        %1778 = vmatpush1.msra.mxu0 %v1777
        %1779 = vmatprep.subr.mxu0 0.0
        %1780 = vmatpush1.msra.mxu0 0.0
        %1781 = vmatprep.subr.mxu0 0.0
        %1782 = vmatpush1.msra.mxu0 0.0
        %1783 = vmatprep.subr.mxu0 0.0
        %1784 = vmatpush1.msra.mxu0 0.0
        %1785 = vmatprep.subr.mxu0 0.0
        %1786 = vmatpush1.msra.mxu0 0.0
        %1787 = vmatprep.subr.mxu0 0.0
        %1788 = vmatpush1.msra.mxu0 0.0
        %1789 = vmatprep.subr.mxu0 0.0
        %1790 = vmatpush1.msra.mxu0 0.0
        %1791 = vmatprep.subr.mxu0 0.0
        %1792 = vmatpush1.msra.mxu0 0.0
        %1793 = vmatprep.subr.mxu0 0.0
        %1794 = vmatpush1.msra.mxu0 0.0
        %1795 = vmatprep.subr.mxu0 0.0
        %1796 = vmatpush1.msra.mxu0 0.0
        %1797 = vmatprep.subr.mxu0 0.0
        %1798 = vmatpush1.msra.mxu0 0.0
        %1799 = vmatprep.subr.mxu0 0.0
        %1800 = vmatpush1.msra.mxu0 0.0
        %1801 = vmatprep.subr.mxu0 0.0
        %1802 = vmatpush1.msra.mxu0 0.0
        %1803 = vmatprep.subr.mxu0 0.0
        %1804 = vmatpush1.msra.mxu0 0.0
        %1805 = vmatprep.subr.mxu0 0.0
        %1806 = vmatpush1.msra.mxu0 0.0
        %1807 = vmatprep.subr.mxu0 0.0
        %1808 = vmatpush1.msra.mxu0 0.0
        %1809 = vmatprep.subr.mxu0 0.0
        %1810 = vmatpush1.msra.mxu0 0.0
        %1811 = vmatprep.subr.mxu0 0.0
        %1812 = vmatpush1.msra.mxu0 0.0
        %1813 = vmatprep.subr.mxu0 0.0
        %1814 = vmatpush1.msra.mxu0 0.0
        %1815 = vmatprep.subr.mxu0 0.0
        %1816 = vmatpush1.msra.mxu0 0.0
        %1817 = vmatprep.subr.mxu0 0.0
        %1818 = vmatpush1.msra.mxu0 0.0
        %1819 = vmatprep.subr.mxu0 0.0
        %1820 = vmatpush1.msra.mxu0 0.0
        %1821 = vmatprep.subr.mxu0 0.0
        %1822 = vmatpush1.msra.mxu0 0.0
        %1823 = vmatprep.subr.mxu0 0.0
        %1824 = vmatpush1.msra.mxu0 0.0
        %1825 = vmatprep.subr.mxu0 0.0
        %1826 = vmatpush1.msra.mxu0 0.0
        %1827 = vmatprep.subr.mxu0 0.0
        %1828 = vmatpush1.msra.mxu0 0.0
        %1829 = vmatprep.subr.mxu0 0.0
        %1830 = vmatpush1.msra.mxu0 0.0
        %1831 = vmatprep.subr.mxu0 0.0
        %1832 = vmatpush1.msra.mxu0 0.0
        %1833 = vmatprep.subr.mxu0 0.0
        %1834 = vmatpush1.msra.mxu0 0.0
        %1835 = vmatprep.mubr.f32.mxu0 0.0
        %v1836 = vand.u32 %v1489, 4294901760
        %v1837 = vsub.f32 %v1489, %v1836
        %v1838 = vand.u32 %v1837, 4294901760
        %1839 = vmatmul.mubr.f32.gmra.mrb[0].mxu0 %v1838
        %v1840 = vpop.f32.mrb[0].mxu0
        %v1841 = vadd.f32 %v1757, %v1840
        %v1842 = vpop.f32.mrb[0].mxu0
        %1843 = vmatprep.mubr.f32.mxu0 0.0
        %v1844 = vand.u32 %v1492, 4294901760
        %v1845 = vsub.f32 %v1492, %v1844
        %v1846 = vand.u32 %v1845, 4294901760
        %1847 = vmatmul.mubr.f32.gmra.mrb[0].mxu0 %v1846
        %v1848 = vpop.f32.mrb[0].mxu0
        %v1849 = vadd.f32 %v1764, %v1848
        %v1850 = vpop.f32.mrb[0].mxu0
        %1851 = vdwg.mxu0
        %1852 = vmatprep.subr.mxu0 0.0
        %v1853 = vand.u32 %v403, 4294901760
        %v1854 = vsub.f32 %v403, %v1853
        %v1855 = vand.u32 %v1854, 4294901760
        %1856 = vmatpush1.msra.mxu0 %v1855
        %1857 = vmatprep.subr.mxu0 0.0
        %v1858 = vand.u32 %v404, 4294901760
        %v1859 = vsub.f32 %v404, %v1858
        %v1860 = vand.u32 %v1859, 4294901760
        %1861 = vmatpush1.msra.mxu0 %v1860
        %1862 = vmatprep.subr.mxu0 0.0
        %v1863 = vand.u32 %v405, 4294901760
        %v1864 = vsub.f32 %v405, %v1863
        %v1865 = vand.u32 %v1864, 4294901760
        %1866 = vmatpush1.msra.mxu0 %v1865
        %1867 = vmatprep.subr.mxu0 0.0
        %v1868 = vand.u32 %v406, 4294901760
        %v1869 = vsub.f32 %v406, %v1868
        %v1870 = vand.u32 %v1869, 4294901760
        %1871 = vmatpush1.msra.mxu0 %v1870
        %1872 = vmatprep.subr.mxu0 0.0
        %1873 = vmatpush1.msra.mxu0 0.0
        %1874 = vmatprep.subr.mxu0 0.0
        %1875 = vmatpush1.msra.mxu0 0.0
        %1876 = vmatprep.subr.mxu0 0.0
        %1877 = vmatpush1.msra.mxu0 0.0
        %1878 = vmatprep.subr.mxu0 0.0
        %1879 = vmatpush1.msra.mxu0 0.0
        %1880 = vmatprep.subr.mxu0 0.0
        %1881 = vmatpush1.msra.mxu0 0.0
        %1882 = vmatprep.subr.mxu0 0.0
        %1883 = vmatpush1.msra.mxu0 0.0
        %1884 = vmatprep.subr.mxu0 0.0
        %1885 = vmatpush1.msra.mxu0 0.0
        %1886 = vmatprep.subr.mxu0 0.0
        %1887 = vmatpush1.msra.mxu0 0.0
        %1888 = vmatprep.subr.mxu0 0.0
        %1889 = vmatpush1.msra.mxu0 0.0
        %1890 = vmatprep.subr.mxu0 0.0
        %1891 = vmatpush1.msra.mxu0 0.0
        %1892 = vmatprep.subr.mxu0 0.0
        %1893 = vmatpush1.msra.mxu0 0.0
        %1894 = vmatprep.subr.mxu0 0.0
        %1895 = vmatpush1.msra.mxu0 0.0
        %1896 = vmatprep.subr.mxu0 0.0
        %1897 = vmatpush1.msra.mxu0 0.0
        %1898 = vmatprep.subr.mxu0 0.0
        %1899 = vmatpush1.msra.mxu0 0.0
        %1900 = vmatprep.subr.mxu0 0.0
        %1901 = vmatpush1.msra.mxu0 0.0
        %1902 = vmatprep.subr.mxu0 0.0
        %1903 = vmatpush1.msra.mxu0 0.0
        %1904 = vmatprep.subr.mxu0 0.0
        %1905 = vmatpush1.msra.mxu0 0.0
        %1906 = vmatprep.subr.mxu0 0.0
        %1907 = vmatpush1.msra.mxu0 0.0
        %1908 = vmatprep.subr.mxu0 0.0
        %1909 = vmatpush1.msra.mxu0 0.0
        %1910 = vmatprep.subr.mxu0 0.0
        %1911 = vmatpush1.msra.mxu0 0.0
        %1912 = vmatprep.subr.mxu0 0.0
        %1913 = vmatpush1.msra.mxu0 0.0
        %1914 = vmatprep.subr.mxu0 0.0
        %1915 = vmatpush1.msra.mxu0 0.0
        %1916 = vmatprep.subr.mxu0 0.0
        %1917 = vmatpush1.msra.mxu0 0.0
        %1918 = vmatprep.subr.mxu0 0.0
        %1919 = vmatpush1.msra.mxu0 0.0
        %1920 = vmatprep.subr.mxu0 0.0
        %1921 = vmatpush1.msra.mxu0 0.0
        %1922 = vmatprep.subr.mxu0 0.0
        %1923 = vmatpush1.msra.mxu0 0.0
        %1924 = vmatprep.subr.mxu0 0.0
        %1925 = vmatpush1.msra.mxu0 0.0
        %1926 = vmatprep.subr.mxu0 0.0
        %1927 = vmatpush1.msra.mxu0 0.0
        %1928 = vmatprep.mubr.f32.mxu0 0.0
        %v1929 = vand.u32 %v1489, 4294901760
        %1930 = vmatmul.mubr.f32.gmra.mrb[0].mxu0 %v1929
        %v1931 = vpop.f32.mrb[0].mxu0
        %v1932 = vadd.f32 %v1841, %v1931
        %v1933 = vpop.f32.mrb[0].mxu0
        %1934 = vmatprep.mubr.f32.mxu0 0.0
        %v1935 = vand.u32 %v1492, 4294901760
        %1936 = vmatmul.mubr.f32.gmra.mrb[0].mxu0 %v1935
        %v1937 = vpop.f32.mrb[0].mxu0
        %v1938 = vadd.f32 %v1849, %v1937
        %v1939 = vpop.f32.mrb[0].mxu0
        %1940 = vdwg.mxu0
        %1941 = vmatprep.subr.mxu0 0.0
        %v1942 = vand.u32 %v403, 4294901760
        %1943 = vmatpush1.msra.mxu0 %v1942
        %1944 = vmatprep.subr.mxu0 0.0
        %v1945 = vand.u32 %v404, 4294901760
        %1946 = vmatpush1.msra.mxu0 %v1945
        %1947 = vmatprep.subr.mxu0 0.0
        %v1948 = vand.u32 %v405, 4294901760
        %1949 = vmatpush1.msra.mxu0 %v1948
        %1950 = vmatprep.subr.mxu0 0.0
        %v1951 = vand.u32 %v406, 4294901760
        %1952 = vmatpush1.msra.mxu0 %v1951
        %1953 = vmatprep.subr.mxu0 0.0
        %1954 = vmatpush1.msra.mxu0 0.0
        %1955 = vmatprep.subr.mxu0 0.0
        %1956 = vmatpush1.msra.mxu0 0.0
        %1957 = vmatprep.subr.mxu0 0.0
        %1958 = vmatpush1.msra.mxu0 0.0
        %1959 = vmatprep.subr.mxu0 0.0
        %1960 = vmatpush1.msra.mxu0 0.0
        %1961 = vmatprep.subr.mxu0 0.0
        %1962 = vmatpush1.msra.mxu0 0.0
        %1963 = vmatprep.subr.mxu0 0.0
        %1964 = vmatpush1.msra.mxu0 0.0
        %1965 = vmatprep.subr.mxu0 0.0
        %1966 = vmatpush1.msra.mxu0 0.0
        %1967 = vmatprep.subr.mxu0 0.0
        %1968 = vmatpush1.msra.mxu0 0.0
        %1969 = vmatprep.subr.mxu0 0.0
        %1970 = vmatpush1.msra.mxu0 0.0
        %1971 = vmatprep.subr.mxu0 0.0
        %1972 = vmatpush1.msra.mxu0 0.0
        %1973 = vmatprep.subr.mxu0 0.0
        %1974 = vmatpush1.msra.mxu0 0.0
        %1975 = vmatprep.subr.mxu0 0.0
        %1976 = vmatpush1.msra.mxu0 0.0
        %1977 = vmatprep.subr.mxu0 0.0
        %1978 = vmatpush1.msra.mxu0 0.0
        %1979 = vmatprep.subr.mxu0 0.0
        %1980 = vmatpush1.msra.mxu0 0.0
        %1981 = vmatprep.subr.mxu0 0.0
        %1982 = vmatpush1.msra.mxu0 0.0
        %1983 = vmatprep.subr.mxu0 0.0
        %1984 = vmatpush1.msra.mxu0 0.0
        %1985 = vmatprep.subr.mxu0 0.0
        %1986 = vmatpush1.msra.mxu0 0.0
        %1987 = vmatprep.subr.mxu0 0.0
        %1988 = vmatpush1.msra.mxu0 0.0
        %1989 = vmatprep.subr.mxu0 0.0
        %1990 = vmatpush1.msra.mxu0 0.0
        %1991 = vmatprep.subr.mxu0 0.0
        %1992 = vmatpush1.msra.mxu0 0.0
        %1993 = vmatprep.subr.mxu0 0.0
        %1994 = vmatpush1.msra.mxu0 0.0
        %1995 = vmatprep.subr.mxu0 0.0
        %1996 = vmatpush1.msra.mxu0 0.0
        %1997 = vmatprep.subr.mxu0 0.0
        %1998 = vmatpush1.msra.mxu0 0.0
        %1999 = vmatprep.subr.mxu0 0.0
        %2000 = vmatpush1.msra.mxu0 0.0
        %2001 = vmatprep.subr.mxu0 0.0
        %2002 = vmatpush1.msra.mxu0 0.0
        %2003 = vmatprep.subr.mxu0 0.0
        %2004 = vmatpush1.msra.mxu0 0.0
        %2005 = vmatprep.subr.mxu0 0.0
        %2006 = vmatpush1.msra.mxu0 0.0
        %2007 = vmatprep.subr.mxu0 0.0
        %2008 = vmatpush1.msra.mxu0 0.0
        %2009 = vmatprep.mubr.f32.mxu0 0.0
        %v2010 = vand.u32 %v1489, 4294901760
        %2011 = vmatmul.mubr.f32.gmra.mrb[0].mxu0 %v2010
        %v2012 = vpop.f32.mrb[0].mxu0
        %v2013 = vadd.f32 %v1932, %v2012
        %v2014 = vpop.f32.mrb[0].mxu0
        %2015 = vmatprep.mubr.f32.mxu0 0.0
        %v2016 = vand.u32 %v1492, 4294901760
        %2017 = vmatmul.mubr.f32.gmra.mrb[0].mxu0 %v2016
        %v2018 = vpop.f32.mrb[0].mxu0
        %v2019 = vadd.f32 %v1938, %v2018
        %v2020 = vpop.f32.mrb[0].mxu0
        %2021 = vdwg.mxu0
        %v2023 = vsel %vm419, %v393, 0
        %v2026 = vsel %vm419, %v394, 0
        %2028 = vmatprep.subr.mxu0 0.0
        %v2029 = vand.u32 %v407, 4294901760
        %2030 = vmatpush1.msra.mxu0 %v2029
        %2031 = vmatprep.subr.mxu0 0.0
        %v2032 = vand.u32 %v408, 4294901760
        %2033 = vmatpush1.msra.mxu0 %v2032
        %2034 = vmatprep.subr.mxu0 0.0
        %v2035 = vand.u32 %v409, 4294901760
        %2036 = vmatpush1.msra.mxu0 %v2035
        %2037 = vmatprep.subr.mxu0 0.0
        %v2038 = vand.u32 %v410, 4294901760
        %2039 = vmatpush1.msra.mxu0 %v2038
        %2040 = vmatprep.subr.mxu0 0.0
        %2041 = vmatpush1.msra.mxu0 0.0
        %2042 = vmatprep.subr.mxu0 0.0
        %2043 = vmatpush1.msra.mxu0 0.0
        %2044 = vmatprep.subr.mxu0 0.0
        %2045 = vmatpush1.msra.mxu0 0.0
        %2046 = vmatprep.subr.mxu0 0.0
        %2047 = vmatpush1.msra.mxu0 0.0
        %2048 = vmatprep.subr.mxu0 0.0
        %2049 = vmatpush1.msra.mxu0 0.0
        %2050 = vmatprep.subr.mxu0 0.0
        %2051 = vmatpush1.msra.mxu0 0.0
        %2052 = vmatprep.subr.mxu0 0.0
        %2053 = vmatpush1.msra.mxu0 0.0
        %2054 = vmatprep.subr.mxu0 0.0
        %2055 = vmatpush1.msra.mxu0 0.0
        %2056 = vmatprep.subr.mxu0 0.0
        %2057 = vmatpush1.msra.mxu0 0.0
        %2058 = vmatprep.subr.mxu0 0.0
        %2059 = vmatpush1.msra.mxu0 0.0
        %2060 = vmatprep.subr.mxu0 0.0
        %2061 = vmatpush1.msra.mxu0 0.0
        %2062 = vmatprep.subr.mxu0 0.0
        %2063 = vmatpush1.msra.mxu0 0.0
        %2064 = vmatprep.subr.mxu0 0.0
        %2065 = vmatpush1.msra.mxu0 0.0
        %2066 = vmatprep.subr.mxu0 0.0
        %2067 = vmatpush1.msra.mxu0 0.0
        %2068 = vmatprep.subr.mxu0 0.0
        %2069 = vmatpush1.msra.mxu0 0.0
        %2070 = vmatprep.subr.mxu0 0.0
        %2071 = vmatpush1.msra.mxu0 0.0
        %2072 = vmatprep.subr.mxu0 0.0
        %2073 = vmatpush1.msra.mxu0 0.0
        %2074 = vmatprep.subr.mxu0 0.0
        %2075 = vmatpush1.msra.mxu0 0.0
        %2076 = vmatprep.subr.mxu0 0.0
        %2077 = vmatpush1.msra.mxu0 0.0
        %2078 = vmatprep.subr.mxu0 0.0
        %2079 = vmatpush1.msra.mxu0 0.0
        %2080 = vmatprep.subr.mxu0 0.0
        %2081 = vmatpush1.msra.mxu0 0.0
        %2082 = vmatprep.subr.mxu0 0.0
        %2083 = vmatpush1.msra.mxu0 0.0
        %2084 = vmatprep.subr.mxu0 0.0
        %2085 = vmatpush1.msra.mxu0 0.0
        %2086 = vmatprep.subr.mxu0 0.0
        %2087 = vmatpush1.msra.mxu0 0.0
        %2088 = vmatprep.subr.mxu0 0.0
        %2089 = vmatpush1.msra.mxu0 0.0
        %2090 = vmatprep.subr.mxu0 0.0
        %2091 = vmatpush1.msra.mxu0 0.0
        %2092 = vmatprep.subr.mxu0 0.0
        %2093 = vmatpush1.msra.mxu0 0.0
        %2094 = vmatprep.subr.mxu0 0.0
        %2095 = vmatpush1.msra.mxu0 0.0
        %2096 = vmatprep.mubr.f32.mxu0 0.0
        %v2097 = vand.u32 %v2023, 4294901760
        %v2098 = vsub.f32 %v2023, %v2097
        %v2099 = vand.u32 %v2098, 4294901760
        %v2100 = vsub.f32 %v2098, %v2099
        %v2101 = vand.u32 %v2100, 4294901760
        %2102 = vmatmul.mubr.f32.gmra.mrb[0].mxu0 %v2101
        %v2103 = vpop.f32.mrb[0].mxu0
        %v2104 = vadd.f32 0.0, %v2103
        %v2105 = vpop.f32.mrb[0].mxu0
        %2106 = vmatprep.mubr.f32.mxu0 0.0
        %v2107 = vand.u32 %v2026, 4294901760
        %v2108 = vsub.f32 %v2026, %v2107
        %v2109 = vand.u32 %v2108, 4294901760
        %v2110 = vsub.f32 %v2108, %v2109
        %v2111 = vand.u32 %v2110, 4294901760
        %2112 = vmatmul.mubr.f32.gmra.mrb[0].mxu0 %v2111
        %v2113 = vpop.f32.mrb[0].mxu0
        %v2114 = vadd.f32 0.0, %v2113
        %v2115 = vpop.f32.mrb[0].mxu0
        %2116 = vdwg.mxu0
        %2117 = vmatprep.subr.mxu0 0.0
        %v2118 = vand.u32 %v407, 4294901760
        %v2119 = vsub.f32 %v407, %v2118
        %v2120 = vand.u32 %v2119, 4294901760
        %v2121 = vsub.f32 %v2119, %v2120
        %v2122 = vand.u32 %v2121, 4294901760
        %2123 = vmatpush1.msra.mxu0 %v2122
        %2124 = vmatprep.subr.mxu0 0.0
        %v2125 = vand.u32 %v408, 4294901760
        %v2126 = vsub.f32 %v408, %v2125
        %v2127 = vand.u32 %v2126, 4294901760
        %v2128 = vsub.f32 %v2126, %v2127
        %v2129 = vand.u32 %v2128, 4294901760
        %2130 = vmatpush1.msra.mxu0 %v2129
        %2131 = vmatprep.subr.mxu0 0.0
        %v2132 = vand.u32 %v409, 4294901760
        %v2133 = vsub.f32 %v409, %v2132
        %v2134 = vand.u32 %v2133, 4294901760
        %v2135 = vsub.f32 %v2133, %v2134
        %v2136 = vand.u32 %v2135, 4294901760
        %2137 = vmatpush1.msra.mxu0 %v2136
        %2138 = vmatprep.subr.mxu0 0.0
        %v2139 = vand.u32 %v410, 4294901760
        %v2140 = vsub.f32 %v410, %v2139
        %v2141 = vand.u32 %v2140, 4294901760
        %v2142 = vsub.f32 %v2140, %v2141
        %v2143 = vand.u32 %v2142, 4294901760
        %2144 = vmatpush1.msra.mxu0 %v2143
        %2145 = vmatprep.subr.mxu0 0.0
        %2146 = vmatpush1.msra.mxu0 0.0
        %2147 = vmatprep.subr.mxu0 0.0
        %2148 = vmatpush1.msra.mxu0 0.0
        %2149 = vmatprep.subr.mxu0 0.0
        %2150 = vmatpush1.msra.mxu0 0.0
        %2151 = vmatprep.subr.mxu0 0.0
        %2152 = vmatpush1.msra.mxu0 0.0
        %2153 = vmatprep.subr.mxu0 0.0
        %2154 = vmatpush1.msra.mxu0 0.0
        %2155 = vmatprep.subr.mxu0 0.0
        %2156 = vmatpush1.msra.mxu0 0.0
        %2157 = vmatprep.subr.mxu0 0.0
        %2158 = vmatpush1.msra.mxu0 0.0
        %2159 = vmatprep.subr.mxu0 0.0
        %2160 = vmatpush1.msra.mxu0 0.0
        %2161 = vmatprep.subr.mxu0 0.0
        %2162 = vmatpush1.msra.mxu0 0.0
        %2163 = vmatprep.subr.mxu0 0.0
        %2164 = vmatpush1.msra.mxu0 0.0
        %2165 = vmatprep.subr.mxu0 0.0
        %2166 = vmatpush1.msra.mxu0 0.0
        %2167 = vmatprep.subr.mxu0 0.0
        %2168 = vmatpush1.msra.mxu0 0.0
        %2169 = vmatprep.subr.mxu0 0.0
        %2170 = vmatpush1.msra.mxu0 0.0
        %2171 = vmatprep.subr.mxu0 0.0
        %2172 = vmatpush1.msra.mxu0 0.0
        %2173 = vmatprep.subr.mxu0 0.0
        %2174 = vmatpush1.msra.mxu0 0.0
        %2175 = vmatprep.subr.mxu0 0.0
        %2176 = vmatpush1.msra.mxu0 0.0
        %2177 = vmatprep.subr.mxu0 0.0
        %2178 = vmatpush1.msra.mxu0 0.0
        %2179 = vmatprep.subr.mxu0 0.0
        %2180 = vmatpush1.msra.mxu0 0.0
        %2181 = vmatprep.subr.mxu0 0.0
        %2182 = vmatpush1.msra.mxu0 0.0
        %2183 = vmatprep.subr.mxu0 0.0
        %2184 = vmatpush1.msra.mxu0 0.0
        %2185 = vmatprep.subr.mxu0 0.0
        %2186 = vmatpush1.msra.mxu0 0.0
        %2187 = vmatprep.subr.mxu0 0.0
        %2188 = vmatpush1.msra.mxu0 0.0
        %2189 = vmatprep.subr.mxu0 0.0
        %2190 = vmatpush1.msra.mxu0 0.0
        %2191 = vmatprep.subr.mxu0 0.0
        %2192 = vmatpush1.msra.mxu0 0.0
        %2193 = vmatprep.subr.mxu0 0.0
        %2194 = vmatpush1.msra.mxu0 0.0
        %2195 = vmatprep.subr.mxu0 0.0
        %2196 = vmatpush1.msra.mxu0 0.0
        %2197 = vmatprep.subr.mxu0 0.0
        %2198 = vmatpush1.msra.mxu0 0.0
        %2199 = vmatprep.subr.mxu0 0.0
        %2200 = vmatpush1.msra.mxu0 0.0
        %2201 = vmatprep.mubr.f32.mxu0 0.0
        %v2202 = vand.u32 %v2023, 4294901760
        %2203 = vmatmul.mubr.f32.gmra.mrb[0].mxu0 %v2202
        %v2204 = vpop.f32.mrb[0].mxu0
        %v2205 = vadd.f32 %v2104, %v2204
        %v2206 = vpop.f32.mrb[0].mxu0
        %2207 = vmatprep.mubr.f32.mxu0 0.0
        %v2208 = vand.u32 %v2026, 4294901760
        %2209 = vmatmul.mubr.f32.gmra.mrb[0].mxu0 %v2208
        %v2210 = vpop.f32.mrb[0].mxu0
        %v2211 = vadd.f32 %v2114, %v2210
        %v2212 = vpop.f32.mrb[0].mxu0
        %2213 = vdwg.mxu0
        %2214 = vmatprep.subr.mxu0 0.0
        %v2215 = vand.u32 %v407, 4294901760
        %v2216 = vsub.f32 %v407, %v2215
        %2217 = vmatpush1.msra.mxu0 %v2216
        %2218 = vmatprep.subr.mxu0 0.0
        %v2219 = vand.u32 %v408, 4294901760
        %v2220 = vsub.f32 %v408, %v2219
        %2221 = vmatpush1.msra.mxu0 %v2220
        %2222 = vmatprep.subr.mxu0 0.0
        %v2223 = vand.u32 %v409, 4294901760
        %v2224 = vsub.f32 %v409, %v2223
        %2225 = vmatpush1.msra.mxu0 %v2224
        %2226 = vmatprep.subr.mxu0 0.0
        %v2227 = vand.u32 %v410, 4294901760
        %v2228 = vsub.f32 %v410, %v2227
        %2229 = vmatpush1.msra.mxu0 %v2228
        %2230 = vmatprep.subr.mxu0 0.0
        %2231 = vmatpush1.msra.mxu0 0.0
        %2232 = vmatprep.subr.mxu0 0.0
        %2233 = vmatpush1.msra.mxu0 0.0
        %2234 = vmatprep.subr.mxu0 0.0
        %2235 = vmatpush1.msra.mxu0 0.0
        %2236 = vmatprep.subr.mxu0 0.0
        %2237 = vmatpush1.msra.mxu0 0.0
        %2238 = vmatprep.subr.mxu0 0.0
        %2239 = vmatpush1.msra.mxu0 0.0
        %2240 = vmatprep.subr.mxu0 0.0
        %2241 = vmatpush1.msra.mxu0 0.0
        %2242 = vmatprep.subr.mxu0 0.0
        %2243 = vmatpush1.msra.mxu0 0.0
        %2244 = vmatprep.subr.mxu0 0.0
        %2245 = vmatpush1.msra.mxu0 0.0
        %2246 = vmatprep.subr.mxu0 0.0
        %2247 = vmatpush1.msra.mxu0 0.0
        %2248 = vmatprep.subr.mxu0 0.0
        %2249 = vmatpush1.msra.mxu0 0.0
        %2250 = vmatprep.subr.mxu0 0.0
        %2251 = vmatpush1.msra.mxu0 0.0
        %2252 = vmatprep.subr.mxu0 0.0
        %2253 = vmatpush1.msra.mxu0 0.0
        %2254 = vmatprep.subr.mxu0 0.0
        %2255 = vmatpush1.msra.mxu0 0.0
        %2256 = vmatprep.subr.mxu0 0.0
        %2257 = vmatpush1.msra.mxu0 0.0
        %2258 = vmatprep.subr.mxu0 0.0
        %2259 = vmatpush1.msra.mxu0 0.0
        %2260 = vmatprep.subr.mxu0 0.0
        %2261 = vmatpush1.msra.mxu0 0.0
        %2262 = vmatprep.subr.mxu0 0.0
        %2263 = vmatpush1.msra.mxu0 0.0
        %2264 = vmatprep.subr.mxu0 0.0
        %2265 = vmatpush1.msra.mxu0 0.0
        %2266 = vmatprep.subr.mxu0 0.0
        %2267 = vmatpush1.msra.mxu0 0.0
        %2268 = vmatprep.subr.mxu0 0.0
        %2269 = vmatpush1.msra.mxu0 0.0
        %2270 = vmatprep.subr.mxu0 0.0
        %2271 = vmatpush1.msra.mxu0 0.0
        %2272 = vmatprep.subr.mxu0 0.0
        %2273 = vmatpush1.msra.mxu0 0.0
        %2274 = vmatprep.subr.mxu0 0.0
        %2275 = vmatpush1.msra.mxu0 0.0
        %2276 = vmatprep.subr.mxu0 0.0
        %2277 = vmatpush1.msra.mxu0 0.0
        %2278 = vmatprep.subr.mxu0 0.0
        %2279 = vmatpush1.msra.mxu0 0.0
        %2280 = vmatprep.subr.mxu0 0.0
        %2281 = vmatpush1.msra.mxu0 0.0
        %2282 = vmatprep.subr.mxu0 0.0
        %2283 = vmatpush1.msra.mxu0 0.0
        %2284 = vmatprep.subr.mxu0 0.0
        %2285 = vmatpush1.msra.mxu0 0.0
        %2286 = vmatprep.mubr.f32.mxu0 0.0
        %v2287 = vand.u32 %v2023, 4294901760
        %v2288 = vsub.f32 %v2023, %v2287
        %2289 = vmatmul.mubr.f32.gmra.mrb[0].mxu0 %v2288
        %v2290 = vpop.f32.mrb[0].mxu0
        %v2291 = vadd.f32 %v2205, %v2290
        %v2292 = vpop.f32.mrb[0].mxu0
        %2293 = vmatprep.mubr.f32.mxu0 0.0
        %v2294 = vand.u32 %v2026, 4294901760
        %v2295 = vsub.f32 %v2026, %v2294
        %2296 = vmatmul.mubr.f32.gmra.mrb[0].mxu0 %v2295
        %v2297 = vpop.f32.mrb[0].mxu0
        %v2298 = vadd.f32 %v2211, %v2297
        %v2299 = vpop.f32.mrb[0].mxu0
        %2300 = vdwg.mxu0
        %2301 = vmatprep.subr.mxu0 0.0
        %v2302 = vand.u32 %v407, 4294901760
        %2303 = vmatpush1.msra.mxu0 %v2302
        %2304 = vmatprep.subr.mxu0 0.0
        %v2305 = vand.u32 %v408, 4294901760
        %2306 = vmatpush1.msra.mxu0 %v2305
        %2307 = vmatprep.subr.mxu0 0.0
        %v2308 = vand.u32 %v409, 4294901760
        %2309 = vmatpush1.msra.mxu0 %v2308
        %2310 = vmatprep.subr.mxu0 0.0
        %v2311 = vand.u32 %v410, 4294901760
        %2312 = vmatpush1.msra.mxu0 %v2311
        %2313 = vmatprep.subr.mxu0 0.0
        %2314 = vmatpush1.msra.mxu0 0.0
        %2315 = vmatprep.subr.mxu0 0.0
        %2316 = vmatpush1.msra.mxu0 0.0
        %2317 = vmatprep.subr.mxu0 0.0
        %2318 = vmatpush1.msra.mxu0 0.0
        %2319 = vmatprep.subr.mxu0 0.0
        %2320 = vmatpush1.msra.mxu0 0.0
        %2321 = vmatprep.subr.mxu0 0.0
        %2322 = vmatpush1.msra.mxu0 0.0
        %2323 = vmatprep.subr.mxu0 0.0
        %2324 = vmatpush1.msra.mxu0 0.0
        %2325 = vmatprep.subr.mxu0 0.0
        %2326 = vmatpush1.msra.mxu0 0.0
        %2327 = vmatprep.subr.mxu0 0.0
        %2328 = vmatpush1.msra.mxu0 0.0
        %2329 = vmatprep.subr.mxu0 0.0
        %2330 = vmatpush1.msra.mxu0 0.0
        %2331 = vmatprep.subr.mxu0 0.0
        %2332 = vmatpush1.msra.mxu0 0.0
        %2333 = vmatprep.subr.mxu0 0.0
        %2334 = vmatpush1.msra.mxu0 0.0
        %2335 = vmatprep.subr.mxu0 0.0
        %2336 = vmatpush1.msra.mxu0 0.0
        %2337 = vmatprep.subr.mxu0 0.0
        %2338 = vmatpush1.msra.mxu0 0.0
        %2339 = vmatprep.subr.mxu0 0.0
        %2340 = vmatpush1.msra.mxu0 0.0
        %2341 = vmatprep.subr.mxu0 0.0
        %2342 = vmatpush1.msra.mxu0 0.0
        %2343 = vmatprep.subr.mxu0 0.0
        %2344 = vmatpush1.msra.mxu0 0.0
        %2345 = vmatprep.subr.mxu0 0.0
        %2346 = vmatpush1.msra.mxu0 0.0
        %2347 = vmatprep.subr.mxu0 0.0
        %2348 = vmatpush1.msra.mxu0 0.0
        %2349 = vmatprep.subr.mxu0 0.0
        %2350 = vmatpush1.msra.mxu0 0.0
        %2351 = vmatprep.subr.mxu0 0.0
        %2352 = vmatpush1.msra.mxu0 0.0
        %2353 = vmatprep.subr.mxu0 0.0
        %2354 = vmatpush1.msra.mxu0 0.0
        %2355 = vmatprep.subr.mxu0 0.0
        %2356 = vmatpush1.msra.mxu0 0.0
        %2357 = vmatprep.subr.mxu0 0.0
        %2358 = vmatpush1.msra.mxu0 0.0
        %2359 = vmatprep.subr.mxu0 0.0
        %2360 = vmatpush1.msra.mxu0 0.0
        %2361 = vmatprep.subr.mxu0 0.0
        %2362 = vmatpush1.msra.mxu0 0.0
        %2363 = vmatprep.subr.mxu0 0.0
        %2364 = vmatpush1.msra.mxu0 0.0
        %2365 = vmatprep.subr.mxu0 0.0
        %2366 = vmatpush1.msra.mxu0 0.0
        %2367 = vmatprep.subr.mxu0 0.0
        %2368 = vmatpush1.msra.mxu0 0.0
        %2369 = vmatprep.mubr.f32.mxu0 0.0
        %v2370 = vand.u32 %v2023, 4294901760
        %v2371 = vsub.f32 %v2023, %v2370
        %v2372 = vand.u32 %v2371, 4294901760
        %2373 = vmatmul.mubr.f32.gmra.mrb[0].mxu0 %v2372
        %v2374 = vpop.f32.mrb[0].mxu0
        %v2375 = vadd.f32 %v2291, %v2374
        %v2376 = vpop.f32.mrb[0].mxu0
        %2377 = vmatprep.mubr.f32.mxu0 0.0
        %v2378 = vand.u32 %v2026, 4294901760
        %v2379 = vsub.f32 %v2026, %v2378
        %v2380 = vand.u32 %v2379, 4294901760
        %2381 = vmatmul.mubr.f32.gmra.mrb[0].mxu0 %v2380
        %v2382 = vpop.f32.mrb[0].mxu0
        %v2383 = vadd.f32 %v2298, %v2382
        %v2384 = vpop.f32.mrb[0].mxu0
        %2385 = vdwg.mxu0
        %2386 = vmatprep.subr.mxu0 0.0
        %v2387 = vand.u32 %v407, 4294901760
        %v2388 = vsub.f32 %v407, %v2387
        %v2389 = vand.u32 %v2388, 4294901760
        %2390 = vmatpush1.msra.mxu0 %v2389
        %2391 = vmatprep.subr.mxu0 0.0
        %v2392 = vand.u32 %v408, 4294901760
        %v2393 = vsub.f32 %v408, %v2392
        %v2394 = vand.u32 %v2393, 4294901760
        %2395 = vmatpush1.msra.mxu0 %v2394
        %2396 = vmatprep.subr.mxu0 0.0
        %v2397 = vand.u32 %v409, 4294901760
        %v2398 = vsub.f32 %v409, %v2397
        %v2399 = vand.u32 %v2398, 4294901760
        %2400 = vmatpush1.msra.mxu0 %v2399
        %2401 = vmatprep.subr.mxu0 0.0
        %v2402 = vand.u32 %v410, 4294901760
        %v2403 = vsub.f32 %v410, %v2402
        %v2404 = vand.u32 %v2403, 4294901760
        %2405 = vmatpush1.msra.mxu0 %v2404
        %2406 = vmatprep.subr.mxu0 0.0
        %2407 = vmatpush1.msra.mxu0 0.0
        %2408 = vmatprep.subr.mxu0 0.0
        %2409 = vmatpush1.msra.mxu0 0.0
        %2410 = vmatprep.subr.mxu0 0.0
        %2411 = vmatpush1.msra.mxu0 0.0
        %2412 = vmatprep.subr.mxu0 0.0
        %2413 = vmatpush1.msra.mxu0 0.0
        %2414 = vmatprep.subr.mxu0 0.0
        %2415 = vmatpush1.msra.mxu0 0.0
        %2416 = vmatprep.subr.mxu0 0.0
        %2417 = vmatpush1.msra.mxu0 0.0
        %2418 = vmatprep.subr.mxu0 0.0
        %2419 = vmatpush1.msra.mxu0 0.0
        %2420 = vmatprep.subr.mxu0 0.0
        %2421 = vmatpush1.msra.mxu0 0.0
        %2422 = vmatprep.subr.mxu0 0.0
        %2423 = vmatpush1.msra.mxu0 0.0
        %2424 = vmatprep.subr.mxu0 0.0
        %2425 = vmatpush1.msra.mxu0 0.0
        %2426 = vmatprep.subr.mxu0 0.0
        %2427 = vmatpush1.msra.mxu0 0.0
        %2428 = vmatprep.subr.mxu0 0.0
        %2429 = vmatpush1.msra.mxu0 0.0
        %2430 = vmatprep.subr.mxu0 0.0
        %2431 = vmatpush1.msra.mxu0 0.0
        %2432 = vmatprep.subr.mxu0 0.0
        %2433 = vmatpush1.msra.mxu0 0.0
        %2434 = vmatprep.subr.mxu0 0.0
        %2435 = vmatpush1.msra.mxu0 0.0
        %2436 = vmatprep.subr.mxu0 0.0
        %2437 = vmatpush1.msra.mxu0 0.0
        %2438 = vmatprep.subr.mxu0 0.0
        %2439 = vmatpush1.msra.mxu0 0.0
        %2440 = vmatprep.subr.mxu0 0.0
        %2441 = vmatpush1.msra.mxu0 0.0
        %2442 = vmatprep.subr.mxu0 0.0
        %2443 = vmatpush1.msra.mxu0 0.0
        %2444 = vmatprep.subr.mxu0 0.0
        %2445 = vmatpush1.msra.mxu0 0.0
        %2446 = vmatprep.subr.mxu0 0.0
        %2447 = vmatpush1.msra.mxu0 0.0
        %2448 = vmatprep.subr.mxu0 0.0
        %2449 = vmatpush1.msra.mxu0 0.0
        %2450 = vmatprep.subr.mxu0 0.0
        %2451 = vmatpush1.msra.mxu0 0.0
        %2452 = vmatprep.subr.mxu0 0.0
        %2453 = vmatpush1.msra.mxu0 0.0
        %2454 = vmatprep.subr.mxu0 0.0
        %2455 = vmatpush1.msra.mxu0 0.0
        %2456 = vmatprep.subr.mxu0 0.0
        %2457 = vmatpush1.msra.mxu0 0.0
        %2458 = vmatprep.subr.mxu0 0.0
        %2459 = vmatpush1.msra.mxu0 0.0
        %2460 = vmatprep.subr.mxu0 0.0
        %2461 = vmatpush1.msra.mxu0 0.0
        %2462 = vmatprep.mubr.f32.mxu0 0.0
        %v2463 = vand.u32 %v2023, 4294901760
        %2464 = vmatmul.mubr.f32.gmra.mrb[0].mxu0 %v2463
        %v2465 = vpop.f32.mrb[0].mxu0
        %v2466 = vadd.f32 %v2375, %v2465
        %v2467 = vpop.f32.mrb[0].mxu0
        %2468 = vmatprep.mubr.f32.mxu0 0.0
        %v2469 = vand.u32 %v2026, 4294901760
        %2470 = vmatmul.mubr.f32.gmra.mrb[0].mxu0 %v2469
        %v2471 = vpop.f32.mrb[0].mxu0
        %v2472 = vadd.f32 %v2383, %v2471
        %v2473 = vpop.f32.mrb[0].mxu0
        %2474 = vdwg.mxu0
        %2475 = vmatprep.subr.mxu0 0.0
        %v2476 = vand.u32 %v407, 4294901760
        %2477 = vmatpush1.msra.mxu0 %v2476
        %2478 = vmatprep.subr.mxu0 0.0
        %v2479 = vand.u32 %v408, 4294901760
        %2480 = vmatpush1.msra.mxu0 %v2479
        %2481 = vmatprep.subr.mxu0 0.0
        %v2482 = vand.u32 %v409, 4294901760
        %2483 = vmatpush1.msra.mxu0 %v2482
        %2484 = vmatprep.subr.mxu0 0.0
        %v2485 = vand.u32 %v410, 4294901760
        %2486 = vmatpush1.msra.mxu0 %v2485
        %2487 = vmatprep.subr.mxu0 0.0
        %2488 = vmatpush1.msra.mxu0 0.0
        %2489 = vmatprep.subr.mxu0 0.0
        %2490 = vmatpush1.msra.mxu0 0.0
        %2491 = vmatprep.subr.mxu0 0.0
        %2492 = vmatpush1.msra.mxu0 0.0
        %2493 = vmatprep.subr.mxu0 0.0
        %2494 = vmatpush1.msra.mxu0 0.0
        %2495 = vmatprep.subr.mxu0 0.0
        %2496 = vmatpush1.msra.mxu0 0.0
        %2497 = vmatprep.subr.mxu0 0.0
        %2498 = vmatpush1.msra.mxu0 0.0
        %2499 = vmatprep.subr.mxu0 0.0
        %2500 = vmatpush1.msra.mxu0 0.0
        %2501 = vmatprep.subr.mxu0 0.0
        %2502 = vmatpush1.msra.mxu0 0.0
        %2503 = vmatprep.subr.mxu0 0.0
        %2504 = vmatpush1.msra.mxu0 0.0
        %2505 = vmatprep.subr.mxu0 0.0
        %2506 = vmatpush1.msra.mxu0 0.0
        %2507 = vmatprep.subr.mxu0 0.0
        %2508 = vmatpush1.msra.mxu0 0.0
        %2509 = vmatprep.subr.mxu0 0.0
        %2510 = vmatpush1.msra.mxu0 0.0
        %2511 = vmatprep.subr.mxu0 0.0
        %2512 = vmatpush1.msra.mxu0 0.0
        %2513 = vmatprep.subr.mxu0 0.0
        %2514 = vmatpush1.msra.mxu0 0.0
        %2515 = vmatprep.subr.mxu0 0.0
        %2516 = vmatpush1.msra.mxu0 0.0
        %2517 = vmatprep.subr.mxu0 0.0
        %2518 = vmatpush1.msra.mxu0 0.0
        %2519 = vmatprep.subr.mxu0 0.0
        %2520 = vmatpush1.msra.mxu0 0.0
        %2521 = vmatprep.subr.mxu0 0.0
        %2522 = vmatpush1.msra.mxu0 0.0
        %2523 = vmatprep.subr.mxu0 0.0
        %2524 = vmatpush1.msra.mxu0 0.0
        %2525 = vmatprep.subr.mxu0 0.0
        %2526 = vmatpush1.msra.mxu0 0.0
        %2527 = vmatprep.subr.mxu0 0.0
        %2528 = vmatpush1.msra.mxu0 0.0
        %2529 = vmatprep.subr.mxu0 0.0
        %2530 = vmatpush1.msra.mxu0 0.0
        %2531 = vmatprep.subr.mxu0 0.0
        %2532 = vmatpush1.msra.mxu0 0.0
        %2533 = vmatprep.subr.mxu0 0.0
        %2534 = vmatpush1.msra.mxu0 0.0
        %2535 = vmatprep.subr.mxu0 0.0
        %2536 = vmatpush1.msra.mxu0 0.0
        %2537 = vmatprep.subr.mxu0 0.0
        %2538 = vmatpush1.msra.mxu0 0.0
        %2539 = vmatprep.subr.mxu0 0.0
        %2540 = vmatpush1.msra.mxu0 0.0
        %2541 = vmatprep.subr.mxu0 0.0
        %2542 = vmatpush1.msra.mxu0 0.0
        %2543 = vmatprep.mubr.f32.mxu0 0.0
        %v2544 = vand.u32 %v2023, 4294901760
        %2545 = vmatmul.mubr.f32.gmra.mrb[0].mxu0 %v2544
        %v2546 = vpop.f32.mrb[0].mxu0
        %v2547 = vadd.f32 %v2466, %v2546
        %v2548 = vpop.f32.mrb[0].mxu0
        %2549 = vmatprep.mubr.f32.mxu0 0.0
        %v2550 = vand.u32 %v2026, 4294901760
        %2551 = vmatmul.mubr.f32.gmra.mrb[0].mxu0 %v2550
        %v2552 = vpop.f32.mrb[0].mxu0
        %v2553 = vadd.f32 %v2472, %v2552
        %v2554 = vpop.f32.mrb[0].mxu0
        %2555 = vdwg.mxu0
        %v2556 = vld [vmem:[#allocation2] sm:$0xff]
        %v2557 = vld [vmem:[#allocation2 + $0x8] sm:$0xff]
        %v2558 = vld [vmem:[#allocation2 + $0x10] sm:$0xff]
        %v2559 = vld [vmem:[#allocation2 + $0x18] sm:$0xff]
        %v2560 = vld [vmem:[#allocation2 + $0x20] sm:$0xff]
        %v2561 = vld [vmem:[#allocation2 + $0x28] sm:$0xff]
        %v2562 = vld [vmem:[#allocation2 + $0x30] sm:$0xff]
        %v2563 = vld [vmem:[#allocation2 + $0x38] sm:$0xff]
        %vm2564 = vcmask 130048
        %v2565 = vsel %vm2564, %v945, -inf
        %2566 = vmax.xlane.f32.xlu0 %v2565
        %v2567 = vpop.xlane.xlu0 %2566
        %v2568 = vsel %vm2564, %v951, -inf
        %2569 = vmax.xlane.f32.xlu0 %v2568
        %v2570 = vpop.xlane.xlu0 %2569
        %v2571 = vsel %vm2564, %v1479, -inf
        %2572 = vmax.xlane.f32.xlu0 %v2571
        %v2573 = vpop.xlane.xlu0 %2572
        %v2574 = vsel %vm2564, %v1485, -inf
        %2575 = vmax.xlane.f32.xlu0 %v2574
        %v2576 = vpop.xlane.xlu0 %2575
        %v2577 = vsel %vm2564, %v2013, -inf
        %2578 = vmax.xlane.f32.xlu0 %v2577
        %v2579 = vpop.xlane.xlu0 %2578
        %v2580 = vsel %vm2564, %v2019, -inf
        %2581 = vmax.xlane.f32.xlu0 %v2580
        %v2582 = vpop.xlane.xlu0 %2581
        %v2583 = vsel %vm2564, %v2547, -inf
        %2584 = vmax.xlane.f32.xlu0 %v2583
        %v2585 = vpop.xlane.xlu0 %2584
        %v2586 = vsel %vm2564, %v2553, -inf
        %2587 = vmax.xlane.f32.xlu0 %v2586
        %v2588 = vpop.xlane.xlu0 %2587
        %v2589 = vmax.f32 %v2556, %v2567
        %v2590 = vmax.f32 %v2557, %v2570
        %v2591 = vmax.f32 %v2558, %v2573
        %v2592 = vmax.f32 %v2559, %v2576
        %v2593 = vmax.f32 %v2560, %v2579
        %v2594 = vmax.f32 %v2561, %v2582
        %v2595 = vmax.f32 %v2562, %v2585
        %v2596 = vmax.f32 %v2563, %v2588
        %v2597 = vsub.f32 %v2556, %v2589
        %v2598 = vsub.f32 %v2557, %v2590
        %v2599 = vsub.f32 %v2558, %v2591
        %v2600 = vsub.f32 %v2559, %v2592
        %v2601 = vsub.f32 %v2560, %v2593
        %v2602 = vsub.f32 %v2561, %v2594
        %v2603 = vsub.f32 %v2562, %v2595
        %v2604 = vsub.f32 %v2563, %v2596
        %v2605 = vmul.f32 %v2597, 1.442695
        %v2606 = vpow.pop %v2605
        %v2607 = vmul.f32 %v2598, 1.442695
        %v2608 = vpow.pop %v2607
        %v2609 = vmul.f32 %v2599, 1.442695
        %v2610 = vpow.pop %v2609
        %v2611 = vmul.f32 %v2600, 1.442695
        %v2612 = vpow.pop %v2611
        %v2613 = vmul.f32 %v2601, 1.442695
        %v2614 = vpow.pop %v2613
        %v2615 = vmul.f32 %v2602, 1.442695
        %v2616 = vpow.pop %v2615
        %v2617 = vmul.f32 %v2603, 1.442695
        %v2618 = vpow.pop %v2617
        %v2619 = vmul.f32 %v2604, 1.442695
        %v2620 = vpow.pop %v2619
        %2622 = vset.pattern.permute.xlu0 0
        %2623 = vperm.xlu0 %2622, %v2589
        %v2624 = vpop.permute.xlu0 %2623
        %2627 = vset.pattern.permute.xlu0 0
        %2628 = vperm.xlu0 %2627, %v2590
        %v2629 = vpop.permute.xlu0 %2628
        %2632 = vset.pattern.permute.xlu0 0
        %2633 = vperm.xlu0 %2632, %v2591
        %v2634 = vpop.permute.xlu0 %2633
        %2637 = vset.pattern.permute.xlu0 0
        %2638 = vperm.xlu0 %2637, %v2592
        %v2639 = vpop.permute.xlu0 %2638
        %2642 = vset.pattern.permute.xlu0 0
        %2643 = vperm.xlu0 %2642, %v2593
        %v2644 = vpop.permute.xlu0 %2643
        %2647 = vset.pattern.permute.xlu0 0
        %2648 = vperm.xlu0 %2647, %v2594
        %v2649 = vpop.permute.xlu0 %2648
        %2652 = vset.pattern.permute.xlu0 0
        %2653 = vperm.xlu0 %2652, %v2595
        %v2654 = vpop.permute.xlu0 %2653
        %2657 = vset.pattern.permute.xlu0 0
        %2658 = vperm.xlu0 %2657, %v2596
        %v2659 = vpop.permute.xlu0 %2658
        %v2661 = vsub.f32 %v945, %v2624
        %v2662 = vsub.f32 %v951, %v2629
        %v2663 = vsub.f32 %v1479, %v2634
        %v2664 = vsub.f32 %v1485, %v2639
        %v2665 = vsub.f32 %v2013, %v2644
        %v2666 = vsub.f32 %v2019, %v2649
        %v2667 = vsub.f32 %v2547, %v2654
        %v2668 = vsub.f32 %v2553, %v2659
        %v2669 = vmul.f32 %v2661, 1.442695
        %v2670 = vpow.pop %v2669
        %v2671 = vmul.f32 %v2662, 1.442695
        %v2672 = vpow.pop %v2671
        %v2673 = vmul.f32 %v2663, 1.442695
        %v2674 = vpow.pop %v2673
        %v2675 = vmul.f32 %v2664, 1.442695
        %v2676 = vpow.pop %v2675
        %v2677 = vmul.f32 %v2665, 1.442695
        %v2678 = vpow.pop %v2677
        %v2679 = vmul.f32 %v2666, 1.442695
        %v2680 = vpow.pop %v2679
        %v2681 = vmul.f32 %v2667, 1.442695
        %v2682 = vpow.pop %v2681
        %v2683 = vmul.f32 %v2668, 1.442695
        %v2684 = vpow.pop %v2683
        %v2685 = vld [vmem:[#allocation3] sm:$0xff]
        %v2686 = vld [vmem:[#allocation3 + $0x8] sm:$0xff]
        %v2687 = vld [vmem:[#allocation3 + $0x10] sm:$0xff]
        %v2688 = vld [vmem:[#allocation3 + $0x18] sm:$0xff]
        %v2689 = vld [vmem:[#allocation3 + $0x20] sm:$0xff]
        %v2690 = vld [vmem:[#allocation3 + $0x28] sm:$0xff]
        %v2691 = vld [vmem:[#allocation3 + $0x30] sm:$0xff]
        %v2692 = vld [vmem:[#allocation3 + $0x38] sm:$0xff]
        %v2693 = vmul.f32 %v2606, %v2685
        %v2694 = vmul.f32 %v2608, %v2686
        %v2695 = vmul.f32 %v2610, %v2687
        %v2696 = vmul.f32 %v2612, %v2688
        %v2697 = vmul.f32 %v2614, %v2689
        %v2698 = vmul.f32 %v2616, %v2690
        %v2699 = vmul.f32 %v2618, %v2691
        %v2700 = vmul.f32 %v2620, %v2692
        %v2701 = vsel %vm2564, %v2670, 0.0
        %2702 = vadd.xlane.f32.xlu0 %v2701
        %v2703 = vpop.xlane.xlu0 %2702
        %v2704 = vsel %vm2564, %v2672, 0.0
        %2705 = vadd.xlane.f32.xlu0 %v2704
        %v2706 = vpop.xlane.xlu0 %2705
        %v2707 = vsel %vm2564, %v2674, 0.0
        %2708 = vadd.xlane.f32.xlu0 %v2707
        %v2709 = vpop.xlane.xlu0 %2708
        %v2710 = vsel %vm2564, %v2676, 0.0
        %2711 = vadd.xlane.f32.xlu0 %v2710
        %v2712 = vpop.xlane.xlu0 %2711
        %v2713 = vsel %vm2564, %v2678, 0.0
        %2714 = vadd.xlane.f32.xlu0 %v2713
        %v2715 = vpop.xlane.xlu0 %2714
        %v2716 = vsel %vm2564, %v2680, 0.0
        %2717 = vadd.xlane.f32.xlu0 %v2716
        %v2718 = vpop.xlane.xlu0 %2717
        %v2719 = vsel %vm2564, %v2682, 0.0
        %2720 = vadd.xlane.f32.xlu0 %v2719
        %v2721 = vpop.xlane.xlu0 %2720
        %v2722 = vsel %vm2564, %v2684, 0.0
        %2723 = vadd.xlane.f32.xlu0 %v2722
        %v2724 = vpop.xlane.xlu0 %2723
        %v2725 = vadd.f32 %v2693, %v2703
        %v2726 = vadd.f32 %v2694, %v2706
        %v2727 = vadd.f32 %v2695, %v2709
        %v2728 = vadd.f32 %v2696, %v2712
        %v2729 = vadd.f32 %v2697, %v2715
        %v2730 = vadd.f32 %v2698, %v2718
        %v2731 = vadd.f32 %v2699, %v2721
        %v2732 = vadd.f32 %v2700, %v2724
        %vm2733 = vcmask 7168
        %2734 = vst.msk [vmem:[#allocation3] sm:$0xff] %vm2733, %v2725
        %2735 = vst.msk [vmem:[#allocation3 + $0x8] sm:$0xff] %vm2733, %v2726
        %2736 = vst.msk [vmem:[#allocation3 + $0x10] sm:$0xff] %vm2733, %v2727
        %2737 = vst.msk [vmem:[#allocation3 + $0x18] sm:$0xff] %vm2733, %v2728
        %2738 = vst.msk [vmem:[#allocation3 + $0x20] sm:$0xff] %vm2733, %v2729
        %2739 = vst.msk [vmem:[#allocation3 + $0x28] sm:$0xff] %vm2733, %v2730
        %2740 = vst.msk [vmem:[#allocation3 + $0x30] sm:$0xff] %vm2733, %v2731
        %2741 = vst.msk [vmem:[#allocation3 + $0x38] sm:$0xff] %vm2733, %v2732
        %v2742 = vld [vmem:[#allocation4] sm:$0xff]
        %v2743 = vld [vmem:[#allocation4 + $0x8] sm:$0xff]
        %v2744 = vld [vmem:[#allocation4 + $0x10] sm:$0xff]
        %v2745 = vld [vmem:[#allocation4 + $0x18] sm:$0xff]
        %v2746 = vld [vmem:[#allocation4 + $0x20] sm:$0xff]
        %v2747 = vld [vmem:[#allocation4 + $0x28] sm:$0xff]
        %v2748 = vld [vmem:[#allocation4 + $0x30] sm:$0xff]
        %v2749 = vld [vmem:[#allocation4 + $0x38] sm:$0xff]
        %2751 = vset.pattern.permute.xlu0 0
        %2752 = vperm.xlu0 %2751, %v2606
        %v2753 = vpop.permute.xlu0 %2752
        %2756 = vset.pattern.permute.xlu0 0
        %2757 = vperm.xlu0 %2756, %v2608
        %v2758 = vpop.permute.xlu0 %2757
        %2761 = vset.pattern.permute.xlu0 0
        %2762 = vperm.xlu0 %2761, %v2610
        %v2763 = vpop.permute.xlu0 %2762
        %2766 = vset.pattern.permute.xlu0 0
        %2767 = vperm.xlu0 %2766, %v2612
        %v2768 = vpop.permute.xlu0 %2767
        %2771 = vset.pattern.permute.xlu0 0
        %2772 = vperm.xlu0 %2771, %v2614
        %v2773 = vpop.permute.xlu0 %2772
        %2776 = vset.pattern.permute.xlu0 0
        %2777 = vperm.xlu0 %2776, %v2616
        %v2778 = vpop.permute.xlu0 %2777
        %2781 = vset.pattern.permute.xlu0 0
        %2782 = vperm.xlu0 %2781, %v2618
        %v2783 = vpop.permute.xlu0 %2782
        %2786 = vset.pattern.permute.xlu0 0
        %2787 = vperm.xlu0 %2786, %v2620
        %v2788 = vpop.permute.xlu0 %2787
        %v2790 = vmul.f32 %v2753, %v2742
        %v2791 = vmul.f32 %v2758, %v2743
        %v2792 = vmul.f32 %v2763, %v2744
        %v2793 = vmul.f32 %v2768, %v2745
        %v2794 = vmul.f32 %v2773, %v2746
        %v2795 = vmul.f32 %v2778, %v2747
        %v2796 = vmul.f32 %v2783, %v2748
        %v2797 = vmul.f32 %v2788, %v2749
        %v2799 = vsel %vm2564, %v2670, 0
        %v2802 = vsel %vm2564, %v2672, 0
        %2804 = vmatprep.subr.mxu0 0.0
        %v2805 = vand.u32 %v411, 4294901760
        %2806 = vmatpush1.msra.mxu0 %v2805
        %2807 = vmatprep.subr.mxu0 0.0
        %v2808 = vand.u32 %v412, 4294901760
        %2809 = vmatpush1.msra.mxu0 %v2808
        %2810 = vmatprep.subr.mxu0 0.0
        %2811 = vmatpush1.msra.mxu0 0.0
        %2812 = vmatprep.subr.mxu0 0.0
        %2813 = vmatpush1.msra.mxu0 0.0
        %2814 = vmatprep.subr.mxu0 0.0
        %2815 = vmatpush1.msra.mxu0 0.0
        %2816 = vmatprep.subr.mxu0 0.0
        %2817 = vmatpush1.msra.mxu0 0.0
        %2818 = vmatprep.subr.mxu0 0.0
        %2819 = vmatpush1.msra.mxu0 0.0
        %2820 = vmatprep.subr.mxu0 0.0
        %2821 = vmatpush1.msra.mxu0 0.0
        %2822 = vmatprep.subr.mxu0 0.0
        %2823 = vmatpush1.msra.mxu0 0.0
        %2824 = vmatprep.subr.mxu0 0.0
        %2825 = vmatpush1.msra.mxu0 0.0
        %2826 = vmatprep.subr.mxu0 0.0
        %2827 = vmatpush1.msra.mxu0 0.0
        %2828 = vmatprep.subr.mxu0 0.0
        %2829 = vmatpush1.msra.mxu0 0.0
        %2830 = vmatprep.subr.mxu0 0.0
        %2831 = vmatpush1.msra.mxu0 0.0
        %2832 = vmatprep.subr.mxu0 0.0
        %2833 = vmatpush1.msra.mxu0 0.0
        %2834 = vmatprep.subr.mxu0 0.0
        %2835 = vmatpush1.msra.mxu0 0.0
        %2836 = vmatprep.subr.mxu0 0.0
        %2837 = vmatpush1.msra.mxu0 0.0
        %2838 = vmatprep.subr.mxu0 0.0
        %2839 = vmatpush1.msra.mxu0 0.0
        %2840 = vmatprep.subr.mxu0 0.0
        %2841 = vmatpush1.msra.mxu0 0.0
        %2842 = vmatprep.subr.mxu0 0.0
        %2843 = vmatpush1.msra.mxu0 0.0
        %2844 = vmatprep.subr.mxu0 0.0
        %2845 = vmatpush1.msra.mxu0 0.0
        %2846 = vmatprep.subr.mxu0 0.0
        %2847 = vmatpush1.msra.mxu0 0.0
        %2848 = vmatprep.subr.mxu0 0.0
        %2849 = vmatpush1.msra.mxu0 0.0
        %2850 = vmatprep.subr.mxu0 0.0
        %2851 = vmatpush1.msra.mxu0 0.0
        %2852 = vmatprep.subr.mxu0 0.0
        %2853 = vmatpush1.msra.mxu0 0.0
        %2854 = vmatprep.subr.mxu0 0.0
        %2855 = vmatpush1.msra.mxu0 0.0
        %2856 = vmatprep.subr.mxu0 0.0
        %2857 = vmatpush1.msra.mxu0 0.0
        %2858 = vmatprep.subr.mxu0 0.0
        %2859 = vmatpush1.msra.mxu0 0.0
        %2860 = vmatprep.subr.mxu0 0.0
        %2861 = vmatpush1.msra.mxu0 0.0
        %2862 = vmatprep.subr.mxu0 0.0
        %2863 = vmatpush1.msra.mxu0 0.0
        %2864 = vmatprep.subr.mxu0 0.0
        %2865 = vmatpush1.msra.mxu0 0.0
        %2866 = vmatprep.subr.mxu0 0.0
        %2867 = vmatpush1.msra.mxu0 0.0
        %2868 = vmatprep.subr.mxu0 0.0
        %2869 = vmatpush1.msra.mxu0 0.0
        %2870 = vmatprep.mubr.f32.mxu0 0.0
        %v2871 = vand.u32 %v2799, 4294901760
        %v2872 = vsub.f32 %v2799, %v2871
        %v2873 = vand.u32 %v2872, 4294901760
        %v2874 = vsub.f32 %v2872, %v2873
        %v2875 = vand.u32 %v2874, 4294901760
        %2876 = vmatmul.mubr.f32.gmra.mrb[0].mxu0 %v2875
        %v2877 = vpop.f32.mrb[0].mxu0
        %v2878 = vadd.f32 0.0, %v2877
        %v2879 = vpop.f32.mrb[0].mxu0
        %2880 = vmatprep.mubr.f32.mxu0 0.0
        %v2881 = vand.u32 %v2802, 4294901760
        %v2882 = vsub.f32 %v2802, %v2881
        %v2883 = vand.u32 %v2882, 4294901760
        %v2884 = vsub.f32 %v2882, %v2883
        %v2885 = vand.u32 %v2884, 4294901760
        %2886 = vmatmul.mubr.f32.gmra.mrb[0].mxu0 %v2885
        %v2887 = vpop.f32.mrb[0].mxu0
        %v2888 = vadd.f32 0.0, %v2887
        %v2889 = vpop.f32.mrb[0].mxu0
        %2890 = vdwg.mxu0
        %2891 = vmatprep.subr.mxu0 0.0
        %v2892 = vand.u32 %v411, 4294901760
        %v2893 = vsub.f32 %v411, %v2892
        %v2894 = vand.u32 %v2893, 4294901760
        %v2895 = vsub.f32 %v2893, %v2894
        %v2896 = vand.u32 %v2895, 4294901760
        %2897 = vmatpush1.msra.mxu0 %v2896
        %2898 = vmatprep.subr.mxu0 0.0
        %v2899 = vand.u32 %v412, 4294901760
        %v2900 = vsub.f32 %v412, %v2899
        %v2901 = vand.u32 %v2900, 4294901760
        %v2902 = vsub.f32 %v2900, %v2901
        %v2903 = vand.u32 %v2902, 4294901760
        %2904 = vmatpush1.msra.mxu0 %v2903
        %2905 = vmatprep.subr.mxu0 0.0
        %2906 = vmatpush1.msra.mxu0 0.0
        %2907 = vmatprep.subr.mxu0 0.0
        %2908 = vmatpush1.msra.mxu0 0.0
        %2909 = vmatprep.subr.mxu0 0.0
        %2910 = vmatpush1.msra.mxu0 0.0
        %2911 = vmatprep.subr.mxu0 0.0
        %2912 = vmatpush1.msra.mxu0 0.0
        %2913 = vmatprep.subr.mxu0 0.0
        %2914 = vmatpush1.msra.mxu0 0.0
        %2915 = vmatprep.subr.mxu0 0.0
        %2916 = vmatpush1.msra.mxu0 0.0
        %2917 = vmatprep.subr.mxu0 0.0
        %2918 = vmatpush1.msra.mxu0 0.0
        %2919 = vmatprep.subr.mxu0 0.0
        %2920 = vmatpush1.msra.mxu0 0.0
        %2921 = vmatprep.subr.mxu0 0.0
        %2922 = vmatpush1.msra.mxu0 0.0
        %2923 = vmatprep.subr.mxu0 0.0
        %2924 = vmatpush1.msra.mxu0 0.0
        %2925 = vmatprep.subr.mxu0 0.0
        %2926 = vmatpush1.msra.mxu0 0.0
        %2927 = vmatprep.subr.mxu0 0.0
        %2928 = vmatpush1.msra.mxu0 0.0
        %2929 = vmatprep.subr.mxu0 0.0
        %2930 = vmatpush1.msra.mxu0 0.0
        %2931 = vmatprep.subr.mxu0 0.0
        %2932 = vmatpush1.msra.mxu0 0.0
        %2933 = vmatprep.subr.mxu0 0.0
        %2934 = vmatpush1.msra.mxu0 0.0
        %2935 = vmatprep.subr.mxu0 0.0
        %2936 = vmatpush1.msra.mxu0 0.0
        %2937 = vmatprep.subr.mxu0 0.0
        %2938 = vmatpush1.msra.mxu0 0.0
        %2939 = vmatprep.subr.mxu0 0.0
        %2940 = vmatpush1.msra.mxu0 0.0
        %2941 = vmatprep.subr.mxu0 0.0
        %2942 = vmatpush1.msra.mxu0 0.0
        %2943 = vmatprep.subr.mxu0 0.0
        %2944 = vmatpush1.msra.mxu0 0.0
        %2945 = vmatprep.subr.mxu0 0.0
        %2946 = vmatpush1.msra.mxu0 0.0
        %2947 = vmatprep.subr.mxu0 0.0
        %2948 = vmatpush1.msra.mxu0 0.0
        %2949 = vmatprep.subr.mxu0 0.0
        %2950 = vmatpush1.msra.mxu0 0.0
        %2951 = vmatprep.subr.mxu0 0.0
        %2952 = vmatpush1.msra.mxu0 0.0
        %2953 = vmatprep.subr.mxu0 0.0
        %2954 = vmatpush1.msra.mxu0 0.0
        %2955 = vmatprep.subr.mxu0 0.0
        %2956 = vmatpush1.msra.mxu0 0.0
        %2957 = vmatprep.subr.mxu0 0.0
        %2958 = vmatpush1.msra.mxu0 0.0
        %2959 = vmatprep.subr.mxu0 0.0
        %2960 = vmatpush1.msra.mxu0 0.0
        %2961 = vmatprep.subr.mxu0 0.0
        %2962 = vmatpush1.msra.mxu0 0.0
        %2963 = vmatprep.subr.mxu0 0.0
        %2964 = vmatpush1.msra.mxu0 0.0
        %2965 = vmatprep.mubr.f32.mxu0 0.0
        %v2966 = vand.u32 %v2799, 4294901760
        %2967 = vmatmul.mubr.f32.gmra.mrb[0].mxu0 %v2966
        %v2968 = vpop.f32.mrb[0].mxu0
        %v2969 = vadd.f32 %v2878, %v2968
        %v2970 = vpop.f32.mrb[0].mxu0
        %2971 = vmatprep.mubr.f32.mxu0 0.0
        %v2972 = vand.u32 %v2802, 4294901760
        %2973 = vmatmul.mubr.f32.gmra.mrb[0].mxu0 %v2972
        %v2974 = vpop.f32.mrb[0].mxu0
        %v2975 = vadd.f32 %v2888, %v2974
        %v2976 = vpop.f32.mrb[0].mxu0
        %2977 = vdwg.mxu0
        %2978 = vmatprep.subr.mxu0 0.0
        %v2979 = vand.u32 %v411, 4294901760
        %v2980 = vsub.f32 %v411, %v2979
        %2981 = vmatpush1.msra.mxu0 %v2980
        %2982 = vmatprep.subr.mxu0 0.0
        %v2983 = vand.u32 %v412, 4294901760
        %v2984 = vsub.f32 %v412, %v2983
        %2985 = vmatpush1.msra.mxu0 %v2984
        %2986 = vmatprep.subr.mxu0 0.0
        %2987 = vmatpush1.msra.mxu0 0.0
        %2988 = vmatprep.subr.mxu0 0.0
        %2989 = vmatpush1.msra.mxu0 0.0
        %2990 = vmatprep.subr.mxu0 0.0
        %2991 = vmatpush1.msra.mxu0 0.0
        %2992 = vmatprep.subr.mxu0 0.0
        %2993 = vmatpush1.msra.mxu0 0.0
        %2994 = vmatprep.subr.mxu0 0.0
        %2995 = vmatpush1.msra.mxu0 0.0
        %2996 = vmatprep.subr.mxu0 0.0
        %2997 = vmatpush1.msra.mxu0 0.0
        %2998 = vmatprep.subr.mxu0 0.0
        %2999 = vmatpush1.msra.mxu0 0.0
        %3000 = vmatprep.subr.mxu0 0.0
        %3001 = vmatpush1.msra.mxu0 0.0
        %3002 = vmatprep.subr.mxu0 0.0
        %3003 = vmatpush1.msra.mxu0 0.0
        %3004 = vmatprep.subr.mxu0 0.0
        %3005 = vmatpush1.msra.mxu0 0.0
        %3006 = vmatprep.subr.mxu0 0.0
        %3007 = vmatpush1.msra.mxu0 0.0
        %3008 = vmatprep.subr.mxu0 0.0
        %3009 = vmatpush1.msra.mxu0 0.0
        %3010 = vmatprep.subr.mxu0 0.0
        %3011 = vmatpush1.msra.mxu0 0.0
        %3012 = vmatprep.subr.mxu0 0.0
        %3013 = vmatpush1.msra.mxu0 0.0
        %3014 = vmatprep.subr.mxu0 0.0
        %3015 = vmatpush1.msra.mxu0 0.0
        %3016 = vmatprep.subr.mxu0 0.0
        %3017 = vmatpush1.msra.mxu0 0.0
        %3018 = vmatprep.subr.mxu0 0.0
        %3019 = vmatpush1.msra.mxu0 0.0
        %3020 = vmatprep.subr.mxu0 0.0
        %3021 = vmatpush1.msra.mxu0 0.0
        %3022 = vmatprep.subr.mxu0 0.0
        %3023 = vmatpush1.msra.mxu0 0.0
        %3024 = vmatprep.subr.mxu0 0.0
        %3025 = vmatpush1.msra.mxu0 0.0
        %3026 = vmatprep.subr.mxu0 0.0
        %3027 = vmatpush1.msra.mxu0 0.0
        %3028 = vmatprep.subr.mxu0 0.0
        %3029 = vmatpush1.msra.mxu0 0.0
        %3030 = vmatprep.subr.mxu0 0.0
        %3031 = vmatpush1.msra.mxu0 0.0
        %3032 = vmatprep.subr.mxu0 0.0
        %3033 = vmatpush1.msra.mxu0 0.0
        %3034 = vmatprep.subr.mxu0 0.0
        %3035 = vmatpush1.msra.mxu0 0.0
        %3036 = vmatprep.subr.mxu0 0.0
        %3037 = vmatpush1.msra.mxu0 0.0
        %3038 = vmatprep.subr.mxu0 0.0
        %3039 = vmatpush1.msra.mxu0 0.0
        %3040 = vmatprep.subr.mxu0 0.0
        %3041 = vmatpush1.msra.mxu0 0.0
        %3042 = vmatprep.subr.mxu0 0.0
        %3043 = vmatpush1.msra.mxu0 0.0
        %3044 = vmatprep.subr.mxu0 0.0
        %3045 = vmatpush1.msra.mxu0 0.0
        %3046 = vmatprep.mubr.f32.mxu0 0.0
        %v3047 = vand.u32 %v2799, 4294901760
        %v3048 = vsub.f32 %v2799, %v3047
        %3049 = vmatmul.mubr.f32.gmra.mrb[0].mxu0 %v3048
        %v3050 = vpop.f32.mrb[0].mxu0
        %v3051 = vadd.f32 %v2969, %v3050
        %v3052 = vpop.f32.mrb[0].mxu0
        %3053 = vmatprep.mubr.f32.mxu0 0.0
        %v3054 = vand.u32 %v2802, 4294901760
        %v3055 = vsub.f32 %v2802, %v3054
        %3056 = vmatmul.mubr.f32.gmra.mrb[0].mxu0 %v3055
        %v3057 = vpop.f32.mrb[0].mxu0
        %v3058 = vadd.f32 %v2975, %v3057
        %v3059 = vpop.f32.mrb[0].mxu0
        %3060 = vdwg.mxu0
        %3061 = vmatprep.subr.mxu0 0.0
        %v3062 = vand.u32 %v411, 4294901760
        %3063 = vmatpush1.msra.mxu0 %v3062
        %3064 = vmatprep.subr.mxu0 0.0
        %v3065 = vand.u32 %v412, 4294901760
        %3066 = vmatpush1.msra.mxu0 %v3065
        %3067 = vmatprep.subr.mxu0 0.0
        %3068 = vmatpush1.msra.mxu0 0.0
        %3069 = vmatprep.subr.mxu0 0.0
        %3070 = vmatpush1.msra.mxu0 0.0
        %3071 = vmatprep.subr.mxu0 0.0
        %3072 = vmatpush1.msra.mxu0 0.0
        %3073 = vmatprep.subr.mxu0 0.0
        %3074 = vmatpush1.msra.mxu0 0.0
        %3075 = vmatprep.subr.mxu0 0.0
        %3076 = vmatpush1.msra.mxu0 0.0
        %3077 = vmatprep.subr.mxu0 0.0
        %3078 = vmatpush1.msra.mxu0 0.0
        %3079 = vmatprep.subr.mxu0 0.0
        %3080 = vmatpush1.msra.mxu0 0.0
        %3081 = vmatprep.subr.mxu0 0.0
        %3082 = vmatpush1.msra.mxu0 0.0
        %3083 = vmatprep.subr.mxu0 0.0
        %3084 = vmatpush1.msra.mxu0 0.0
        %3085 = vmatprep.subr.mxu0 0.0
        %3086 = vmatpush1.msra.mxu0 0.0
        %3087 = vmatprep.subr.mxu0 0.0
        %3088 = vmatpush1.msra.mxu0 0.0
        %3089 = vmatprep.subr.mxu0 0.0
        %3090 = vmatpush1.msra.mxu0 0.0
        %3091 = vmatprep.subr.mxu0 0.0
        %3092 = vmatpush1.msra.mxu0 0.0
        %3093 = vmatprep.subr.mxu0 0.0
        %3094 = vmatpush1.msra.mxu0 0.0
        %3095 = vmatprep.subr.mxu0 0.0
        %3096 = vmatpush1.msra.mxu0 0.0
        %3097 = vmatprep.subr.mxu0 0.0
        %3098 = vmatpush1.msra.mxu0 0.0
        %3099 = vmatprep.subr.mxu0 0.0
        %3100 = vmatpush1.msra.mxu0 0.0
        %3101 = vmatprep.subr.mxu0 0.0
        %3102 = vmatpush1.msra.mxu0 0.0
        %3103 = vmatprep.subr.mxu0 0.0
        %3104 = vmatpush1.msra.mxu0 0.0
        %3105 = vmatprep.subr.mxu0 0.0
        %3106 = vmatpush1.msra.mxu0 0.0
        %3107 = vmatprep.subr.mxu0 0.0
        %3108 = vmatpush1.msra.mxu0 0.0
        %3109 = vmatprep.subr.mxu0 0.0
        %3110 = vmatpush1.msra.mxu0 0.0
        %3111 = vmatprep.subr.mxu0 0.0
        %3112 = vmatpush1.msra.mxu0 0.0
        %3113 = vmatprep.subr.mxu0 0.0
        %3114 = vmatpush1.msra.mxu0 0.0
        %3115 = vmatprep.subr.mxu0 0.0
        %3116 = vmatpush1.msra.mxu0 0.0
        %3117 = vmatprep.subr.mxu0 0.0
        %3118 = vmatpush1.msra.mxu0 0.0
        %3119 = vmatprep.subr.mxu0 0.0
        %3120 = vmatpush1.msra.mxu0 0.0
        %3121 = vmatprep.subr.mxu0 0.0
        %3122 = vmatpush1.msra.mxu0 0.0
        %3123 = vmatprep.subr.mxu0 0.0
        %3124 = vmatpush1.msra.mxu0 0.0
        %3125 = vmatprep.subr.mxu0 0.0
        %3126 = vmatpush1.msra.mxu0 0.0
        %3127 = vmatprep.mubr.f32.mxu0 0.0
        %v3128 = vand.u32 %v2799, 4294901760
        %v3129 = vsub.f32 %v2799, %v3128
        %v3130 = vand.u32 %v3129, 4294901760
        %3131 = vmatmul.mubr.f32.gmra.mrb[0].mxu0 %v3130
        %v3132 = vpop.f32.mrb[0].mxu0
        %v3133 = vadd.f32 %v3051, %v3132
        %v3134 = vpop.f32.mrb[0].mxu0
        %3135 = vmatprep.mubr.f32.mxu0 0.0
        %v3136 = vand.u32 %v2802, 4294901760
        %v3137 = vsub.f32 %v2802, %v3136
        %v3138 = vand.u32 %v3137, 4294901760
        %3139 = vmatmul.mubr.f32.gmra.mrb[0].mxu0 %v3138
        %v3140 = vpop.f32.mrb[0].mxu0
        %v3141 = vadd.f32 %v3058, %v3140
        %v3142 = vpop.f32.mrb[0].mxu0
        %3143 = vdwg.mxu0
        %3144 = vmatprep.subr.mxu0 0.0
        %v3145 = vand.u32 %v411, 4294901760
        %v3146 = vsub.f32 %v411, %v3145
        %v3147 = vand.u32 %v3146, 4294901760
        %3148 = vmatpush1.msra.mxu0 %v3147
        %3149 = vmatprep.subr.mxu0 0.0
        %v3150 = vand.u32 %v412, 4294901760
        %v3151 = vsub.f32 %v412, %v3150
        %v3152 = vand.u32 %v3151, 4294901760
        %3153 = vmatpush1.msra.mxu0 %v3152
        %3154 = vmatprep.subr.mxu0 0.0
        %3155 = vmatpush1.msra.mxu0 0.0
        %3156 = vmatprep.subr.mxu0 0.0
        %3157 = vmatpush1.msra.mxu0 0.0
        %3158 = vmatprep.subr.mxu0 0.0
        %3159 = vmatpush1.msra.mxu0 0.0
        %3160 = vmatprep.subr.mxu0 0.0
        %3161 = vmatpush1.msra.mxu0 0.0
        %3162 = vmatprep.subr.mxu0 0.0
        %3163 = vmatpush1.msra.mxu0 0.0
        %3164 = vmatprep.subr.mxu0 0.0
        %3165 = vmatpush1.msra.mxu0 0.0
        %3166 = vmatprep.subr.mxu0 0.0
        %3167 = vmatpush1.msra.mxu0 0.0
        %3168 = vmatprep.subr.mxu0 0.0
        %3169 = vmatpush1.msra.mxu0 0.0
        %3170 = vmatprep.subr.mxu0 0.0
        %3171 = vmatpush1.msra.mxu0 0.0
        %3172 = vmatprep.subr.mxu0 0.0
        %3173 = vmatpush1.msra.mxu0 0.0
        %3174 = vmatprep.subr.mxu0 0.0
        %3175 = vmatpush1.msra.mxu0 0.0
        %3176 = vmatprep.subr.mxu0 0.0
        %3177 = vmatpush1.msra.mxu0 0.0
        %3178 = vmatprep.subr.mxu0 0.0
        %3179 = vmatpush1.msra.mxu0 0.0
        %3180 = vmatprep.subr.mxu0 0.0
        %3181 = vmatpush1.msra.mxu0 0.0
        %3182 = vmatprep.subr.mxu0 0.0
        %3183 = vmatpush1.msra.mxu0 0.0
        %3184 = vmatprep.subr.mxu0 0.0
        %3185 = vmatpush1.msra.mxu0 0.0
        %3186 = vmatprep.subr.mxu0 0.0
        %3187 = vmatpush1.msra.mxu0 0.0
        %3188 = vmatprep.subr.mxu0 0.0
        %3189 = vmatpush1.msra.mxu0 0.0
        %3190 = vmatprep.subr.mxu0 0.0
        %3191 = vmatpush1.msra.mxu0 0.0
        %3192 = vmatprep.subr.mxu0 0.0
        %3193 = vmatpush1.msra.mxu0 0.0
        %3194 = vmatprep.subr.mxu0 0.0
        %3195 = vmatpush1.msra.mxu0 0.0
        %3196 = vmatprep.subr.mxu0 0.0
        %3197 = vmatpush1.msra.mxu0 0.0
        %3198 = vmatprep.subr.mxu0 0.0
        %3199 = vmatpush1.msra.mxu0 0.0
        %3200 = vmatprep.subr.mxu0 0.0
        %3201 = vmatpush1.msra.mxu0 0.0
        %3202 = vmatprep.subr.mxu0 0.0
        %3203 = vmatpush1.msra.mxu0 0.0
        %3204 = vmatprep.subr.mxu0 0.0
        %3205 = vmatpush1.msra.mxu0 0.0
        %3206 = vmatprep.subr.mxu0 0.0
        %3207 = vmatpush1.msra.mxu0 0.0
        %3208 = vmatprep.subr.mxu0 0.0
        %3209 = vmatpush1.msra.mxu0 0.0
        %3210 = vmatprep.subr.mxu0 0.0
        %3211 = vmatpush1.msra.mxu0 0.0
        %3212 = vmatprep.subr.mxu0 0.0
        %3213 = vmatpush1.msra.mxu0 0.0
        %3214 = vmatprep.mubr.f32.mxu0 0.0
        %v3215 = vand.u32 %v2799, 4294901760
        %3216 = vmatmul.mubr.f32.gmra.mrb[0].mxu0 %v3215
        %v3217 = vpop.f32.mrb[0].mxu0
        %v3218 = vadd.f32 %v3133, %v3217
        %v3219 = vpop.f32.mrb[0].mxu0
        %3220 = vmatprep.mubr.f32.mxu0 0.0
        %v3221 = vand.u32 %v2802, 4294901760
        %3222 = vmatmul.mubr.f32.gmra.mrb[0].mxu0 %v3221
        %v3223 = vpop.f32.mrb[0].mxu0
        %v3224 = vadd.f32 %v3141, %v3223
        %v3225 = vpop.f32.mrb[0].mxu0
        %3226 = vdwg.mxu0
        %3227 = vmatprep.subr.mxu0 0.0
        %v3228 = vand.u32 %v411, 4294901760
        %3229 = vmatpush1.msra.mxu0 %v3228
        %3230 = vmatprep.subr.mxu0 0.0
        %v3231 = vand.u32 %v412, 4294901760
        %3232 = vmatpush1.msra.mxu0 %v3231
        %3233 = vmatprep.subr.mxu0 0.0
        %3234 = vmatpush1.msra.mxu0 0.0
        %3235 = vmatprep.subr.mxu0 0.0
        %3236 = vmatpush1.msra.mxu0 0.0
        %3237 = vmatprep.subr.mxu0 0.0
        %3238 = vmatpush1.msra.mxu0 0.0
        %3239 = vmatprep.subr.mxu0 0.0
        %3240 = vmatpush1.msra.mxu0 0.0
        %3241 = vmatprep.subr.mxu0 0.0
        %3242 = vmatpush1.msra.mxu0 0.0
        %3243 = vmatprep.subr.mxu0 0.0
        %3244 = vmatpush1.msra.mxu0 0.0
        %3245 = vmatprep.subr.mxu0 0.0
        %3246 = vmatpush1.msra.mxu0 0.0
        %3247 = vmatprep.subr.mxu0 0.0
        %3248 = vmatpush1.msra.mxu0 0.0
        %3249 = vmatprep.subr.mxu0 0.0
        %3250 = vmatpush1.msra.mxu0 0.0
        %3251 = vmatprep.subr.mxu0 0.0
        %3252 = vmatpush1.msra.mxu0 0.0
        %3253 = vmatprep.subr.mxu0 0.0
        %3254 = vmatpush1.msra.mxu0 0.0
        %3255 = vmatprep.subr.mxu0 0.0
        %3256 = vmatpush1.msra.mxu0 0.0
        %3257 = vmatprep.subr.mxu0 0.0
        %3258 = vmatpush1.msra.mxu0 0.0
        %3259 = vmatprep.subr.mxu0 0.0
        %3260 = vmatpush1.msra.mxu0 0.0
        %3261 = vmatprep.subr.mxu0 0.0
        %3262 = vmatpush1.msra.mxu0 0.0
        %3263 = vmatprep.subr.mxu0 0.0
        %3264 = vmatpush1.msra.mxu0 0.0
        %3265 = vmatprep.subr.mxu0 0.0
        %3266 = vmatpush1.msra.mxu0 0.0
        %3267 = vmatprep.subr.mxu0 0.0
        %3268 = vmatpush1.msra.mxu0 0.0
        %3269 = vmatprep.subr.mxu0 0.0
        %3270 = vmatpush1.msra.mxu0 0.0
        %3271 = vmatprep.subr.mxu0 0.0
        %3272 = vmatpush1.msra.mxu0 0.0
        %3273 = vmatprep.subr.mxu0 0.0
        %3274 = vmatpush1.msra.mxu0 0.0
        %3275 = vmatprep.subr.mxu0 0.0
        %3276 = vmatpush1.msra.mxu0 0.0
        %3277 = vmatprep.subr.mxu0 0.0
        %3278 = vmatpush1.msra.mxu0 0.0
        %3279 = vmatprep.subr.mxu0 0.0
        %3280 = vmatpush1.msra.mxu0 0.0
        %3281 = vmatprep.subr.mxu0 0.0
        %3282 = vmatpush1.msra.mxu0 0.0
        %3283 = vmatprep.subr.mxu0 0.0
        %3284 = vmatpush1.msra.mxu0 0.0
        %3285 = vmatprep.subr.mxu0 0.0
        %3286 = vmatpush1.msra.mxu0 0.0
        %3287 = vmatprep.subr.mxu0 0.0
        %3288 = vmatpush1.msra.mxu0 0.0
        %3289 = vmatprep.subr.mxu0 0.0
        %3290 = vmatpush1.msra.mxu0 0.0
        %3291 = vmatprep.subr.mxu0 0.0
        %3292 = vmatpush1.msra.mxu0 0.0
        %3293 = vmatprep.mubr.f32.mxu0 0.0
        %v3294 = vand.u32 %v2799, 4294901760
        %3295 = vmatmul.mubr.f32.gmra.mrb[0].mxu0 %v3294
        %v3296 = vpop.f32.mrb[0].mxu0
        %v3297 = vadd.f32 %v3218, %v3296
        %v3298 = vpop.f32.mrb[0].mxu0
        %3299 = vmatprep.mubr.f32.mxu0 0.0
        %v3300 = vand.u32 %v2802, 4294901760
        %3301 = vmatmul.mubr.f32.gmra.mrb[0].mxu0 %v3300
        %v3302 = vpop.f32.mrb[0].mxu0
        %v3303 = vadd.f32 %v3224, %v3302
        %v3304 = vpop.f32.mrb[0].mxu0
        %3305 = vdwg.mxu0
        %v3307 = vsel %vm2564, %v2674, 0
        %v3310 = vsel %vm2564, %v2676, 0
        %3312 = vmatprep.subr.mxu0 0.0
        %v3313 = vand.u32 %v413, 4294901760
        %3314 = vmatpush1.msra.mxu0 %v3313
        %3315 = vmatprep.subr.mxu0 0.0
        %v3316 = vand.u32 %v414, 4294901760
        %3317 = vmatpush1.msra.mxu0 %v3316
        %3318 = vmatprep.subr.mxu0 0.0
        %3319 = vmatpush1.msra.mxu0 0.0
        %3320 = vmatprep.subr.mxu0 0.0
        %3321 = vmatpush1.msra.mxu0 0.0
        %3322 = vmatprep.subr.mxu0 0.0
        %3323 = vmatpush1.msra.mxu0 0.0
        %3324 = vmatprep.subr.mxu0 0.0
        %3325 = vmatpush1.msra.mxu0 0.0
        %3326 = vmatprep.subr.mxu0 0.0
        %3327 = vmatpush1.msra.mxu0 0.0
        %3328 = vmatprep.subr.mxu0 0.0
        %3329 = vmatpush1.msra.mxu0 0.0
        %3330 = vmatprep.subr.mxu0 0.0
        %3331 = vmatpush1.msra.mxu0 0.0
        %3332 = vmatprep.subr.mxu0 0.0
        %3333 = vmatpush1.msra.mxu0 0.0
        %3334 = vmatprep.subr.mxu0 0.0
        %3335 = vmatpush1.msra.mxu0 0.0
        %3336 = vmatprep.subr.mxu0 0.0
        %3337 = vmatpush1.msra.mxu0 0.0
        %3338 = vmatprep.subr.mxu0 0.0
        %3339 = vmatpush1.msra.mxu0 0.0
        %3340 = vmatprep.subr.mxu0 0.0
        %3341 = vmatpush1.msra.mxu0 0.0
        %3342 = vmatprep.subr.mxu0 0.0
        %3343 = vmatpush1.msra.mxu0 0.0
        %3344 = vmatprep.subr.mxu0 0.0
        %3345 = vmatpush1.msra.mxu0 0.0
        %3346 = vmatprep.subr.mxu0 0.0
        %3347 = vmatpush1.msra.mxu0 0.0
        %3348 = vmatprep.subr.mxu0 0.0
        %3349 = vmatpush1.msra.mxu0 0.0
        %3350 = vmatprep.subr.mxu0 0.0
        %3351 = vmatpush1.msra.mxu0 0.0
        %3352 = vmatprep.subr.mxu0 0.0
        %3353 = vmatpush1.msra.mxu0 0.0
        %3354 = vmatprep.subr.mxu0 0.0
        %3355 = vmatpush1.msra.mxu0 0.0
        %3356 = vmatprep.subr.mxu0 0.0
        %3357 = vmatpush1.msra.mxu0 0.0
        %3358 = vmatprep.subr.mxu0 0.0
        %3359 = vmatpush1.msra.mxu0 0.0
        %3360 = vmatprep.subr.mxu0 0.0
        %3361 = vmatpush1.msra.mxu0 0.0
        %3362 = vmatprep.subr.mxu0 0.0
        %3363 = vmatpush1.msra.mxu0 0.0
        %3364 = vmatprep.subr.mxu0 0.0
        %3365 = vmatpush1.msra.mxu0 0.0
        %3366 = vmatprep.subr.mxu0 0.0
        %3367 = vmatpush1.msra.mxu0 0.0
        %3368 = vmatprep.subr.mxu0 0.0
        %3369 = vmatpush1.msra.mxu0 0.0
        %3370 = vmatprep.subr.mxu0 0.0
        %3371 = vmatpush1.msra.mxu0 0.0
        %3372 = vmatprep.subr.mxu0 0.0
        %3373 = vmatpush1.msra.mxu0 0.0
        %3374 = vmatprep.subr.mxu0 0.0
        %3375 = vmatpush1.msra.mxu0 0.0
        %3376 = vmatprep.subr.mxu0 0.0
        %3377 = vmatpush1.msra.mxu0 0.0
        %3378 = vmatprep.mubr.f32.mxu0 0.0
        %v3379 = vand.u32 %v3307, 4294901760
        %v3380 = vsub.f32 %v3307, %v3379
        %v3381 = vand.u32 %v3380, 4294901760
        %v3382 = vsub.f32 %v3380, %v3381
        %v3383 = vand.u32 %v3382, 4294901760
        %3384 = vmatmul.mubr.f32.gmra.mrb[0].mxu0 %v3383
        %v3385 = vpop.f32.mrb[0].mxu0
        %v3386 = vadd.f32 0.0, %v3385
        %v3387 = vpop.f32.mrb[0].mxu0
        %3388 = vmatprep.mubr.f32.mxu0 0.0
        %v3389 = vand.u32 %v3310, 4294901760
        %v3390 = vsub.f32 %v3310, %v3389
        %v3391 = vand.u32 %v3390, 4294901760
        %v3392 = vsub.f32 %v3390, %v3391
        %v3393 = vand.u32 %v3392, 4294901760
        %3394 = vmatmul.mubr.f32.gmra.mrb[0].mxu0 %v3393
        %v3395 = vpop.f32.mrb[0].mxu0
        %v3396 = vadd.f32 0.0, %v3395
        %v3397 = vpop.f32.mrb[0].mxu0
        %3398 = vdwg.mxu0
        %3399 = vmatprep.subr.mxu0 0.0
        %v3400 = vand.u32 %v413, 4294901760
        %v3401 = vsub.f32 %v413, %v3400
        %v3402 = vand.u32 %v3401, 4294901760
        %v3403 = vsub.f32 %v3401, %v3402
        %v3404 = vand.u32 %v3403, 4294901760
        %3405 = vmatpush1.msra.mxu0 %v3404
        %3406 = vmatprep.subr.mxu0 0.0
        %v3407 = vand.u32 %v414, 4294901760
        %v3408 = vsub.f32 %v414, %v3407
        %v3409 = vand.u32 %v3408, 4294901760
        %v3410 = vsub.f32 %v3408, %v3409
        %v3411 = vand.u32 %v3410, 4294901760
        %3412 = vmatpush1.msra.mxu0 %v3411
        %3413 = vmatprep.subr.mxu0 0.0
        %3414 = vmatpush1.msra.mxu0 0.0
        %3415 = vmatprep.subr.mxu0 0.0
        %3416 = vmatpush1.msra.mxu0 0.0
        %3417 = vmatprep.subr.mxu0 0.0
        %3418 = vmatpush1.msra.mxu0 0.0
        %3419 = vmatprep.subr.mxu0 0.0
        %3420 = vmatpush1.msra.mxu0 0.0
        %3421 = vmatprep.subr.mxu0 0.0
        %3422 = vmatpush1.msra.mxu0 0.0
        %3423 = vmatprep.subr.mxu0 0.0
        %3424 = vmatpush1.msra.mxu0 0.0
        %3425 = vmatprep.subr.mxu0 0.0
        %3426 = vmatpush1.msra.mxu0 0.0
        %3427 = vmatprep.subr.mxu0 0.0
        %3428 = vmatpush1.msra.mxu0 0.0
        %3429 = vmatprep.subr.mxu0 0.0
        %3430 = vmatpush1.msra.mxu0 0.0
        %3431 = vmatprep.subr.mxu0 0.0
        %3432 = vmatpush1.msra.mxu0 0.0
        %3433 = vmatprep.subr.mxu0 0.0
        %3434 = vmatpush1.msra.mxu0 0.0
        %3435 = vmatprep.subr.mxu0 0.0
        %3436 = vmatpush1.msra.mxu0 0.0
        %3437 = vmatprep.subr.mxu0 0.0
        %3438 = vmatpush1.msra.mxu0 0.0
        %3439 = vmatprep.subr.mxu0 0.0
        %3440 = vmatpush1.msra.mxu0 0.0
        %3441 = vmatprep.subr.mxu0 0.0
        %3442 = vmatpush1.msra.mxu0 0.0
        %3443 = vmatprep.subr.mxu0 0.0
        %3444 = vmatpush1.msra.mxu0 0.0
        %3445 = vmatprep.subr.mxu0 0.0
        %3446 = vmatpush1.msra.mxu0 0.0
        %3447 = vmatprep.subr.mxu0 0.0
        %3448 = vmatpush1.msra.mxu0 0.0
        %3449 = vmatprep.subr.mxu0 0.0
        %3450 = vmatpush1.msra.mxu0 0.0
        %3451 = vmatprep.subr.mxu0 0.0
        %3452 = vmatpush1.msra.mxu0 0.0
        %3453 = vmatprep.subr.mxu0 0.0
        %3454 = vmatpush1.msra.mxu0 0.0
        %3455 = vmatprep.subr.mxu0 0.0
        %3456 = vmatpush1.msra.mxu0 0.0
        %3457 = vmatprep.subr.mxu0 0.0
        %3458 = vmatpush1.msra.mxu0 0.0
        %3459 = vmatprep.subr.mxu0 0.0
        %3460 = vmatpush1.msra.mxu0 0.0
        %3461 = vmatprep.subr.mxu0 0.0
        %3462 = vmatpush1.msra.mxu0 0.0
        %3463 = vmatprep.subr.mxu0 0.0
        %3464 = vmatpush1.msra.mxu0 0.0
        %3465 = vmatprep.subr.mxu0 0.0
        %3466 = vmatpush1.msra.mxu0 0.0
        %3467 = vmatprep.subr.mxu0 0.0
        %3468 = vmatpush1.msra.mxu0 0.0
        %3469 = vmatprep.subr.mxu0 0.0
        %3470 = vmatpush1.msra.mxu0 0.0
        %3471 = vmatprep.subr.mxu0 0.0
        %3472 = vmatpush1.msra.mxu0 0.0
        %3473 = vmatprep.mubr.f32.mxu0 0.0
        %v3474 = vand.u32 %v3307, 4294901760
        %3475 = vmatmul.mubr.f32.gmra.mrb[0].mxu0 %v3474
        %v3476 = vpop.f32.mrb[0].mxu0
        %v3477 = vadd.f32 %v3386, %v3476
        %v3478 = vpop.f32.mrb[0].mxu0
        %3479 = vmatprep.mubr.f32.mxu0 0.0
        %v3480 = vand.u32 %v3310, 4294901760
        %3481 = vmatmul.mubr.f32.gmra.mrb[0].mxu0 %v3480
        %v3482 = vpop.f32.mrb[0].mxu0
        %v3483 = vadd.f32 %v3396, %v3482
        %v3484 = vpop.f32.mrb[0].mxu0
        %3485 = vdwg.mxu0
        %3486 = vmatprep.subr.mxu0 0.0
        %v3487 = vand.u32 %v413, 4294901760
        %v3488 = vsub.f32 %v413, %v3487
        %3489 = vmatpush1.msra.mxu0 %v3488
        %3490 = vmatprep.subr.mxu0 0.0
        %v3491 = vand.u32 %v414, 4294901760
        %v3492 = vsub.f32 %v414, %v3491
        %3493 = vmatpush1.msra.mxu0 %v3492
        %3494 = vmatprep.subr.mxu0 0.0
        %3495 = vmatpush1.msra.mxu0 0.0
        %3496 = vmatprep.subr.mxu0 0.0
        %3497 = vmatpush1.msra.mxu0 0.0
        %3498 = vmatprep.subr.mxu0 0.0
        %3499 = vmatpush1.msra.mxu0 0.0
        %3500 = vmatprep.subr.mxu0 0.0
        %3501 = vmatpush1.msra.mxu0 0.0
        %3502 = vmatprep.subr.mxu0 0.0
        %3503 = vmatpush1.msra.mxu0 0.0
        %3504 = vmatprep.subr.mxu0 0.0
        %3505 = vmatpush1.msra.mxu0 0.0
        %3506 = vmatprep.subr.mxu0 0.0
        %3507 = vmatpush1.msra.mxu0 0.0
        %3508 = vmatprep.subr.mxu0 0.0
        %3509 = vmatpush1.msra.mxu0 0.0
        %3510 = vmatprep.subr.mxu0 0.0
        %3511 = vmatpush1.msra.mxu0 0.0
        %3512 = vmatprep.subr.mxu0 0.0
        %3513 = vmatpush1.msra.mxu0 0.0
        %3514 = vmatprep.subr.mxu0 0.0
        %3515 = vmatpush1.msra.mxu0 0.0
        %3516 = vmatprep.subr.mxu0 0.0
        %3517 = vmatpush1.msra.mxu0 0.0
        %3518 = vmatprep.subr.mxu0 0.0
        %3519 = vmatpush1.msra.mxu0 0.0
        %3520 = vmatprep.subr.mxu0 0.0
        %3521 = vmatpush1.msra.mxu0 0.0
        %3522 = vmatprep.subr.mxu0 0.0
        %3523 = vmatpush1.msra.mxu0 0.0
        %3524 = vmatprep.subr.mxu0 0.0
        %3525 = vmatpush1.msra.mxu0 0.0
        %3526 = vmatprep.subr.mxu0 0.0
        %3527 = vmatpush1.msra.mxu0 0.0
        %3528 = vmatprep.subr.mxu0 0.0
        %3529 = vmatpush1.msra.mxu0 0.0
        %3530 = vmatprep.subr.mxu0 0.0
        %3531 = vmatpush1.msra.mxu0 0.0
        %3532 = vmatprep.subr.mxu0 0.0
        %3533 = vmatpush1.msra.mxu0 0.0
        %3534 = vmatprep.subr.mxu0 0.0
        %3535 = vmatpush1.msra.mxu0 0.0
        %3536 = vmatprep.subr.mxu0 0.0
        %3537 = vmatpush1.msra.mxu0 0.0
        %3538 = vmatprep.subr.mxu0 0.0
        %3539 = vmatpush1.msra.mxu0 0.0
        %3540 = vmatprep.subr.mxu0 0.0
        %3541 = vmatpush1.msra.mxu0 0.0
        %3542 = vmatprep.subr.mxu0 0.0
        %3543 = vmatpush1.msra.mxu0 0.0
        %3544 = vmatprep.subr.mxu0 0.0
        %3545 = vmatpush1.msra.mxu0 0.0
        %3546 = vmatprep.subr.mxu0 0.0
        %3547 = vmatpush1.msra.mxu0 0.0
        %3548 = vmatprep.subr.mxu0 0.0
        %3549 = vmatpush1.msra.mxu0 0.0
        %3550 = vmatprep.subr.mxu0 0.0
        %3551 = vmatpush1.msra.mxu0 0.0
        %3552 = vmatprep.subr.mxu0 0.0
        %3553 = vmatpush1.msra.mxu0 0.0
        %3554 = vmatprep.mubr.f32.mxu0 0.0
        %v3555 = vand.u32 %v3307, 4294901760
        %v3556 = vsub.f32 %v3307, %v3555
        %3557 = vmatmul.mubr.f32.gmra.mrb[0].mxu0 %v3556
        %v3558 = vpop.f32.mrb[0].mxu0
        %v3559 = vadd.f32 %v3477, %v3558
        %v3560 = vpop.f32.mrb[0].mxu0
        %3561 = vmatprep.mubr.f32.mxu0 0.0
        %v3562 = vand.u32 %v3310, 4294901760
        %v3563 = vsub.f32 %v3310, %v3562
        %3564 = vmatmul.mubr.f32.gmra.mrb[0].mxu0 %v3563
        %v3565 = vpop.f32.mrb[0].mxu0
        %v3566 = vadd.f32 %v3483, %v3565
        %v3567 = vpop.f32.mrb[0].mxu0
        %3568 = vdwg.mxu0
        %3569 = vmatprep.subr.mxu0 0.0
        %v3570 = vand.u32 %v413, 4294901760
        %3571 = vmatpush1.msra.mxu0 %v3570
        %3572 = vmatprep.subr.mxu0 0.0
        %v3573 = vand.u32 %v414, 4294901760
        %3574 = vmatpush1.msra.mxu0 %v3573
        %3575 = vmatprep.subr.mxu0 0.0
        %3576 = vmatpush1.msra.mxu0 0.0
        %3577 = vmatprep.subr.mxu0 0.0
        %3578 = vmatpush1.msra.mxu0 0.0
        %3579 = vmatprep.subr.mxu0 0.0
        %3580 = vmatpush1.msra.mxu0 0.0
        %3581 = vmatprep.subr.mxu0 0.0
        %3582 = vmatpush1.msra.mxu0 0.0
        %3583 = vmatprep.subr.mxu0 0.0
        %3584 = vmatpush1.msra.mxu0 0.0
        %3585 = vmatprep.subr.mxu0 0.0
        %3586 = vmatpush1.msra.mxu0 0.0
        %3587 = vmatprep.subr.mxu0 0.0
        %3588 = vmatpush1.msra.mxu0 0.0
        %3589 = vmatprep.subr.mxu0 0.0
        %3590 = vmatpush1.msra.mxu0 0.0
        %3591 = vmatprep.subr.mxu0 0.0
        %3592 = vmatpush1.msra.mxu0 0.0
        %3593 = vmatprep.subr.mxu0 0.0
        %3594 = vmatpush1.msra.mxu0 0.0
        %3595 = vmatprep.subr.mxu0 0.0
        %3596 = vmatpush1.msra.mxu0 0.0
        %3597 = vmatprep.subr.mxu0 0.0
        %3598 = vmatpush1.msra.mxu0 0.0
        %3599 = vmatprep.subr.mxu0 0.0
        %3600 = vmatpush1.msra.mxu0 0.0
        %3601 = vmatprep.subr.mxu0 0.0
        %3602 = vmatpush1.msra.mxu0 0.0
        %3603 = vmatprep.subr.mxu0 0.0
        %3604 = vmatpush1.msra.mxu0 0.0
        %3605 = vmatprep.subr.mxu0 0.0
        %3606 = vmatpush1.msra.mxu0 0.0
        %3607 = vmatprep.subr.mxu0 0.0
        %3608 = vmatpush1.msra.mxu0 0.0
        %3609 = vmatprep.subr.mxu0 0.0
        %3610 = vmatpush1.msra.mxu0 0.0
        %3611 = vmatprep.subr.mxu0 0.0
        %3612 = vmatpush1.msra.mxu0 0.0
        %3613 = vmatprep.subr.mxu0 0.0
        %3614 = vmatpush1.msra.mxu0 0.0
        %3615 = vmatprep.subr.mxu0 0.0
        %3616 = vmatpush1.msra.mxu0 0.0
        %3617 = vmatprep.subr.mxu0 0.0
        %3618 = vmatpush1.msra.mxu0 0.0
        %3619 = vmatprep.subr.mxu0 0.0
        %3620 = vmatpush1.msra.mxu0 0.0
        %3621 = vmatprep.subr.mxu0 0.0
        %3622 = vmatpush1.msra.mxu0 0.0
        %3623 = vmatprep.subr.mxu0 0.0
        %3624 = vmatpush1.msra.mxu0 0.0
        %3625 = vmatprep.subr.mxu0 0.0
        %3626 = vmatpush1.msra.mxu0 0.0
        %3627 = vmatprep.subr.mxu0 0.0
        %3628 = vmatpush1.msra.mxu0 0.0
        %3629 = vmatprep.subr.mxu0 0.0
        %3630 = vmatpush1.msra.mxu0 0.0
        %3631 = vmatprep.subr.mxu0 0.0
        %3632 = vmatpush1.msra.mxu0 0.0
        %3633 = vmatprep.subr.mxu0 0.0
        %3634 = vmatpush1.msra.mxu0 0.0
        %3635 = vmatprep.mubr.f32.mxu0 0.0
        %v3636 = vand.u32 %v3307, 4294901760
        %v3637 = vsub.f32 %v3307, %v3636
        %v3638 = vand.u32 %v3637, 4294901760
        %3639 = vmatmul.mubr.f32.gmra.mrb[0].mxu0 %v3638
        %v3640 = vpop.f32.mrb[0].mxu0
        %v3641 = vadd.f32 %v3559, %v3640
        %v3642 = vpop.f32.mrb[0].mxu0
        %3643 = vmatprep.mubr.f32.mxu0 0.0
        %v3644 = vand.u32 %v3310, 4294901760
        %v3645 = vsub.f32 %v3310, %v3644
        %v3646 = vand.u32 %v3645, 4294901760
        %3647 = vmatmul.mubr.f32.gmra.mrb[0].mxu0 %v3646
        %v3648 = vpop.f32.mrb[0].mxu0
        %v3649 = vadd.f32 %v3566, %v3648
        %v3650 = vpop.f32.mrb[0].mxu0
        %3651 = vdwg.mxu0
        %3652 = vmatprep.subr.mxu0 0.0
        %v3653 = vand.u32 %v413, 4294901760
        %v3654 = vsub.f32 %v413, %v3653
        %v3655 = vand.u32 %v3654, 4294901760
        %3656 = vmatpush1.msra.mxu0 %v3655
        %3657 = vmatprep.subr.mxu0 0.0
        %v3658 = vand.u32 %v414, 4294901760
        %v3659 = vsub.f32 %v414, %v3658
        %v3660 = vand.u32 %v3659, 4294901760
        %3661 = vmatpush1.msra.mxu0 %v3660
        %3662 = vmatprep.subr.mxu0 0.0
        %3663 = vmatpush1.msra.mxu0 0.0
        %3664 = vmatprep.subr.mxu0 0.0
        %3665 = vmatpush1.msra.mxu0 0.0
        %3666 = vmatprep.subr.mxu0 0.0
        %3667 = vmatpush1.msra.mxu0 0.0
        %3668 = vmatprep.subr.mxu0 0.0
        %3669 = vmatpush1.msra.mxu0 0.0
        %3670 = vmatprep.subr.mxu0 0.0
        %3671 = vmatpush1.msra.mxu0 0.0
        %3672 = vmatprep.subr.mxu0 0.0
        %3673 = vmatpush1.msra.mxu0 0.0
        %3674 = vmatprep.subr.mxu0 0.0
        %3675 = vmatpush1.msra.mxu0 0.0
        %3676 = vmatprep.subr.mxu0 0.0
        %3677 = vmatpush1.msra.mxu0 0.0
        %3678 = vmatprep.subr.mxu0 0.0
        %3679 = vmatpush1.msra.mxu0 0.0
        %3680 = vmatprep.subr.mxu0 0.0
        %3681 = vmatpush1.msra.mxu0 0.0
        %3682 = vmatprep.subr.mxu0 0.0
        %3683 = vmatpush1.msra.mxu0 0.0
        %3684 = vmatprep.subr.mxu0 0.0
        %3685 = vmatpush1.msra.mxu0 0.0
        %3686 = vmatprep.subr.mxu0 0.0
        %3687 = vmatpush1.msra.mxu0 0.0
        %3688 = vmatprep.subr.mxu0 0.0
        %3689 = vmatpush1.msra.mxu0 0.0
        %3690 = vmatprep.subr.mxu0 0.0
        %3691 = vmatpush1.msra.mxu0 0.0
        %3692 = vmatprep.subr.mxu0 0.0
        %3693 = vmatpush1.msra.mxu0 0.0
        %3694 = vmatprep.subr.mxu0 0.0
        %3695 = vmatpush1.msra.mxu0 0.0
        %3696 = vmatprep.subr.mxu0 0.0
        %3697 = vmatpush1.msra.mxu0 0.0
        %3698 = vmatprep.subr.mxu0 0.0
        %3699 = vmatpush1.msra.mxu0 0.0
        %3700 = vmatprep.subr.mxu0 0.0
        %3701 = vmatpush1.msra.mxu0 0.0
        %3702 = vmatprep.subr.mxu0 0.0
        %3703 = vmatpush1.msra.mxu0 0.0
        %3704 = vmatprep.subr.mxu0 0.0
        %3705 = vmatpush1.msra.mxu0 0.0
        %3706 = vmatprep.subr.mxu0 0.0
        %3707 = vmatpush1.msra.mxu0 0.0
        %3708 = vmatprep.subr.mxu0 0.0
        %3709 = vmatpush1.msra.mxu0 0.0
        %3710 = vmatprep.subr.mxu0 0.0
        %3711 = vmatpush1.msra.mxu0 0.0
        %3712 = vmatprep.subr.mxu0 0.0
        %3713 = vmatpush1.msra.mxu0 0.0
        %3714 = vmatprep.subr.mxu0 0.0
        %3715 = vmatpush1.msra.mxu0 0.0
        %3716 = vmatprep.subr.mxu0 0.0
        %3717 = vmatpush1.msra.mxu0 0.0
        %3718 = vmatprep.subr.mxu0 0.0
        %3719 = vmatpush1.msra.mxu0 0.0
        %3720 = vmatprep.subr.mxu0 0.0
        %3721 = vmatpush1.msra.mxu0 0.0
        %3722 = vmatprep.mubr.f32.mxu0 0.0
        %v3723 = vand.u32 %v3307, 4294901760
        %3724 = vmatmul.mubr.f32.gmra.mrb[0].mxu0 %v3723
        %v3725 = vpop.f32.mrb[0].mxu0
        %v3726 = vadd.f32 %v3641, %v3725
        %v3727 = vpop.f32.mrb[0].mxu0
        %3728 = vmatprep.mubr.f32.mxu0 0.0
        %v3729 = vand.u32 %v3310, 4294901760
        %3730 = vmatmul.mubr.f32.gmra.mrb[0].mxu0 %v3729
        %v3731 = vpop.f32.mrb[0].mxu0
        %v3732 = vadd.f32 %v3649, %v3731
        %v3733 = vpop.f32.mrb[0].mxu0
        %3734 = vdwg.mxu0
        %3735 = vmatprep.subr.mxu0 0.0
        %v3736 = vand.u32 %v413, 4294901760
        %3737 = vmatpush1.msra.mxu0 %v3736
        %3738 = vmatprep.subr.mxu0 0.0
        %v3739 = vand.u32 %v414, 4294901760
        %3740 = vmatpush1.msra.mxu0 %v3739
        %3741 = vmatprep.subr.mxu0 0.0
        %3742 = vmatpush1.msra.mxu0 0.0
        %3743 = vmatprep.subr.mxu0 0.0
        %3744 = vmatpush1.msra.mxu0 0.0
        %3745 = vmatprep.subr.mxu0 0.0
        %3746 = vmatpush1.msra.mxu0 0.0
        %3747 = vmatprep.subr.mxu0 0.0
        %3748 = vmatpush1.msra.mxu0 0.0
        %3749 = vmatprep.subr.mxu0 0.0
        %3750 = vmatpush1.msra.mxu0 0.0
        %3751 = vmatprep.subr.mxu0 0.0
        %3752 = vmatpush1.msra.mxu0 0.0
        %3753 = vmatprep.subr.mxu0 0.0
        %3754 = vmatpush1.msra.mxu0 0.0
        %3755 = vmatprep.subr.mxu0 0.0
        %3756 = vmatpush1.msra.mxu0 0.0
        %3757 = vmatprep.subr.mxu0 0.0
        %3758 = vmatpush1.msra.mxu0 0.0
        %3759 = vmatprep.subr.mxu0 0.0
        %3760 = vmatpush1.msra.mxu0 0.0
        %3761 = vmatprep.subr.mxu0 0.0
        %3762 = vmatpush1.msra.mxu0 0.0
        %3763 = vmatprep.subr.mxu0 0.0
        %3764 = vmatpush1.msra.mxu0 0.0
        %3765 = vmatprep.subr.mxu0 0.0
        %3766 = vmatpush1.msra.mxu0 0.0
        %3767 = vmatprep.subr.mxu0 0.0
        %3768 = vmatpush1.msra.mxu0 0.0
        %3769 = vmatprep.subr.mxu0 0.0
        %3770 = vmatpush1.msra.mxu0 0.0
        %3771 = vmatprep.subr.mxu0 0.0
        %3772 = vmatpush1.msra.mxu0 0.0
        %3773 = vmatprep.subr.mxu0 0.0
        %3774 = vmatpush1.msra.mxu0 0.0
        %3775 = vmatprep.subr.mxu0 0.0
        %3776 = vmatpush1.msra.mxu0 0.0
        %3777 = vmatprep.subr.mxu0 0.0
        %3778 = vmatpush1.msra.mxu0 0.0
        %3779 = vmatprep.subr.mxu0 0.0
        %3780 = vmatpush1.msra.mxu0 0.0
        %3781 = vmatprep.subr.mxu0 0.0
        %3782 = vmatpush1.msra.mxu0 0.0
        %3783 = vmatprep.subr.mxu0 0.0
        %3784 = vmatpush1.msra.mxu0 0.0
        %3785 = vmatprep.subr.mxu0 0.0
        %3786 = vmatpush1.msra.mxu0 0.0
        %3787 = vmatprep.subr.mxu0 0.0
        %3788 = vmatpush1.msra.mxu0 0.0
        %3789 = vmatprep.subr.mxu0 0.0
        %3790 = vmatpush1.msra.mxu0 0.0
        %3791 = vmatprep.subr.mxu0 0.0
        %3792 = vmatpush1.msra.mxu0 0.0
        %3793 = vmatprep.subr.mxu0 0.0
        %3794 = vmatpush1.msra.mxu0 0.0
        %3795 = vmatprep.subr.mxu0 0.0
        %3796 = vmatpush1.msra.mxu0 0.0
        %3797 = vmatprep.subr.mxu0 0.0
        %3798 = vmatpush1.msra.mxu0 0.0
        %3799 = vmatprep.subr.mxu0 0.0
        %3800 = vmatpush1.msra.mxu0 0.0
        %3801 = vmatprep.mubr.f32.mxu0 0.0
        %v3802 = vand.u32 %v3307, 4294901760
        %3803 = vmatmul.mubr.f32.gmra.mrb[0].mxu0 %v3802
        %v3804 = vpop.f32.mrb[0].mxu0
        %v3805 = vadd.f32 %v3726, %v3804
        %v3806 = vpop.f32.mrb[0].mxu0
        %3807 = vmatprep.mubr.f32.mxu0 0.0
        %v3808 = vand.u32 %v3310, 4294901760
        %3809 = vmatmul.mubr.f32.gmra.mrb[0].mxu0 %v3808
        %v3810 = vpop.f32.mrb[0].mxu0
        %v3811 = vadd.f32 %v3732, %v3810
        %v3812 = vpop.f32.mrb[0].mxu0
        %3813 = vdwg.mxu0
        %v3815 = vsel %vm2564, %v2678, 0
        %v3818 = vsel %vm2564, %v2680, 0
        %3820 = vmatprep.subr.mxu0 0.0
        %v3821 = vand.u32 %v415, 4294901760
        %3822 = vmatpush1.msra.mxu0 %v3821
        %3823 = vmatprep.subr.mxu0 0.0
        %v3824 = vand.u32 %v416, 4294901760
        %3825 = vmatpush1.msra.mxu0 %v3824
        %3826 = vmatprep.subr.mxu0 0.0
        %3827 = vmatpush1.msra.mxu0 0.0
        %3828 = vmatprep.subr.mxu0 0.0
        %3829 = vmatpush1.msra.mxu0 0.0
        %3830 = vmatprep.subr.mxu0 0.0
        %3831 = vmatpush1.msra.mxu0 0.0
        %3832 = vmatprep.subr.mxu0 0.0
        %3833 = vmatpush1.msra.mxu0 0.0
        %3834 = vmatprep.subr.mxu0 0.0
        %3835 = vmatpush1.msra.mxu0 0.0
        %3836 = vmatprep.subr.mxu0 0.0
        %3837 = vmatpush1.msra.mxu0 0.0
        %3838 = vmatprep.subr.mxu0 0.0
        %3839 = vmatpush1.msra.mxu0 0.0
        %3840 = vmatprep.subr.mxu0 0.0
        %3841 = vmatpush1.msra.mxu0 0.0
        %3842 = vmatprep.subr.mxu0 0.0
        %3843 = vmatpush1.msra.mxu0 0.0
        %3844 = vmatprep.subr.mxu0 0.0
        %3845 = vmatpush1.msra.mxu0 0.0
        %3846 = vmatprep.subr.mxu0 0.0
        %3847 = vmatpush1.msra.mxu0 0.0
        %3848 = vmatprep.subr.mxu0 0.0
        %3849 = vmatpush1.msra.mxu0 0.0
        %3850 = vmatprep.subr.mxu0 0.0
        %3851 = vmatpush1.msra.mxu0 0.0
        %3852 = vmatprep.subr.mxu0 0.0
        %3853 = vmatpush1.msra.mxu0 0.0
        %3854 = vmatprep.subr.mxu0 0.0
        %3855 = vmatpush1.msra.mxu0 0.0
        %3856 = vmatprep.subr.mxu0 0.0
        %3857 = vmatpush1.msra.mxu0 0.0
        %3858 = vmatprep.subr.mxu0 0.0
        %3859 = vmatpush1.msra.mxu0 0.0
        %3860 = vmatprep.subr.mxu0 0.0
        %3861 = vmatpush1.msra.mxu0 0.0
        %3862 = vmatprep.subr.mxu0 0.0
        %3863 = vmatpush1.msra.mxu0 0.0
        %3864 = vmatprep.subr.mxu0 0.0
        %3865 = vmatpush1.msra.mxu0 0.0
        %3866 = vmatprep.subr.mxu0 0.0
        %3867 = vmatpush1.msra.mxu0 0.0
        %3868 = vmatprep.subr.mxu0 0.0
        %3869 = vmatpush1.msra.mxu0 0.0
        %3870 = vmatprep.subr.mxu0 0.0
        %3871 = vmatpush1.msra.mxu0 0.0
        %3872 = vmatprep.subr.mxu0 0.0
        %3873 = vmatpush1.msra.mxu0 0.0
        %3874 = vmatprep.subr.mxu0 0.0
        %3875 = vmatpush1.msra.mxu0 0.0
        %3876 = vmatprep.subr.mxu0 0.0
        %3877 = vmatpush1.msra.mxu0 0.0
        %3878 = vmatprep.subr.mxu0 0.0
        %3879 = vmatpush1.msra.mxu0 0.0
        %3880 = vmatprep.subr.mxu0 0.0
        %3881 = vmatpush1.msra.mxu0 0.0
        %3882 = vmatprep.subr.mxu0 0.0
        %3883 = vmatpush1.msra.mxu0 0.0
        %3884 = vmatprep.subr.mxu0 0.0
        %3885 = vmatpush1.msra.mxu0 0.0
        %3886 = vmatprep.mubr.f32.mxu0 0.0
        %v3887 = vand.u32 %v3815, 4294901760
        %v3888 = vsub.f32 %v3815, %v3887
        %v3889 = vand.u32 %v3888, 4294901760
        %v3890 = vsub.f32 %v3888, %v3889
        %v3891 = vand.u32 %v3890, 4294901760
        %3892 = vmatmul.mubr.f32.gmra.mrb[0].mxu0 %v3891
        %v3893 = vpop.f32.mrb[0].mxu0
        %v3894 = vadd.f32 0.0, %v3893
        %v3895 = vpop.f32.mrb[0].mxu0
        %3896 = vmatprep.mubr.f32.mxu0 0.0
        %v3897 = vand.u32 %v3818, 4294901760
        %v3898 = vsub.f32 %v3818, %v3897
        %v3899 = vand.u32 %v3898, 4294901760
        %v3900 = vsub.f32 %v3898, %v3899
        %v3901 = vand.u32 %v3900, 4294901760
        %3902 = vmatmul.mubr.f32.gmra.mrb[0].mxu0 %v3901
        %v3903 = vpop.f32.mrb[0].mxu0
        %v3904 = vadd.f32 0.0, %v3903
        %v3905 = vpop.f32.mrb[0].mxu0
        %3906 = vdwg.mxu0
        %3907 = vmatprep.subr.mxu0 0.0
        %v3908 = vand.u32 %v415, 4294901760
        %v3909 = vsub.f32 %v415, %v3908
        %v3910 = vand.u32 %v3909, 4294901760
        %v3911 = vsub.f32 %v3909, %v3910
        %v3912 = vand.u32 %v3911, 4294901760
        %3913 = vmatpush1.msra.mxu0 %v3912
        %3914 = vmatprep.subr.mxu0 0.0
        %v3915 = vand.u32 %v416, 4294901760
        %v3916 = vsub.f32 %v416, %v3915
        %v3917 = vand.u32 %v3916, 4294901760
        %v3918 = vsub.f32 %v3916, %v3917
        %v3919 = vand.u32 %v3918, 4294901760
        %3920 = vmatpush1.msra.mxu0 %v3919
        %3921 = vmatprep.subr.mxu0 0.0
        %3922 = vmatpush1.msra.mxu0 0.0
        %3923 = vmatprep.subr.mxu0 0.0
        %3924 = vmatpush1.msra.mxu0 0.0
        %3925 = vmatprep.subr.mxu0 0.0
        %3926 = vmatpush1.msra.mxu0 0.0
        %3927 = vmatprep.subr.mxu0 0.0
        %3928 = vmatpush1.msra.mxu0 0.0
        %3929 = vmatprep.subr.mxu0 0.0
        %3930 = vmatpush1.msra.mxu0 0.0
        %3931 = vmatprep.subr.mxu0 0.0
        %3932 = vmatpush1.msra.mxu0 0.0
        %3933 = vmatprep.subr.mxu0 0.0
        %3934 = vmatpush1.msra.mxu0 0.0
        %3935 = vmatprep.subr.mxu0 0.0
        %3936 = vmatpush1.msra.mxu0 0.0
        %3937 = vmatprep.subr.mxu0 0.0
        %3938 = vmatpush1.msra.mxu0 0.0
        %3939 = vmatprep.subr.mxu0 0.0
        %3940 = vmatpush1.msra.mxu0 0.0
        %3941 = vmatprep.subr.mxu0 0.0
        %3942 = vmatpush1.msra.mxu0 0.0
        %3943 = vmatprep.subr.mxu0 0.0
        %3944 = vmatpush1.msra.mxu0 0.0
        %3945 = vmatprep.subr.mxu0 0.0
        %3946 = vmatpush1.msra.mxu0 0.0
        %3947 = vmatprep.subr.mxu0 0.0
        %3948 = vmatpush1.msra.mxu0 0.0
        %3949 = vmatprep.subr.mxu0 0.0
        %3950 = vmatpush1.msra.mxu0 0.0
        %3951 = vmatprep.subr.mxu0 0.0
        %3952 = vmatpush1.msra.mxu0 0.0
        %3953 = vmatprep.subr.mxu0 0.0
        %3954 = vmatpush1.msra.mxu0 0.0
        %3955 = vmatprep.subr.mxu0 0.0
        %3956 = vmatpush1.msra.mxu0 0.0
        %3957 = vmatprep.subr.mxu0 0.0
        %3958 = vmatpush1.msra.mxu0 0.0
        %3959 = vmatprep.subr.mxu0 0.0
        %3960 = vmatpush1.msra.mxu0 0.0
        %3961 = vmatprep.subr.mxu0 0.0
        %3962 = vmatpush1.msra.mxu0 0.0
        %3963 = vmatprep.subr.mxu0 0.0
        %3964 = vmatpush1.msra.mxu0 0.0
        %3965 = vmatprep.subr.mxu0 0.0
        %3966 = vmatpush1.msra.mxu0 0.0
        %3967 = vmatprep.subr.mxu0 0.0
        %3968 = vmatpush1.msra.mxu0 0.0
        %3969 = vmatprep.subr.mxu0 0.0
        %3970 = vmatpush1.msra.mxu0 0.0
        %3971 = vmatprep.subr.mxu0 0.0
        %3972 = vmatpush1.msra.mxu0 0.0
        %3973 = vmatprep.subr.mxu0 0.0
        %3974 = vmatpush1.msra.mxu0 0.0
        %3975 = vmatprep.subr.mxu0 0.0
        %3976 = vmatpush1.msra.mxu0 0.0
        %3977 = vmatprep.subr.mxu0 0.0
        %3978 = vmatpush1.msra.mxu0 0.0
        %3979 = vmatprep.subr.mxu0 0.0
        %3980 = vmatpush1.msra.mxu0 0.0
        %3981 = vmatprep.mubr.f32.mxu0 0.0
        %v3982 = vand.u32 %v3815, 4294901760
        %3983 = vmatmul.mubr.f32.gmra.mrb[0].mxu0 %v3982
        %v3984 = vpop.f32.mrb[0].mxu0
        %v3985 = vadd.f32 %v3894, %v3984
        %v3986 = vpop.f32.mrb[0].mxu0
        %3987 = vmatprep.mubr.f32.mxu0 0.0
        %v3988 = vand.u32 %v3818, 4294901760
        %3989 = vmatmul.mubr.f32.gmra.mrb[0].mxu0 %v3988
        %v3990 = vpop.f32.mrb[0].mxu0
        %v3991 = vadd.f32 %v3904, %v3990
        %v3992 = vpop.f32.mrb[0].mxu0
        %3993 = vdwg.mxu0
        %3994 = vmatprep.subr.mxu0 0.0
        %v3995 = vand.u32 %v415, 4294901760
        %v3996 = vsub.f32 %v415, %v3995
        %3997 = vmatpush1.msra.mxu0 %v3996
        %3998 = vmatprep.subr.mxu0 0.0
        %v3999 = vand.u32 %v416, 4294901760
        %v4000 = vsub.f32 %v416, %v3999
        %4001 = vmatpush1.msra.mxu0 %v4000
        %4002 = vmatprep.subr.mxu0 0.0
        %4003 = vmatpush1.msra.mxu0 0.0
        %4004 = vmatprep.subr.mxu0 0.0
        %4005 = vmatpush1.msra.mxu0 0.0
        %4006 = vmatprep.subr.mxu0 0.0
        %4007 = vmatpush1.msra.mxu0 0.0
        %4008 = vmatprep.subr.mxu0 0.0
        %4009 = vmatpush1.msra.mxu0 0.0
        %4010 = vmatprep.subr.mxu0 0.0
        %4011 = vmatpush1.msra.mxu0 0.0
        %4012 = vmatprep.subr.mxu0 0.0
        %4013 = vmatpush1.msra.mxu0 0.0
        %4014 = vmatprep.subr.mxu0 0.0
        %4015 = vmatpush1.msra.mxu0 0.0
        %4016 = vmatprep.subr.mxu0 0.0
        %4017 = vmatpush1.msra.mxu0 0.0
        %4018 = vmatprep.subr.mxu0 0.0
        %4019 = vmatpush1.msra.mxu0 0.0
        %4020 = vmatprep.subr.mxu0 0.0
        %4021 = vmatpush1.msra.mxu0 0.0
        %4022 = vmatprep.subr.mxu0 0.0
        %4023 = vmatpush1.msra.mxu0 0.0
        %4024 = vmatprep.subr.mxu0 0.0
        %4025 = vmatpush1.msra.mxu0 0.0
        %4026 = vmatprep.subr.mxu0 0.0
        %4027 = vmatpush1.msra.mxu0 0.0
        %4028 = vmatprep.subr.mxu0 0.0
        %4029 = vmatpush1.msra.mxu0 0.0
        %4030 = vmatprep.subr.mxu0 0.0
        %4031 = vmatpush1.msra.mxu0 0.0
        %4032 = vmatprep.subr.mxu0 0.0
        %4033 = vmatpush1.msra.mxu0 0.0
        %4034 = vmatprep.subr.mxu0 0.0
        %4035 = vmatpush1.msra.mxu0 0.0
        %4036 = vmatprep.subr.mxu0 0.0
        %4037 = vmatpush1.msra.mxu0 0.0
        %4038 = vmatprep.subr.mxu0 0.0
        %4039 = vmatpush1.msra.mxu0 0.0
        %4040 = vmatprep.subr.mxu0 0.0
        %4041 = vmatpush1.msra.mxu0 0.0
        %4042 = vmatprep.subr.mxu0 0.0
        %4043 = vmatpush1.msra.mxu0 0.0
        %4044 = vmatprep.subr.mxu0 0.0
        %4045 = vmatpush1.msra.mxu0 0.0
        %4046 = vmatprep.subr.mxu0 0.0
        %4047 = vmatpush1.msra.mxu0 0.0
        %4048 = vmatprep.subr.mxu0 0.0
        %4049 = vmatpush1.msra.mxu0 0.0
        %4050 = vmatprep.subr.mxu0 0.0
        %4051 = vmatpush1.msra.mxu0 0.0
        %4052 = vmatprep.subr.mxu0 0.0
        %4053 = vmatpush1.msra.mxu0 0.0
        %4054 = vmatprep.subr.mxu0 0.0
        %4055 = vmatpush1.msra.mxu0 0.0
        %4056 = vmatprep.subr.mxu0 0.0
        %4057 = vmatpush1.msra.mxu0 0.0
        %4058 = vmatprep.subr.mxu0 0.0
        %4059 = vmatpush1.msra.mxu0 0.0
        %4060 = vmatprep.subr.mxu0 0.0
        %4061 = vmatpush1.msra.mxu0 0.0
        %4062 = vmatprep.mubr.f32.mxu0 0.0
        %v4063 = vand.u32 %v3815, 4294901760
        %v4064 = vsub.f32 %v3815, %v4063
        %4065 = vmatmul.mubr.f32.gmra.mrb[0].mxu0 %v4064
        %v4066 = vpop.f32.mrb[0].mxu0
        %v4067 = vadd.f32 %v3985, %v4066
        %v4068 = vpop.f32.mrb[0].mxu0
        %4069 = vmatprep.mubr.f32.mxu0 0.0
        %v4070 = vand.u32 %v3818, 4294901760
        %v4071 = vsub.f32 %v3818, %v4070
        %4072 = vmatmul.mubr.f32.gmra.mrb[0].mxu0 %v4071
        %v4073 = vpop.f32.mrb[0].mxu0
        %v4074 = vadd.f32 %v3991, %v4073
        %v4075 = vpop.f32.mrb[0].mxu0
        %4076 = vdwg.mxu0
        %4077 = vmatprep.subr.mxu0 0.0
        %v4078 = vand.u32 %v415, 4294901760
        %4079 = vmatpush1.msra.mxu0 %v4078
        %4080 = vmatprep.subr.mxu0 0.0
        %v4081 = vand.u32 %v416, 4294901760
        %4082 = vmatpush1.msra.mxu0 %v4081
        %4083 = vmatprep.subr.mxu0 0.0
        %4084 = vmatpush1.msra.mxu0 0.0
        %4085 = vmatprep.subr.mxu0 0.0
        %4086 = vmatpush1.msra.mxu0 0.0
        %4087 = vmatprep.subr.mxu0 0.0
        %4088 = vmatpush1.msra.mxu0 0.0
        %4089 = vmatprep.subr.mxu0 0.0
        %4090 = vmatpush1.msra.mxu0 0.0
        %4091 = vmatprep.subr.mxu0 0.0
        %4092 = vmatpush1.msra.mxu0 0.0
        %4093 = vmatprep.subr.mxu0 0.0
        %4094 = vmatpush1.msra.mxu0 0.0
        %4095 = vmatprep.subr.mxu0 0.0
        %4096 = vmatpush1.msra.mxu0 0.0
        %4097 = vmatprep.subr.mxu0 0.0
        %4098 = vmatpush1.msra.mxu0 0.0
        %4099 = vmatprep.subr.mxu0 0.0
        %4100 = vmatpush1.msra.mxu0 0.0
        %4101 = vmatprep.subr.mxu0 0.0
        %4102 = vmatpush1.msra.mxu0 0.0
        %4103 = vmatprep.subr.mxu0 0.0
        %4104 = vmatpush1.msra.mxu0 0.0
        %4105 = vmatprep.subr.mxu0 0.0
        %4106 = vmatpush1.msra.mxu0 0.0
        %4107 = vmatprep.subr.mxu0 0.0
        %4108 = vmatpush1.msra.mxu0 0.0
        %4109 = vmatprep.subr.mxu0 0.0
        %4110 = vmatpush1.msra.mxu0 0.0
        %4111 = vmatprep.subr.mxu0 0.0
        %4112 = vmatpush1.msra.mxu0 0.0
        %4113 = vmatprep.subr.mxu0 0.0
        %4114 = vmatpush1.msra.mxu0 0.0
        %4115 = vmatprep.subr.mxu0 0.0
        %4116 = vmatpush1.msra.mxu0 0.0
        %4117 = vmatprep.subr.mxu0 0.0
        %4118 = vmatpush1.msra.mxu0 0.0
        %4119 = vmatprep.subr.mxu0 0.0
        %4120 = vmatpush1.msra.mxu0 0.0
        %4121 = vmatprep.subr.mxu0 0.0
        %4122 = vmatpush1.msra.mxu0 0.0
        %4123 = vmatprep.subr.mxu0 0.0
        %4124 = vmatpush1.msra.mxu0 0.0
        %4125 = vmatprep.subr.mxu0 0.0
        %4126 = vmatpush1.msra.mxu0 0.0
        %4127 = vmatprep.subr.mxu0 0.0
        %4128 = vmatpush1.msra.mxu0 0.0
        %4129 = vmatprep.subr.mxu0 0.0
        %4130 = vmatpush1.msra.mxu0 0.0
        %4131 = vmatprep.subr.mxu0 0.0
        %4132 = vmatpush1.msra.mxu0 0.0
        %4133 = vmatprep.subr.mxu0 0.0
        %4134 = vmatpush1.msra.mxu0 0.0
        %4135 = vmatprep.subr.mxu0 0.0
        %4136 = vmatpush1.msra.mxu0 0.0
        %4137 = vmatprep.subr.mxu0 0.0
        %4138 = vmatpush1.msra.mxu0 0.0
        %4139 = vmatprep.subr.mxu0 0.0
        %4140 = vmatpush1.msra.mxu0 0.0
        %4141 = vmatprep.subr.mxu0 0.0
        %4142 = vmatpush1.msra.mxu0 0.0
        %4143 = vmatprep.mubr.f32.mxu0 0.0
        %v4144 = vand.u32 %v3815, 4294901760
        %v4145 = vsub.f32 %v3815, %v4144
        %v4146 = vand.u32 %v4145, 4294901760
        %4147 = vmatmul.mubr.f32.gmra.mrb[0].mxu0 %v4146
        %v4148 = vpop.f32.mrb[0].mxu0
        %v4149 = vadd.f32 %v4067, %v4148
        %v4150 = vpop.f32.mrb[0].mxu0
        %4151 = vmatprep.mubr.f32.mxu0 0.0
        %v4152 = vand.u32 %v3818, 4294901760
        %v4153 = vsub.f32 %v3818, %v4152
        %v4154 = vand.u32 %v4153, 4294901760
        %4155 = vmatmul.mubr.f32.gmra.mrb[0].mxu0 %v4154
        %v4156 = vpop.f32.mrb[0].mxu0
        %v4157 = vadd.f32 %v4074, %v4156
        %v4158 = vpop.f32.mrb[0].mxu0
        %4159 = vdwg.mxu0
        %4160 = vmatprep.subr.mxu0 0.0
        %v4161 = vand.u32 %v415, 4294901760
        %v4162 = vsub.f32 %v415, %v4161
        %v4163 = vand.u32 %v4162, 4294901760
        %4164 = vmatpush1.msra.mxu0 %v4163
        %4165 = vmatprep.subr.mxu0 0.0
        %v4166 = vand.u32 %v416, 4294901760
        %v4167 = vsub.f32 %v416, %v4166
        %v4168 = vand.u32 %v4167, 4294901760
        %4169 = vmatpush1.msra.mxu0 %v4168
        %4170 = vmatprep.subr.mxu0 0.0
        %4171 = vmatpush1.msra.mxu0 0.0
        %4172 = vmatprep.subr.mxu0 0.0
        %4173 = vmatpush1.msra.mxu0 0.0
        %4174 = vmatprep.subr.mxu0 0.0
        %4175 = vmatpush1.msra.mxu0 0.0
        %4176 = vmatprep.subr.mxu0 0.0
        %4177 = vmatpush1.msra.mxu0 0.0
        %4178 = vmatprep.subr.mxu0 0.0
        %4179 = vmatpush1.msra.mxu0 0.0
        %4180 = vmatprep.subr.mxu0 0.0
        %4181 = vmatpush1.msra.mxu0 0.0
        %4182 = vmatprep.subr.mxu0 0.0
        %4183 = vmatpush1.msra.mxu0 0.0
        %4184 = vmatprep.subr.mxu0 0.0
        %4185 = vmatpush1.msra.mxu0 0.0
        %4186 = vmatprep.subr.mxu0 0.0
        %4187 = vmatpush1.msra.mxu0 0.0
        %4188 = vmatprep.subr.mxu0 0.0
        %4189 = vmatpush1.msra.mxu0 0.0
        %4190 = vmatprep.subr.mxu0 0.0
        %4191 = vmatpush1.msra.mxu0 0.0
        %4192 = vmatprep.subr.mxu0 0.0
        %4193 = vmatpush1.msra.mxu0 0.0
        %4194 = vmatprep.subr.mxu0 0.0
        %4195 = vmatpush1.msra.mxu0 0.0
        %4196 = vmatprep.subr.mxu0 0.0
        %4197 = vmatpush1.msra.mxu0 0.0
        %4198 = vmatprep.subr.mxu0 0.0
        %4199 = vmatpush1.msra.mxu0 0.0
        %4200 = vmatprep.subr.mxu0 0.0
        %4201 = vmatpush1.msra.mxu0 0.0
        %4202 = vmatprep.subr.mxu0 0.0
        %4203 = vmatpush1.msra.mxu0 0.0
        %4204 = vmatprep.subr.mxu0 0.0
        %4205 = vmatpush1.msra.mxu0 0.0
        %4206 = vmatprep.subr.mxu0 0.0
        %4207 = vmatpush1.msra.mxu0 0.0
        %4208 = vmatprep.subr.mxu0 0.0
        %4209 = vmatpush1.msra.mxu0 0.0
        %4210 = vmatprep.subr.mxu0 0.0
        %4211 = vmatpush1.msra.mxu0 0.0
        %4212 = vmatprep.subr.mxu0 0.0
        %4213 = vmatpush1.msra.mxu0 0.0
        %4214 = vmatprep.subr.mxu0 0.0
        %4215 = vmatpush1.msra.mxu0 0.0
        %4216 = vmatprep.subr.mxu0 0.0
        %4217 = vmatpush1.msra.mxu0 0.0
        %4218 = vmatprep.subr.mxu0 0.0
        %4219 = vmatpush1.msra.mxu0 0.0
        %4220 = vmatprep.subr.mxu0 0.0
        %4221 = vmatpush1.msra.mxu0 0.0
        %4222 = vmatprep.subr.mxu0 0.0
        %4223 = vmatpush1.msra.mxu0 0.0
        %4224 = vmatprep.subr.mxu0 0.0
        %4225 = vmatpush1.msra.mxu0 0.0
        %4226 = vmatprep.subr.mxu0 0.0
        %4227 = vmatpush1.msra.mxu0 0.0
        %4228 = vmatprep.subr.mxu0 0.0
        %4229 = vmatpush1.msra.mxu0 0.0
        %4230 = vmatprep.mubr.f32.mxu0 0.0
        %v4231 = vand.u32 %v3815, 4294901760
        %4232 = vmatmul.mubr.f32.gmra.mrb[0].mxu0 %v4231
        %v4233 = vpop.f32.mrb[0].mxu0
        %v4234 = vadd.f32 %v4149, %v4233
        %v4235 = vpop.f32.mrb[0].mxu0
        %4236 = vmatprep.mubr.f32.mxu0 0.0
        %v4237 = vand.u32 %v3818, 4294901760
        %4238 = vmatmul.mubr.f32.gmra.mrb[0].mxu0 %v4237
        %v4239 = vpop.f32.mrb[0].mxu0
        %v4240 = vadd.f32 %v4157, %v4239
        %v4241 = vpop.f32.mrb[0].mxu0
        %4242 = vdwg.mxu0
        %4243 = vmatprep.subr.mxu0 0.0
        %v4244 = vand.u32 %v415, 4294901760
        %4245 = vmatpush1.msra.mxu0 %v4244
        %4246 = vmatprep.subr.mxu0 0.0
        %v4247 = vand.u32 %v416, 4294901760
        %4248 = vmatpush1.msra.mxu0 %v4247
        %4249 = vmatprep.subr.mxu0 0.0
        %4250 = vmatpush1.msra.mxu0 0.0
        %4251 = vmatprep.subr.mxu0 0.0
        %4252 = vmatpush1.msra.mxu0 0.0
        %4253 = vmatprep.subr.mxu0 0.0
        %4254 = vmatpush1.msra.mxu0 0.0
        %4255 = vmatprep.subr.mxu0 0.0
        %4256 = vmatpush1.msra.mxu0 0.0
        %4257 = vmatprep.subr.mxu0 0.0
        %4258 = vmatpush1.msra.mxu0 0.0
        %4259 = vmatprep.subr.mxu0 0.0
        %4260 = vmatpush1.msra.mxu0 0.0
        %4261 = vmatprep.subr.mxu0 0.0
        %4262 = vmatpush1.msra.mxu0 0.0
        %4263 = vmatprep.subr.mxu0 0.0
        %4264 = vmatpush1.msra.mxu0 0.0
        %4265 = vmatprep.subr.mxu0 0.0
        %4266 = vmatpush1.msra.mxu0 0.0
        %4267 = vmatprep.subr.mxu0 0.0
        %4268 = vmatpush1.msra.mxu0 0.0
        %4269 = vmatprep.subr.mxu0 0.0
        %4270 = vmatpush1.msra.mxu0 0.0
        %4271 = vmatprep.subr.mxu0 0.0
        %4272 = vmatpush1.msra.mxu0 0.0
        %4273 = vmatprep.subr.mxu0 0.0
        %4274 = vmatpush1.msra.mxu0 0.0
        %4275 = vmatprep.subr.mxu0 0.0
        %4276 = vmatpush1.msra.mxu0 0.0
        %4277 = vmatprep.subr.mxu0 0.0
        %4278 = vmatpush1.msra.mxu0 0.0
        %4279 = vmatprep.subr.mxu0 0.0
        %4280 = vmatpush1.msra.mxu0 0.0
        %4281 = vmatprep.subr.mxu0 0.0
        %4282 = vmatpush1.msra.mxu0 0.0
        %4283 = vmatprep.subr.mxu0 0.0
        %4284 = vmatpush1.msra.mxu0 0.0
        %4285 = vmatprep.subr.mxu0 0.0
        %4286 = vmatpush1.msra.mxu0 0.0
        %4287 = vmatprep.subr.mxu0 0.0
        %4288 = vmatpush1.msra.mxu0 0.0
        %4289 = vmatprep.subr.mxu0 0.0
        %4290 = vmatpush1.msra.mxu0 0.0
        %4291 = vmatprep.subr.mxu0 0.0
        %4292 = vmatpush1.msra.mxu0 0.0
        %4293 = vmatprep.subr.mxu0 0.0
        %4294 = vmatpush1.msra.mxu0 0.0
        %4295 = vmatprep.subr.mxu0 0.0
        %4296 = vmatpush1.msra.mxu0 0.0
        %4297 = vmatprep.subr.mxu0 0.0
        %4298 = vmatpush1.msra.mxu0 0.0
        %4299 = vmatprep.subr.mxu0 0.0
        %4300 = vmatpush1.msra.mxu0 0.0
        %4301 = vmatprep.subr.mxu0 0.0
        %4302 = vmatpush1.msra.mxu0 0.0
        %4303 = vmatprep.subr.mxu0 0.0
        %4304 = vmatpush1.msra.mxu0 0.0
        %4305 = vmatprep.subr.mxu0 0.0
        %4306 = vmatpush1.msra.mxu0 0.0
        %4307 = vmatprep.subr.mxu0 0.0
        %4308 = vmatpush1.msra.mxu0 0.0
        %4309 = vmatprep.mubr.f32.mxu0 0.0
        %v4310 = vand.u32 %v3815, 4294901760
        %4311 = vmatmul.mubr.f32.gmra.mrb[0].mxu0 %v4310
        %v4312 = vpop.f32.mrb[0].mxu0
        %v4313 = vadd.f32 %v4234, %v4312
        %v4314 = vpop.f32.mrb[0].mxu0
        %4315 = vmatprep.mubr.f32.mxu0 0.0
        %v4316 = vand.u32 %v3818, 4294901760
        %4317 = vmatmul.mubr.f32.gmra.mrb[0].mxu0 %v4316
        %v4318 = vpop.f32.mrb[0].mxu0
        %v4319 = vadd.f32 %v4240, %v4318
        %v4320 = vpop.f32.mrb[0].mxu0
        %4321 = vdwg.mxu0
        %v4323 = vsel %vm2564, %v2682, 0
        %v4326 = vsel %vm2564, %v2684, 0
        %4328 = vmatprep.subr.mxu0 0.0
        %v4329 = vand.u32 %v417, 4294901760
        %4330 = vmatpush1.msra.mxu0 %v4329
        %4331 = vmatprep.subr.mxu0 0.0
        %v4332 = vand.u32 %v418, 4294901760
        %4333 = vmatpush1.msra.mxu0 %v4332
        %4334 = vmatprep.subr.mxu0 0.0
        %4335 = vmatpush1.msra.mxu0 0.0
        %4336 = vmatprep.subr.mxu0 0.0
        %4337 = vmatpush1.msra.mxu0 0.0
        %4338 = vmatprep.subr.mxu0 0.0
        %4339 = vmatpush1.msra.mxu0 0.0
        %4340 = vmatprep.subr.mxu0 0.0
        %4341 = vmatpush1.msra.mxu0 0.0
        %4342 = vmatprep.subr.mxu0 0.0
        %4343 = vmatpush1.msra.mxu0 0.0
        %4344 = vmatprep.subr.mxu0 0.0
        %4345 = vmatpush1.msra.mxu0 0.0
        %4346 = vmatprep.subr.mxu0 0.0
        %4347 = vmatpush1.msra.mxu0 0.0
        %4348 = vmatprep.subr.mxu0 0.0
        %4349 = vmatpush1.msra.mxu0 0.0
        %4350 = vmatprep.subr.mxu0 0.0
        %4351 = vmatpush1.msra.mxu0 0.0
        %4352 = vmatprep.subr.mxu0 0.0
        %4353 = vmatpush1.msra.mxu0 0.0
        %4354 = vmatprep.subr.mxu0 0.0
        %4355 = vmatpush1.msra.mxu0 0.0
        %4356 = vmatprep.subr.mxu0 0.0
        %4357 = vmatpush1.msra.mxu0 0.0
        %4358 = vmatprep.subr.mxu0 0.0
        %4359 = vmatpush1.msra.mxu0 0.0
        %4360 = vmatprep.subr.mxu0 0.0
        %4361 = vmatpush1.msra.mxu0 0.0
        %4362 = vmatprep.subr.mxu0 0.0
        %4363 = vmatpush1.msra.mxu0 0.0
        %4364 = vmatprep.subr.mxu0 0.0
        %4365 = vmatpush1.msra.mxu0 0.0
        %4366 = vmatprep.subr.mxu0 0.0
        %4367 = vmatpush1.msra.mxu0 0.0
        %4368 = vmatprep.subr.mxu0 0.0
        %4369 = vmatpush1.msra.mxu0 0.0
        %4370 = vmatprep.subr.mxu0 0.0
        %4371 = vmatpush1.msra.mxu0 0.0
        %4372 = vmatprep.subr.mxu0 0.0
        %4373 = vmatpush1.msra.mxu0 0.0
        %4374 = vmatprep.subr.mxu0 0.0
        %4375 = vmatpush1.msra.mxu0 0.0
        %4376 = vmatprep.subr.mxu0 0.0
        %4377 = vmatpush1.msra.mxu0 0.0
        %4378 = vmatprep.subr.mxu0 0.0
        %4379 = vmatpush1.msra.mxu0 0.0
        %4380 = vmatprep.subr.mxu0 0.0
        %4381 = vmatpush1.msra.mxu0 0.0
        %4382 = vmatprep.subr.mxu0 0.0
        %4383 = vmatpush1.msra.mxu0 0.0
        %4384 = vmatprep.subr.mxu0 0.0
        %4385 = vmatpush1.msra.mxu0 0.0
        %4386 = vmatprep.subr.mxu0 0.0
        %4387 = vmatpush1.msra.mxu0 0.0
        %4388 = vmatprep.subr.mxu0 0.0
        %4389 = vmatpush1.msra.mxu0 0.0
        %4390 = vmatprep.subr.mxu0 0.0
        %4391 = vmatpush1.msra.mxu0 0.0
        %4392 = vmatprep.subr.mxu0 0.0
        %4393 = vmatpush1.msra.mxu0 0.0
        %4394 = vmatprep.mubr.f32.mxu0 0.0
        %v4395 = vand.u32 %v4323, 4294901760
        %v4396 = vsub.f32 %v4323, %v4395
        %v4397 = vand.u32 %v4396, 4294901760
        %v4398 = vsub.f32 %v4396, %v4397
        %v4399 = vand.u32 %v4398, 4294901760
        %4400 = vmatmul.mubr.f32.gmra.mrb[0].mxu0 %v4399
        %v4401 = vpop.f32.mrb[0].mxu0
        %v4402 = vadd.f32 0.0, %v4401
        %v4403 = vpop.f32.mrb[0].mxu0
        %4404 = vmatprep.mubr.f32.mxu0 0.0
        %v4405 = vand.u32 %v4326, 4294901760
        %v4406 = vsub.f32 %v4326, %v4405
        %v4407 = vand.u32 %v4406, 4294901760
        %v4408 = vsub.f32 %v4406, %v4407
        %v4409 = vand.u32 %v4408, 4294901760
        %4410 = vmatmul.mubr.f32.gmra.mrb[0].mxu0 %v4409
        %v4411 = vpop.f32.mrb[0].mxu0
        %v4412 = vadd.f32 0.0, %v4411
        %v4413 = vpop.f32.mrb[0].mxu0
        %4414 = vdwg.mxu0
        %4415 = vmatprep.subr.mxu0 0.0
        %v4416 = vand.u32 %v417, 4294901760
        %v4417 = vsub.f32 %v417, %v4416
        %v4418 = vand.u32 %v4417, 4294901760
        %v4419 = vsub.f32 %v4417, %v4418
        %v4420 = vand.u32 %v4419, 4294901760
        %4421 = vmatpush1.msra.mxu0 %v4420
        %4422 = vmatprep.subr.mxu0 0.0
        %v4423 = vand.u32 %v418, 4294901760
        %v4424 = vsub.f32 %v418, %v4423
        %v4425 = vand.u32 %v4424, 4294901760
        %v4426 = vsub.f32 %v4424, %v4425
        %v4427 = vand.u32 %v4426, 4294901760
        %4428 = vmatpush1.msra.mxu0 %v4427
        %4429 = vmatprep.subr.mxu0 0.0
        %4430 = vmatpush1.msra.mxu0 0.0
        %4431 = vmatprep.subr.mxu0 0.0
        %4432 = vmatpush1.msra.mxu0 0.0
        %4433 = vmatprep.subr.mxu0 0.0
        %4434 = vmatpush1.msra.mxu0 0.0
        %4435 = vmatprep.subr.mxu0 0.0
        %4436 = vmatpush1.msra.mxu0 0.0
        %4437 = vmatprep.subr.mxu0 0.0
        %4438 = vmatpush1.msra.mxu0 0.0
        %4439 = vmatprep.subr.mxu0 0.0
        %4440 = vmatpush1.msra.mxu0 0.0
        %4441 = vmatprep.subr.mxu0 0.0
        %4442 = vmatpush1.msra.mxu0 0.0
        %4443 = vmatprep.subr.mxu0 0.0
        %4444 = vmatpush1.msra.mxu0 0.0
        %4445 = vmatprep.subr.mxu0 0.0
        %4446 = vmatpush1.msra.mxu0 0.0
        %4447 = vmatprep.subr.mxu0 0.0
        %4448 = vmatpush1.msra.mxu0 0.0
        %4449 = vmatprep.subr.mxu0 0.0
        %4450 = vmatpush1.msra.mxu0 0.0
        %4451 = vmatprep.subr.mxu0 0.0
        %4452 = vmatpush1.msra.mxu0 0.0
        %4453 = vmatprep.subr.mxu0 0.0
        %4454 = vmatpush1.msra.mxu0 0.0
        %4455 = vmatprep.subr.mxu0 0.0
        %4456 = vmatpush1.msra.mxu0 0.0
        %4457 = vmatprep.subr.mxu0 0.0
        %4458 = vmatpush1.msra.mxu0 0.0
        %4459 = vmatprep.subr.mxu0 0.0
        %4460 = vmatpush1.msra.mxu0 0.0
        %4461 = vmatprep.subr.mxu0 0.0
        %4462 = vmatpush1.msra.mxu0 0.0
        %4463 = vmatprep.subr.mxu0 0.0
        %4464 = vmatpush1.msra.mxu0 0.0
        %4465 = vmatprep.subr.mxu0 0.0
        %4466 = vmatpush1.msra.mxu0 0.0
        %4467 = vmatprep.subr.mxu0 0.0
        %4468 = vmatpush1.msra.mxu0 0.0
        %4469 = vmatprep.subr.mxu0 0.0
        %4470 = vmatpush1.msra.mxu0 0.0
        %4471 = vmatprep.subr.mxu0 0.0
        %4472 = vmatpush1.msra.mxu0 0.0
        %4473 = vmatprep.subr.mxu0 0.0
        %4474 = vmatpush1.msra.mxu0 0.0
        %4475 = vmatprep.subr.mxu0 0.0
        %4476 = vmatpush1.msra.mxu0 0.0
        %4477 = vmatprep.subr.mxu0 0.0
        %4478 = vmatpush1.msra.mxu0 0.0
        %4479 = vmatprep.subr.mxu0 0.0
        %4480 = vmatpush1.msra.mxu0 0.0
        %4481 = vmatprep.subr.mxu0 0.0
        %4482 = vmatpush1.msra.mxu0 0.0
        %4483 = vmatprep.subr.mxu0 0.0
        %4484 = vmatpush1.msra.mxu0 0.0
        %4485 = vmatprep.subr.mxu0 0.0
        %4486 = vmatpush1.msra.mxu0 0.0
        %4487 = vmatprep.subr.mxu0 0.0
        %4488 = vmatpush1.msra.mxu0 0.0
        %4489 = vmatprep.mubr.f32.mxu0 0.0
        %v4490 = vand.u32 %v4323, 4294901760
        %4491 = vmatmul.mubr.f32.gmra.mrb[0].mxu0 %v4490
        %v4492 = vpop.f32.mrb[0].mxu0
        %v4493 = vadd.f32 %v4402, %v4492
        %v4494 = vpop.f32.mrb[0].mxu0
        %4495 = vmatprep.mubr.f32.mxu0 0.0
        %v4496 = vand.u32 %v4326, 4294901760
        %4497 = vmatmul.mubr.f32.gmra.mrb[0].mxu0 %v4496
        %v4498 = vpop.f32.mrb[0].mxu0
        %v4499 = vadd.f32 %v4412, %v4498
        %v4500 = vpop.f32.mrb[0].mxu0
        %4501 = vdwg.mxu0
        %4502 = vmatprep.subr.mxu0 0.0
        %v4503 = vand.u32 %v417, 4294901760
        %v4504 = vsub.f32 %v417, %v4503
        %4505 = vmatpush1.msra.mxu0 %v4504
        %4506 = vmatprep.subr.mxu0 0.0
        %v4507 = vand.u32 %v418, 4294901760
        %v4508 = vsub.f32 %v418, %v4507
        %4509 = vmatpush1.msra.mxu0 %v4508
        %4510 = vmatprep.subr.mxu0 0.0
        %4511 = vmatpush1.msra.mxu0 0.0
        %4512 = vmatprep.subr.mxu0 0.0
        %4513 = vmatpush1.msra.mxu0 0.0
        %4514 = vmatprep.subr.mxu0 0.0
        %4515 = vmatpush1.msra.mxu0 0.0
        %4516 = vmatprep.subr.mxu0 0.0
        %4517 = vmatpush1.msra.mxu0 0.0
        %4518 = vmatprep.subr.mxu0 0.0
        %4519 = vmatpush1.msra.mxu0 0.0
        %4520 = vmatprep.subr.mxu0 0.0
        %4521 = vmatpush1.msra.mxu0 0.0
        %4522 = vmatprep.subr.mxu0 0.0
        %4523 = vmatpush1.msra.mxu0 0.0
        %4524 = vmatprep.subr.mxu0 0.0
        %4525 = vmatpush1.msra.mxu0 0.0
        %4526 = vmatprep.subr.mxu0 0.0
        %4527 = vmatpush1.msra.mxu0 0.0
        %4528 = vmatprep.subr.mxu0 0.0
        %4529 = vmatpush1.msra.mxu0 0.0
        %4530 = vmatprep.subr.mxu0 0.0
        %4531 = vmatpush1.msra.mxu0 0.0
        %4532 = vmatprep.subr.mxu0 0.0
        %4533 = vmatpush1.msra.mxu0 0.0
        %4534 = vmatprep.subr.mxu0 0.0
        %4535 = vmatpush1.msra.mxu0 0.0
        %4536 = vmatprep.subr.mxu0 0.0
        %4537 = vmatpush1.msra.mxu0 0.0
        %4538 = vmatprep.subr.mxu0 0.0
        %4539 = vmatpush1.msra.mxu0 0.0
        %4540 = vmatprep.subr.mxu0 0.0
        %4541 = vmatpush1.msra.mxu0 0.0
        %4542 = vmatprep.subr.mxu0 0.0
        %4543 = vmatpush1.msra.mxu0 0.0
        %4544 = vmatprep.subr.mxu0 0.0
        %4545 = vmatpush1.msra.mxu0 0.0
        %4546 = vmatprep.subr.mxu0 0.0
        %4547 = vmatpush1.msra.mxu0 0.0
        %4548 = vmatprep.subr.mxu0 0.0
        %4549 = vmatpush1.msra.mxu0 0.0
        %4550 = vmatprep.subr.mxu0 0.0
        %4551 = vmatpush1.msra.mxu0 0.0
        %4552 = vmatprep.subr.mxu0 0.0
        %4553 = vmatpush1.msra.mxu0 0.0
        %4554 = vmatprep.subr.mxu0 0.0
        %4555 = vmatpush1.msra.mxu0 0.0
        %4556 = vmatprep.subr.mxu0 0.0
        %4557 = vmatpush1.msra.mxu0 0.0
        %4558 = vmatprep.subr.mxu0 0.0
        %4559 = vmatpush1.msra.mxu0 0.0
        %4560 = vmatprep.subr.mxu0 0.0
        %4561 = vmatpush1.msra.mxu0 0.0
        %4562 = vmatprep.subr.mxu0 0.0
        %4563 = vmatpush1.msra.mxu0 0.0
        %4564 = vmatprep.subr.mxu0 0.0
        %4565 = vmatpush1.msra.mxu0 0.0
        %4566 = vmatprep.subr.mxu0 0.0
        %4567 = vmatpush1.msra.mxu0 0.0
        %4568 = vmatprep.subr.mxu0 0.0
        %4569 = vmatpush1.msra.mxu0 0.0
        %4570 = vmatprep.mubr.f32.mxu0 0.0
        %v4571 = vand.u32 %v4323, 4294901760
        %v4572 = vsub.f32 %v4323, %v4571
        %4573 = vmatmul.mubr.f32.gmra.mrb[0].mxu0 %v4572
        %v4574 = vpop.f32.mrb[0].mxu0
        %v4575 = vadd.f32 %v4493, %v4574
        %v4576 = vpop.f32.mrb[0].mxu0
        %4577 = vmatprep.mubr.f32.mxu0 0.0
        %v4578 = vand.u32 %v4326, 4294901760
        %v4579 = vsub.f32 %v4326, %v4578
        %4580 = vmatmul.mubr.f32.gmra.mrb[0].mxu0 %v4579
        %v4581 = vpop.f32.mrb[0].mxu0
        %v4582 = vadd.f32 %v4499, %v4581
        %v4583 = vpop.f32.mrb[0].mxu0
        %4584 = vdwg.mxu0
        %4585 = vmatprep.subr.mxu0 0.0
        %v4586 = vand.u32 %v417, 4294901760
        %4587 = vmatpush1.msra.mxu0 %v4586
        %4588 = vmatprep.subr.mxu0 0.0
        %v4589 = vand.u32 %v418, 4294901760
        %4590 = vmatpush1.msra.mxu0 %v4589
        %4591 = vmatprep.subr.mxu0 0.0
        %4592 = vmatpush1.msra.mxu0 0.0
        %4593 = vmatprep.subr.mxu0 0.0
        %4594 = vmatpush1.msra.mxu0 0.0
        %4595 = vmatprep.subr.mxu0 0.0
        %4596 = vmatpush1.msra.mxu0 0.0
        %4597 = vmatprep.subr.mxu0 0.0
        %4598 = vmatpush1.msra.mxu0 0.0
        %4599 = vmatprep.subr.mxu0 0.0
        %4600 = vmatpush1.msra.mxu0 0.0
        %4601 = vmatprep.subr.mxu0 0.0
        %4602 = vmatpush1.msra.mxu0 0.0
        %4603 = vmatprep.subr.mxu0 0.0
        %4604 = vmatpush1.msra.mxu0 0.0
        %4605 = vmatprep.subr.mxu0 0.0
        %4606 = vmatpush1.msra.mxu0 0.0
        %4607 = vmatprep.subr.mxu0 0.0
        %4608 = vmatpush1.msra.mxu0 0.0
        %4609 = vmatprep.subr.mxu0 0.0
        %4610 = vmatpush1.msra.mxu0 0.0
        %4611 = vmatprep.subr.mxu0 0.0
        %4612 = vmatpush1.msra.mxu0 0.0
        %4613 = vmatprep.subr.mxu0 0.0
        %4614 = vmatpush1.msra.mxu0 0.0
        %4615 = vmatprep.subr.mxu0 0.0
        %4616 = vmatpush1.msra.mxu0 0.0
        %4617 = vmatprep.subr.mxu0 0.0
        %4618 = vmatpush1.msra.mxu0 0.0
        %4619 = vmatprep.subr.mxu0 0.0
        %4620 = vmatpush1.msra.mxu0 0.0
        %4621 = vmatprep.subr.mxu0 0.0
        %4622 = vmatpush1.msra.mxu0 0.0
        %4623 = vmatprep.subr.mxu0 0.0
        %4624 = vmatpush1.msra.mxu0 0.0
        %4625 = vmatprep.subr.mxu0 0.0
        %4626 = vmatpush1.msra.mxu0 0.0
        %4627 = vmatprep.subr.mxu0 0.0
        %4628 = vmatpush1.msra.mxu0 0.0
        %4629 = vmatprep.subr.mxu0 0.0
        %4630 = vmatpush1.msra.mxu0 0.0
        %4631 = vmatprep.subr.mxu0 0.0
        %4632 = vmatpush1.msra.mxu0 0.0
        %4633 = vmatprep.subr.mxu0 0.0
        %4634 = vmatpush1.msra.mxu0 0.0
        %4635 = vmatprep.subr.mxu0 0.0
        %4636 = vmatpush1.msra.mxu0 0.0
        %4637 = vmatprep.subr.mxu0 0.0
        %4638 = vmatpush1.msra.mxu0 0.0
        %4639 = vmatprep.subr.mxu0 0.0
        %4640 = vmatpush1.msra.mxu0 0.0
        %4641 = vmatprep.subr.mxu0 0.0
        %4642 = vmatpush1.msra.mxu0 0.0
        %4643 = vmatprep.subr.mxu0 0.0
        %4644 = vmatpush1.msra.mxu0 0.0
        %4645 = vmatprep.subr.mxu0 0.0
        %4646 = vmatpush1.msra.mxu0 0.0
        %4647 = vmatprep.subr.mxu0 0.0
        %4648 = vmatpush1.msra.mxu0 0.0
        %4649 = vmatprep.subr.mxu0 0.0
        %4650 = vmatpush1.msra.mxu0 0.0
        %4651 = vmatprep.mubr.f32.mxu0 0.0
        %v4652 = vand.u32 %v4323, 4294901760
        %v4653 = vsub.f32 %v4323, %v4652
        %v4654 = vand.u32 %v4653, 4294901760
        %4655 = vmatmul.mubr.f32.gmra.mrb[0].mxu0 %v4654
        %v4656 = vpop.f32.mrb[0].mxu0
        %v4657 = vadd.f32 %v4575, %v4656
        %v4658 = vpop.f32.mrb[0].mxu0
        %4659 = vmatprep.mubr.f32.mxu0 0.0
        %v4660 = vand.u32 %v4326, 4294901760
        %v4661 = vsub.f32 %v4326, %v4660
        %v4662 = vand.u32 %v4661, 4294901760
        %4663 = vmatmul.mubr.f32.gmra.mrb[0].mxu0 %v4662
        %v4664 = vpop.f32.mrb[0].mxu0
        %v4665 = vadd.f32 %v4582, %v4664
        %v4666 = vpop.f32.mrb[0].mxu0
        %4667 = vdwg.mxu0
        %4668 = vmatprep.subr.mxu0 0.0
        %v4669 = vand.u32 %v417, 4294901760
        %v4670 = vsub.f32 %v417, %v4669
        %v4671 = vand.u32 %v4670, 4294901760
        %4672 = vmatpush1.msra.mxu0 %v4671
        %4673 = vmatprep.subr.mxu0 0.0
        %v4674 = vand.u32 %v418, 4294901760
        %v4675 = vsub.f32 %v418, %v4674
        %v4676 = vand.u32 %v4675, 4294901760
        %4677 = vmatpush1.msra.mxu0 %v4676
        %4678 = vmatprep.subr.mxu0 0.0
        %4679 = vmatpush1.msra.mxu0 0.0
        %4680 = vmatprep.subr.mxu0 0.0
        %4681 = vmatpush1.msra.mxu0 0.0
        %4682 = vmatprep.subr.mxu0 0.0
        %4683 = vmatpush1.msra.mxu0 0.0
        %4684 = vmatprep.subr.mxu0 0.0
        %4685 = vmatpush1.msra.mxu0 0.0
        %4686 = vmatprep.subr.mxu0 0.0
        %4687 = vmatpush1.msra.mxu0 0.0
        %4688 = vmatprep.subr.mxu0 0.0
        %4689 = vmatpush1.msra.mxu0 0.0
        %4690 = vmatprep.subr.mxu0 0.0
        %4691 = vmatpush1.msra.mxu0 0.0
        %4692 = vmatprep.subr.mxu0 0.0
        %4693 = vmatpush1.msra.mxu0 0.0
        %4694 = vmatprep.subr.mxu0 0.0
        %4695 = vmatpush1.msra.mxu0 0.0
        %4696 = vmatprep.subr.mxu0 0.0
        %4697 = vmatpush1.msra.mxu0 0.0
        %4698 = vmatprep.subr.mxu0 0.0
        %4699 = vmatpush1.msra.mxu0 0.0
        %4700 = vmatprep.subr.mxu0 0.0
        %4701 = vmatpush1.msra.mxu0 0.0
        %4702 = vmatprep.subr.mxu0 0.0
        %4703 = vmatpush1.msra.mxu0 0.0
        %4704 = vmatprep.subr.mxu0 0.0
        %4705 = vmatpush1.msra.mxu0 0.0
        %4706 = vmatprep.subr.mxu0 0.0
        %4707 = vmatpush1.msra.mxu0 0.0
        %4708 = vmatprep.subr.mxu0 0.0
        %4709 = vmatpush1.msra.mxu0 0.0
        %4710 = vmatprep.subr.mxu0 0.0
        %4711 = vmatpush1.msra.mxu0 0.0
        %4712 = vmatprep.subr.mxu0 0.0
        %4713 = vmatpush1.msra.mxu0 0.0
        %4714 = vmatprep.subr.mxu0 0.0
        %4715 = vmatpush1.msra.mxu0 0.0
        %4716 = vmatprep.subr.mxu0 0.0
        %4717 = vmatpush1.msra.mxu0 0.0
        %4718 = vmatprep.subr.mxu0 0.0
        %4719 = vmatpush1.msra.mxu0 0.0
        %4720 = vmatprep.subr.mxu0 0.0
        %4721 = vmatpush1.msra.mxu0 0.0
        %4722 = vmatprep.subr.mxu0 0.0
        %4723 = vmatpush1.msra.mxu0 0.0
        %4724 = vmatprep.subr.mxu0 0.0
        %4725 = vmatpush1.msra.mxu0 0.0
        %4726 = vmatprep.subr.mxu0 0.0
        %4727 = vmatpush1.msra.mxu0 0.0
        %4728 = vmatprep.subr.mxu0 0.0
        %4729 = vmatpush1.msra.mxu0 0.0
        %4730 = vmatprep.subr.mxu0 0.0
        %4731 = vmatpush1.msra.mxu0 0.0
        %4732 = vmatprep.subr.mxu0 0.0
        %4733 = vmatpush1.msra.mxu0 0.0
        %4734 = vmatprep.subr.mxu0 0.0
        %4735 = vmatpush1.msra.mxu0 0.0
        %4736 = vmatprep.subr.mxu0 0.0
        %4737 = vmatpush1.msra.mxu0 0.0
        %4738 = vmatprep.mubr.f32.mxu0 0.0
        %v4739 = vand.u32 %v4323, 4294901760
        %4740 = vmatmul.mubr.f32.gmra.mrb[0].mxu0 %v4739
        %v4741 = vpop.f32.mrb[0].mxu0
        %v4742 = vadd.f32 %v4657, %v4741
        %v4743 = vpop.f32.mrb[0].mxu0
        %4744 = vmatprep.mubr.f32.mxu0 0.0
        %v4745 = vand.u32 %v4326, 4294901760
        %4746 = vmatmul.mubr.f32.gmra.mrb[0].mxu0 %v4745
        %v4747 = vpop.f32.mrb[0].mxu0
        %v4748 = vadd.f32 %v4665, %v4747
        %v4749 = vpop.f32.mrb[0].mxu0
        %4750 = vdwg.mxu0
        %4751 = vmatprep.subr.mxu0 0.0
        %v4752 = vand.u32 %v417, 4294901760
        %4753 = vmatpush1.msra.mxu0 %v4752
        %4754 = vmatprep.subr.mxu0 0.0
        %v4755 = vand.u32 %v418, 4294901760
        %4756 = vmatpush1.msra.mxu0 %v4755
        %4757 = vmatprep.subr.mxu0 0.0
        %4758 = vmatpush1.msra.mxu0 0.0
        %4759 = vmatprep.subr.mxu0 0.0
        %4760 = vmatpush1.msra.mxu0 0.0
        %4761 = vmatprep.subr.mxu0 0.0
        %4762 = vmatpush1.msra.mxu0 0.0
        %4763 = vmatprep.subr.mxu0 0.0
        %4764 = vmatpush1.msra.mxu0 0.0
        %4765 = vmatprep.subr.mxu0 0.0
        %4766 = vmatpush1.msra.mxu0 0.0
        %4767 = vmatprep.subr.mxu0 0.0
        %4768 = vmatpush1.msra.mxu0 0.0
        %4769 = vmatprep.subr.mxu0 0.0
        %4770 = vmatpush1.msra.mxu0 0.0
        %4771 = vmatprep.subr.mxu0 0.0
        %4772 = vmatpush1.msra.mxu0 0.0
        %4773 = vmatprep.subr.mxu0 0.0
        %4774 = vmatpush1.msra.mxu0 0.0
        %4775 = vmatprep.subr.mxu0 0.0
        %4776 = vmatpush1.msra.mxu0 0.0
        %4777 = vmatprep.subr.mxu0 0.0
        %4778 = vmatpush1.msra.mxu0 0.0
        %4779 = vmatprep.subr.mxu0 0.0
        %4780 = vmatpush1.msra.mxu0 0.0
        %4781 = vmatprep.subr.mxu0 0.0
        %4782 = vmatpush1.msra.mxu0 0.0
        %4783 = vmatprep.subr.mxu0 0.0
        %4784 = vmatpush1.msra.mxu0 0.0
        %4785 = vmatprep.subr.mxu0 0.0
        %4786 = vmatpush1.msra.mxu0 0.0
        %4787 = vmatprep.subr.mxu0 0.0
        %4788 = vmatpush1.msra.mxu0 0.0
        %4789 = vmatprep.subr.mxu0 0.0
        %4790 = vmatpush1.msra.mxu0 0.0
        %4791 = vmatprep.subr.mxu0 0.0
        %4792 = vmatpush1.msra.mxu0 0.0
        %4793 = vmatprep.subr.mxu0 0.0
        %4794 = vmatpush1.msra.mxu0 0.0
        %4795 = vmatprep.subr.mxu0 0.0
        %4796 = vmatpush1.msra.mxu0 0.0
        %4797 = vmatprep.subr.mxu0 0.0
        %4798 = vmatpush1.msra.mxu0 0.0
        %4799 = vmatprep.subr.mxu0 0.0
        %4800 = vmatpush1.msra.mxu0 0.0
        %4801 = vmatprep.subr.mxu0 0.0
        %4802 = vmatpush1.msra.mxu0 0.0
        %4803 = vmatprep.subr.mxu0 0.0
        %4804 = vmatpush1.msra.mxu0 0.0
        %4805 = vmatprep.subr.mxu0 0.0
        %4806 = vmatpush1.msra.mxu0 0.0
        %4807 = vmatprep.subr.mxu0 0.0
        %4808 = vmatpush1.msra.mxu0 0.0
        %4809 = vmatprep.subr.mxu0 0.0
        %4810 = vmatpush1.msra.mxu0 0.0
        %4811 = vmatprep.subr.mxu0 0.0
        %4812 = vmatpush1.msra.mxu0 0.0
        %4813 = vmatprep.subr.mxu0 0.0
        %4814 = vmatpush1.msra.mxu0 0.0
        %4815 = vmatprep.subr.mxu0 0.0
        %4816 = vmatpush1.msra.mxu0 0.0
        %4817 = vmatprep.mubr.f32.mxu0 0.0
        %v4818 = vand.u32 %v4323, 4294901760
        %4819 = vmatmul.mubr.f32.gmra.mrb[0].mxu0 %v4818
        %v4820 = vpop.f32.mrb[0].mxu0
        %v4821 = vadd.f32 %v4742, %v4820
        %v4822 = vpop.f32.mrb[0].mxu0
        %4823 = vmatprep.mubr.f32.mxu0 0.0
        %v4824 = vand.u32 %v4326, 4294901760
        %4825 = vmatmul.mubr.f32.gmra.mrb[0].mxu0 %v4824
        %v4826 = vpop.f32.mrb[0].mxu0
        %v4827 = vadd.f32 %v4748, %v4826
        %v4828 = vpop.f32.mrb[0].mxu0
        %4829 = vdwg.mxu0
        %v4830 = vadd.f32 %v2790, %v3297
        %v4831 = vadd.f32 %v2791, %v3303
        %v4832 = vadd.f32 %v2792, %v3805
        %v4833 = vadd.f32 %v2793, %v3811
        %v4834 = vadd.f32 %v2794, %v4313
        %v4835 = vadd.f32 %v2795, %v4319
        %v4836 = vadd.f32 %v2796, %v4821
        %v4837 = vadd.f32 %v2797, %v4827
        %4838 = vst.msk [vmem:[#allocation4] sm:$0xff] %vm419, %v4830
        %4839 = vst.msk [vmem:[#allocation4 + $0x8] sm:$0xff] %vm419, %v4831
        %4840 = vst.msk [vmem:[#allocation4 + $0x10] sm:$0xff] %vm419, %v4832
        %4841 = vst.msk [vmem:[#allocation4 + $0x18] sm:$0xff] %vm419, %v4833
        %4842 = vst.msk [vmem:[#allocation4 + $0x20] sm:$0xff] %vm419, %v4834
        %4843 = vst.msk [vmem:[#allocation4 + $0x28] sm:$0xff] %vm419, %v4835
        %4844 = vst.msk [vmem:[#allocation4 + $0x30] sm:$0xff] %vm419, %v4836
        %4845 = vst.msk [vmem:[#allocation4 + $0x38] sm:$0xff] %vm419, %v4837
        %4846 = vst.msk [vmem:[#allocation2] sm:$0xff] %vm2733, %v2589
        %4847 = vst.msk [vmem:[#allocation2 + $0x8] sm:$0xff] %vm2733, %v2590
        %4848 = vst.msk [vmem:[#allocation2 + $0x10] sm:$0xff] %vm2733, %v2591
        %4849 = vst.msk [vmem:[#allocation2 + $0x18] sm:$0xff] %vm2733, %v2592
        %4850 = vst.msk [vmem:[#allocation2 + $0x20] sm:$0xff] %vm2733, %v2593
        %4851 = vst.msk [vmem:[#allocation2 + $0x28] sm:$0xff] %vm2733, %v2594
        %4852 = vst.msk [vmem:[#allocation2 + $0x30] sm:$0xff] %vm2733, %v2595
        %4853 = vst.msk [vmem:[#allocation2 + $0x38] sm:$0xff] %vm2733, %v2596
        // Predicated region
        $region57: #{tpu_custom_call.1} parent=35 // pred_check
          %p4854 = pneg %p336
        $region58: #{tpu_custom_call.1} parent=35 // pred_check_branch
          %4856 = sbr.rel (%p4854) target = $region60
        $region59: #{tpu_custom_call.1} parent=35 // pred_region
          %s4857 = sld [smem:[#allocation6]]
          %v4858 = vld [vmem:[#allocation4] sm:$0xff]
          %v4859 = vld [vmem:[#allocation4 + $0x8] sm:$0xff]
          %v4860 = vld [vmem:[#allocation4 + $0x10] sm:$0xff]
          %v4861 = vld [vmem:[#allocation4 + $0x18] sm:$0xff]
          %v4862 = vld [vmem:[#allocation4 + $0x20] sm:$0xff]
          %v4863 = vld [vmem:[#allocation4 + $0x28] sm:$0xff]
          %v4864 = vld [vmem:[#allocation4 + $0x30] sm:$0xff]
          %v4865 = vld [vmem:[#allocation4 + $0x38] sm:$0xff]
          %v4866 = vld [vmem:[#allocation3] sm:$0xff]
          %v4867 = vld [vmem:[#allocation3 + $0x8] sm:$0xff]
          %v4868 = vld [vmem:[#allocation3 + $0x10] sm:$0xff]
          %v4869 = vld [vmem:[#allocation3 + $0x18] sm:$0xff]
          %v4870 = vld [vmem:[#allocation3 + $0x20] sm:$0xff]
          %v4871 = vld [vmem:[#allocation3 + $0x28] sm:$0xff]
          %v4872 = vld [vmem:[#allocation3 + $0x30] sm:$0xff]
          %v4873 = vld [vmem:[#allocation3 + $0x38] sm:$0xff]
          %4875 = vset.pattern.permute.xlu0 0
          %4876 = vperm.xlu0 %4875, %v4866
          %v4877 = vpop.permute.xlu0 %4876
          %4880 = vset.pattern.permute.xlu0 0
          %4881 = vperm.xlu0 %4880, %v4867
          %v4882 = vpop.permute.xlu0 %4881
          %4885 = vset.pattern.permute.xlu0 0
          %4886 = vperm.xlu0 %4885, %v4868
          %v4887 = vpop.permute.xlu0 %4886
          %4890 = vset.pattern.permute.xlu0 0
          %4891 = vperm.xlu0 %4890, %v4869
          %v4892 = vpop.permute.xlu0 %4891
          %4895 = vset.pattern.permute.xlu0 0
          %4896 = vperm.xlu0 %4895, %v4870
          %v4897 = vpop.permute.xlu0 %4896
          %4900 = vset.pattern.permute.xlu0 0
          %4901 = vperm.xlu0 %4900, %v4871
          %v4902 = vpop.permute.xlu0 %4901
          %4905 = vset.pattern.permute.xlu0 0
          %4906 = vperm.xlu0 %4905, %v4872
          %v4907 = vpop.permute.xlu0 %4906
          %4910 = vset.pattern.permute.xlu0 0
          %4911 = vperm.xlu0 %4910, %v4873
          %v4912 = vpop.permute.xlu0 %4911
          %v4914 = vrcp.pop %v4877
          %v4915 = vmul.f32 %v4858, %v4914
          %v4916 = vrcp.pop %v4882
          %v4917 = vmul.f32 %v4859, %v4916
          %v4918 = vrcp.pop %v4887
          %v4919 = vmul.f32 %v4860, %v4918
          %v4920 = vrcp.pop %v4892
          %v4921 = vmul.f32 %v4861, %v4920
          %v4922 = vrcp.pop %v4897
          %v4923 = vmul.f32 %v4862, %v4922
          %v4924 = vrcp.pop %v4902
          %v4925 = vmul.f32 %v4863, %v4924
          %v4926 = vrcp.pop %v4907
          %v4927 = vmul.f32 %v4864, %v4926
          %v4928 = vrcp.pop %v4912
          %v4929 = vmul.f32 %v4865, %v4928
          %v4930 = vld [vmem:[#allocation5] sm:$0xff]
          %v4931 = vld [vmem:[#allocation5 + $0x8] sm:$0xff]
          %v4932 = vld [vmem:[#allocation5 + $0x10] sm:$0xff]
          %v4933 = vld [vmem:[#allocation5 + $0x18] sm:$0xff]
          %v4934 = vld [vmem:[#allocation5 + $0x20] sm:$0xff]
          %v4935 = vld [vmem:[#allocation5 + $0x28] sm:$0xff]
          %v4936 = vld [vmem:[#allocation5 + $0x30] sm:$0xff]
          %v4937 = vld [vmem:[#allocation5 + $0x38] sm:$0xff]
          %v4938 = vsub.f32 %v4915, %v4930
          %v4939 = vsub.f32 %v4917, %v4931
          %v4940 = vsub.f32 %v4919, %v4932
          %v4941 = vsub.f32 %v4921, %v4933
          %v4942 = vsub.f32 %v4923, %v4934
          %v4943 = vsub.f32 %v4925, %v4935
          %v4944 = vsub.f32 %v4927, %v4936
          %v4945 = vsub.f32 %v4929, %v4937
          %v4946 = vstv %s4857
          %v4947 = vmul.f32 %v4946, %v4938
          %v4948 = vmul.f32 %v4946, %v4939
          %v4949 = vmul.f32 %v4946, %v4940
          %v4950 = vmul.f32 %v4946, %v4941
          %v4951 = vmul.f32 %v4946, %v4942
          %v4952 = vmul.f32 %v4946, %v4943
          %v4953 = vmul.f32 %v4946, %v4944
          %v4954 = vmul.f32 %v4946, %v4945
          %v4955 = vadd.f32 %v4930, %v4947
          %v4956 = vadd.f32 %v4931, %v4948
          %v4957 = vadd.f32 %v4932, %v4949
          %v4958 = vadd.f32 %v4933, %v4950
          %v4959 = vadd.f32 %v4934, %v4951
          %v4960 = vadd.f32 %v4935, %v4952
          %v4961 = vadd.f32 %v4936, %v4953
          %v4962 = vadd.f32 %v4937, %v4954
          %4963 = vst.msk [vmem:[%s328] sm:$0xff] %vm419, %v4955
          %4964 = vst.msk [vmem:[%s328 + $0x8] sm:$0xff] %vm419, %v4956
          %4965 = vst.msk [vmem:[%s328 + $0x10] sm:$0xff] %vm419, %v4957
          %4966 = vst.msk [vmem:[%s328 + $0x18] sm:$0xff] %vm419, %v4958
          %4967 = vst.msk [vmem:[%s328 + $0x20] sm:$0xff] %vm419, %v4959
          %4968 = vst.msk [vmem:[%s328 + $0x28] sm:$0xff] %vm419, %v4960
          %4969 = vst.msk [vmem:[%s328 + $0x30] sm:$0xff] %vm419, %v4961
          %4970 = vst.msk [vmem:[%s328 + $0x38] sm:$0xff] %vm419, %v4962
        $region60: #{tpu_custom_call.1} parent=35 // pred_fallthru
          _
        %s4971 = sand.u32 %s159, 1
        %s4972 = scalar_lea.sflag [#allocation9], %s4971
        %s4973 = sand.u32 %s159, 1
        %s4974 = smul.addr %s4973, 64
        %s4975 = scalar_lea.vmem [#allocation13], %s4974
        // Predicated region
        $region61: #{tpu_custom_call.1} parent=35 // pred_check
          %p4976 = pneg %p169
        $region62: #{tpu_custom_call.1} parent=35 // pred_check_branch
          %4978 = sbr.rel (%p4976) target = $region64
        $region63: #{tpu_custom_call.1} parent=35 // pred_region
          %s4979 = smul.u32 4, %s30
          %s4980 = smul.u32 2, %s31
          %s4982 = ssub.s32 1024, 1024
          %4983 = vsyncadd %s4972, %s4982
          %s4984 = smul.addr %s4979, 2
          %s4985 = sadd.s32 %s4980, %s4984
          %s4986 = smul.addr %s4985, 128
          %s4987 = scalar_lea.hbm %s4, %s4986
          %s4988 = sshll.u32 %s4975, 4
          %s4989 = int_to_ptr.vmem [resolvable:$true] %s4988
          %4994 = dma.vmem_to_hbm [thread:$0]  %s4989, 1024, %s4987, %s4972, 128, 128, 8
        $region64: #{tpu_custom_call.1} parent=35 // pred_fallthru
          _
      $region36: #{tpu_custom_call.1} parent=5 // pred_fallthru
        _
      %p4995 = scmp.le.s32.totalorder 2, %s20
      // Predicated region
      $region65: #{tpu_custom_call.1} parent=5 // pred_check
        %p4996 = pneg %p4995
      $region66: #{tpu_custom_call.1} parent=5 // pred_check_branch
        %4998 = sbr.rel (%p4996) target = $region68
      $region67: #{tpu_custom_call.1} parent=5 // pred_region
        %s4999 = ssub.s32 %s20, 2
        // Predicated region
        $region69: #{tpu_custom_call.1} parent=67 // pred_check
          %p5000 = pneg %p175
        $region70: #{tpu_custom_call.1} parent=67 // pred_check_branch
          %5002 = sbr.rel (%p5000) target = $region72
        $region71: #{tpu_custom_call.1} parent=67 // pred_region
          %s5003 = sand.u32 %s160, 1
          %s5004 = scalar_lea.sflag [#allocation9], %s5003
          %s5005 = sand.u32 %s160, 1
          %s5006 = smul.addr %s5005, 64
          %s5007 = scalar_lea.vmem [#allocation13], %s5006
          %5008 = dma.done %s5004, 1024
        $region72: #{tpu_custom_call.1} parent=67 // pred_fallthru
          _
      $region68: #{tpu_custom_call.1} parent=5 // pred_fallthru
        _
    $region6: #{tpu_custom_call.1} parent=1 // loop_footer
      %s24 = sadd.s32 1, %s20
    $region7: #{tpu_custom_call.1} parent=1 // loop_footer_branch
      %19 = sbr.rel target = $region3
    $region8: #{tpu_custom_call.1} parent=1 // loop_exit
      _
    %5009 = vsyncpa [#allocation8], 1
    %s5010 = scalar_lea.sflag [#allocation8], 1
    %5011 = vsyncpa %s5010, 1
    %5012 = vsyncpa [#allocation11], 1
    %s5013 = scalar_lea.sflag [#allocation11], 1
    %5014 = vsyncpa %s5013, 1
    %5015 = vsyncpa [#allocation9], 1
    %s5016 = scalar_lea.sflag [#allocation9], 1
    %5017 = vsyncpa %s5016, 1

</llo_original>
